<compile_context>
chip_gen: v6e
topology: v6e:2x2x1
jax: 0.10.0
libtpu: 0.0.40
codegen_flags: <defaults>
</compile_context>

<pallas_src>
import jax
import jax.numpy as jnp
from jax.experimental import pallas as pl
from jax.experimental.pallas import tpu as pltpu

IN_FEATURES = 28 * 28        # 784 (full-array last dim; no lane padding needed)
HIDDEN = 1024
OUT_FEATURES = 10
OUT_PAD = 128                # lane-dense output width (kills masked vst on the 10-wide store)
TM_MAX = 512                 # max batch tile (~8 MiB/step total with double-buffered x)


def mlp_kernel(x_ref, w1_ref, b1_ref, w2_ref, b2_ref, o_ref):
    # Cast the streamed f32 activations to bf16 in-kernel (VPU), feed the MXU, accumulate f32.
    x = x_ref[...].astype(jnp.bfloat16)                                   # [TM, 784] bf16
    h = jnp.dot(x, w1_ref[...], preferred_element_type=jnp.float32)      # [TM, 1024] f32 (MXU)
    h = jnp.maximum(h + b1_ref[...], 0.0)                                 # bias + ReLU in f32 (VPU)
    y = jnp.dot(h.astype(jnp.bfloat16), w2_ref[...],
                preferred_element_type=jnp.float32)                      # [TM, 128] f32 (MXU)
    o_ref[...] = y + b2_ref[...]                                          # lane-dense 128-wide store


def prepare_params(w1, b1, w2, b2):
    """Cast weights to bf16; zero-pad only the 10-wide output dim of w2/b2 to 128 lanes."""
    w1p = w1.astype(jnp.bfloat16)                                                   # [784, 1024]
    b1p = b1.astype(jnp.float32)                                                    # [1, 1024]
    w2p = jnp.pad(w2, ((0, 0), (0, OUT_PAD - OUT_FEATURES))).astype(jnp.bfloat16)   # [1024, 128]
    b2p = jnp.pad(b2, ((0, 0), (0, OUT_PAD - OUT_FEATURES))).astype(jnp.float32)    # [1, 128]
    return w1p, b1p, w2p, b2p


def _round_up(x, m):
    return ((x + m - 1) // m) * m


def _choose_tm(B):
    """Batch tile: sublane/MXU aligned, minimal batch padding, and >= 2 grid steps
    once B >= 256 so a 2-TensorCore chip (v7x) can shard the parallel batch axis."""
    if B < 8:
        return B                          # block == full array dim: legal, zero padding
    if B < 256:
        return _round_up(B, 8)            # single tile, at most 7 pad rows
    n_tiles = max(2, pl.cdiv(B, TM_MAX))  # guarantee >= 2 steps for megacore sharding
    return min(TM_MAX, _round_up(pl.cdiv(B, n_tiles), 128))


@jax.jit
def mlp_forward(x, w1p, b1p, w2p, b2p):
    """x: [B, 784] (any float dtype). Returns [B, 10] f32 logits."""
    B = x.shape[0]
    tm = _choose_tm(B)
    n_tiles = pl.cdiv(B, tm)
    Bp = n_tiles * tm

    xp = x.astype(jnp.float32)            # no-op if already f32
    if Bp != B:
        # Batch-only pad (no feature-dim pad / dtype-convert pass over x).
        xp = jnp.pad(xp, ((0, Bp - B), (0, 0)))

    out = pl.pallas_call(
        mlp_kernel,
        out_shape=jax.ShapeDtypeStruct((Bp, OUT_PAD), jnp.float32),
        grid=(n_tiles,),
        in_specs=[
            pl.BlockSpec((tm, IN_FEATURES), lambda i: (i, 0)),       # x tile (double-buffered DMA)
            pl.BlockSpec((IN_FEATURES, HIDDEN), lambda i: (0, 0)),   # w1: resident across grid
            pl.BlockSpec((1, HIDDEN), lambda i: (0, 0)),             # b1: resident
            pl.BlockSpec((HIDDEN, OUT_PAD), lambda i: (0, 0)),       # w2: resident
            pl.BlockSpec((1, OUT_PAD), lambda i: (0, 0)),            # b2: resident
        ],
        out_specs=pl.BlockSpec((tm, OUT_PAD), lambda i: (i, 0)),
        compiler_params=pltpu.CompilerParams(
            # Batch axis is embarrassingly parallel: lets v7x shard grid steps across both TCs.
            dimension_semantics=("parallel",),
            # Headroom for TM=512 (x double-buffer + resident weights + f32 intermediates)
            # under v5e's 16 MiB default scoped-VMEM limit; well under every gen's physical VMEM.
            vmem_limit_bytes=48 * 1024 * 1024,
        ),
    )(xp, w1p, b1p, w2p, b2p)

    return out[:B, :OUT_FEATURES]


def init_params(key):
    """Deterministic init matching PyTorch nn.Linear default:
    U(-1/sqrt(fan_in), 1/sqrt(fan_in)) for weight and bias. Stored as [in, out]."""
    k1, k2, k3, k4 = jax.random.split(key, 4)
    bound1 = 1.0 / jnp.sqrt(jnp.float32(IN_FEATURES))
    bound2 = 1.0 / jnp.sqrt(jnp.float32(HIDDEN))
    w1 = jax.random.uniform(k1, (IN_FEATURES, HIDDEN), jnp.float32, -bound1, bound1)
    b1 = jax.random.uniform(k2, (1, HIDDEN), jnp.float32, -bound1, bound1)
    w2 = jax.random.uniform(k3, (HIDDEN, OUT_FEATURES), jnp.float32, -bound2, bound2)
    b2 = jax.random.uniform(k4, (1, OUT_FEATURES), jnp.float32, -bound2, bound2)
    return w1, b1, w2, b2


if __name__ == "__main__":
    key = jax.random.PRNGKey(0)
    kx, kp = jax.random.split(key)
    B = 8
    x = jax.random.normal(kx, (B, IN_FEATURES), jnp.float32)
    w1, b1, w2, b2 = init_params(kp)
    w1p, b1p, w2p, b2p = prepare_params(w1, b1, w2, b2)

    out = mlp_forward(x, w1p, b1p, w2p, b2p)
    jax.block_until_ready(out)
    assert out.shape == (B, OUT_FEATURES)

    # Reference #1: precision-matched (same bf16 cast pattern as the kernel) -> tight tolerance.
    xb = x.astype(jnp.bfloat16)
    h_ref = jnp.maximum(
        jnp.dot(xb, w1.astype(jnp.bfloat16), preferred_element_type=jnp.float32) + b1, 0.0)
    ref_bf16 = jnp.dot(h_ref.astype(jnp.bfloat16), w2.astype(jnp.bfloat16),
                       preferred_element_type=jnp.float32) + b2
    assert jnp.allclose(out, ref_bf16, atol=1e-3, rtol=1e-3), "mismatch vs bf16-matched reference"

    # Reference #2: full f32 math -> looser tolerance (bf16 weight quantization error).
    ref_f32 = jnp.maximum(x @ w1 + b1, 0.0) @ w2 + b2
    assert jnp.allclose(out, ref_f32, atol=5e-2, rtol=5e-2), "mismatch vs f32 reference"

    print("KERNEL_OK")
</pallas_src>

<mosaic_0001>
module attributes {stable_mosaic.version = 11 : i64} {
  func.func @mlp_kernel(%arg0: i32, %arg1: memref<8x784xf32, #tpu.memory_space<vmem>>, %arg2: memref<784x1024xbf16, #tpu.memory_space<vmem>>, %arg3: memref<1x1024xf32, #tpu.memory_space<vmem>>, %arg4: memref<1024x128xbf16, #tpu.memory_space<vmem>>, %arg5: memref<1x128xf32, #tpu.memory_space<vmem>>, %arg6: memref<8x128xf32, #tpu.memory_space<vmem>>) attributes {dimension_semantics = [#tpu.dimension_semantics<parallel>], iteration_bounds = array<i64: 1>, scalar_prefetch = 0 : i64, scratch_operands = 0 : i64, tpu.core_type = #tpu.core_type<tc>, window_params = [{transform_indices = @transform_0, window_bounds = array<i64: 8, 784>}, {pipeline_mode = #tpu.pipeline_mode<synchronous>, transform_indices = @transform_1, window_bounds = array<i64: 784, 1024>}, {pipeline_mode = #tpu.pipeline_mode<synchronous>, transform_indices = @transform_2, window_bounds = array<i64: 1, 1024>}, {pipeline_mode = #tpu.pipeline_mode<synchronous>, transform_indices = @transform_3, window_bounds = array<i64: 1024, 128>}, {pipeline_mode = #tpu.pipeline_mode<synchronous>, transform_indices = @transform_4, window_bounds = array<i64: 1, 128>}, {transform_indices = @transform_5, window_bounds = array<i64: 8, 128>}]} {
    %c0 = arith.constant 0 : index
    %c0_0 = arith.constant 0 : index
    %0 = vector.load %arg1[%c0, %c0_0] : memref<8x784xf32, #tpu.memory_space<vmem>>, vector<8x784xf32>
    %1 = arith.truncf %0 : vector<8x784xf32> to vector<8x784xbf16>
    %c0_1 = arith.constant 0 : index
    %c0_2 = arith.constant 0 : index
    %2 = vector.load %arg2[%c0_1, %c0_2] : memref<784x1024xbf16, #tpu.memory_space<vmem>>, vector<784x1024xbf16>
    %cst = arith.constant dense<0.000000e+00> : vector<8x1024xf32>
    %3 = tpu.matmul %1, %2, %cst {dimension_numbers = #tpu.dot_dimension_numbers<[1], [0], [0], [1], [0, 0, 1, 1], [], []>} : vector<8x784xbf16>, vector<784x1024xbf16>, vector<8x1024xf32> -> vector<8x1024xf32>
    %c0_3 = arith.constant 0 : index
    %c0_4 = arith.constant 0 : index
    %4 = vector.load %arg3[%c0_3, %c0_4] : memref<1x1024xf32, #tpu.memory_space<vmem>>, vector<1x1024xf32>
    %5 = vector.broadcast %4 : vector<1x1024xf32> to vector<8x1024xf32>
    %6 = arith.addf %3, %5 : vector<8x1024xf32>
    %cst_5 = arith.constant 0.000000e+00 : f32
    %7 = vector.broadcast %cst_5 : f32 to vector<8x1024xf32>
    %8 = arith.maximumf %6, %7 : vector<8x1024xf32>
    %9 = arith.truncf %8 : vector<8x1024xf32> to vector<8x1024xbf16>
    %c0_6 = arith.constant 0 : index
    %c0_7 = arith.constant 0 : index
    %10 = vector.load %arg4[%c0_6, %c0_7] : memref<1024x128xbf16, #tpu.memory_space<vmem>>, vector<1024x128xbf16>
    %cst_8 = arith.constant dense<0.000000e+00> : vector<8x128xf32>
    %11 = tpu.matmul %9, %10, %cst_8 {dimension_numbers = #tpu.dot_dimension_numbers<[1], [0], [0], [1], [0, 0, 1, 1], [], []>} : vector<8x1024xbf16>, vector<1024x128xbf16>, vector<8x128xf32> -> vector<8x128xf32>
    %c0_9 = arith.constant 0 : index
    %c0_10 = arith.constant 0 : index
    %12 = vector.load %arg5[%c0_9, %c0_10] : memref<1x128xf32, #tpu.memory_space<vmem>>, vector<1x128xf32>
    %13 = vector.broadcast %12 : vector<1x128xf32> to vector<8x128xf32>
    %14 = arith.addf %11, %13 : vector<8x128xf32>
    %c0_11 = arith.constant 0 : index
    %c0_12 = arith.constant 0 : index
    %15 = vector.load %arg6[%c0_11, %c0_12] : memref<8x128xf32, #tpu.memory_space<vmem>>, vector<8x128xf32>
    tpu.vector_store %arg6[%c0_11, %c0_12], %14 {strides = array<i32>} : memref<8x128xf32, #tpu.memory_space<vmem>>, vector<8x128xf32>,
    return
  }
  func.func @transform_0(%arg0: i32) -> (i32, i32) {
    %c0_i32 = arith.constant 0 : i32
    %c0_i32_0 = arith.constant 0 : i32
    return %arg0, %c0_i32 : i32, i32
  }
  func.func @transform_1(%arg0: i32) -> (i32, i32) {
    %c0_i32 = arith.constant 0 : i32
    %c0_i32_0 = arith.constant 0 : i32
    %c0_i32_1 = arith.constant 0 : i32
    return %c0_i32, %c0_i32_0 : i32, i32
  }
  func.func @transform_2(%arg0: i32) -> (i32, i32) {
    %c0_i32 = arith.constant 0 : i32
    %c0_i32_0 = arith.constant 0 : i32
    %c0_i32_1 = arith.constant 0 : i32
    return %c0_i32, %c0_i32_0 : i32, i32
  }
  func.func @transform_3(%arg0: i32) -> (i32, i32) {
    %c0_i32 = arith.constant 0 : i32
    %c0_i32_0 = arith.constant 0 : i32
    %c0_i32_1 = arith.constant 0 : i32
    return %c0_i32, %c0_i32_0 : i32, i32
  }
  func.func @transform_4(%arg0: i32) -> (i32, i32) {
    %c0_i32 = arith.constant 0 : i32
    %c0_i32_0 = arith.constant 0 : i32
    %c0_i32_1 = arith.constant 0 : i32
    return %c0_i32, %c0_i32_0 : i32, i32
  }
  func.func @transform_5(%arg0: i32) -> (i32, i32) {
    %c0_i32 = arith.constant 0 : i32
    %c0_i32_0 = arith.constant 0 : i32
    return %arg0, %c0_i32 : i32, i32
  }
}

</mosaic_0001>

<llo_original>
// kernel: mlp_forward.1
$region0: #{mlp_forward.1}
  #allocation0 [shape = 'u32[]', space=smem, size = 0x4, offset = 0x4, fixed_abs, tag = 'smem constant byte address 0x4 - core index']
  #allocation1 [shape = 'u32[144,128]{1,0:T(1,128)}', space=vmem, size = 0x12000, scoped, tag = 'internal scratch']
  %s0 = inlined_call_operand.hbm [shape: f32[8,784], index: 0, kind: input, shape index: {}]
  %s1 = inlined_call_operand.hbm [shape: bf16[784,1024], index: 1, kind: input, shape index: {}]
  %s2 = inlined_call_operand.hbm [shape: f32[1,1024], index: 2, kind: input, shape index: {}]
  %s3 = inlined_call_operand.hbm [shape: bf16[1024,128], index: 3, kind: input, shape index: {}]
  %s4 = inlined_call_operand.hbm [shape: f32[1,128], index: 4, kind: input, shape index: {}]
  %s5 = inlined_call_operand.hbm [shape: f32[8,128], index: 5, kind: output, shape index: {}]
  %s6 = sld [smem:[#allocation0]]
  $region50: #{mlp_forward.1} parent=0
    _
  %s8 = ssub.s32 1, %s6
  %s9 = scalar_select 0, %s8, %s6
  $region1: #{mlp_forward.1} parent=0
    #allocation2 [shape = 'u8[28672]{0}', space=vmem, size = 0x7000, scoped, tag = 'input window, operand 0, single buffered']
    #allocation3 [shape = 's32[1]{0}', space=sflag, size = 0x4, scoped, tag = 'scoped memory for mlp_forward.1']
    #allocation4 [shape = 's32[1]{0}', space=sflag, size = 0x4, scoped, tag = 'scoped memory for mlp_forward.1']
    #allocation5 [shape = 'u8[1605632]{0}', space=vmem, size = 0x188000, scoped, tag = 'input window, operand 1, single buffered']
    #allocation6 [shape = 's32[1]{0}', space=sflag, size = 0x4, scoped, tag = 'scoped memory for mlp_forward.1']
    #allocation7 [shape = 'u8[4096]{0}', space=vmem, size = 0x1000, scoped, tag = 'input window, operand 2, single buffered']
    #allocation8 [shape = 'u8[262144]{0}', space=vmem, size = 0x40000, scoped, tag = 'input window, operand 3, single buffered']
    #allocation9 [shape = 's32[1]{0}', space=sflag, size = 0x4, scoped, tag = 'scoped memory for mlp_forward.1']
    #allocation10 [shape = 'u8[512]{0}', space=vmem, size = 0x400, scoped, tag = 'input window, operand 4, single buffered']
    #allocation11 [shape = 'u8[4096]{0}', space=vmem, size = 0x1000, scoped, tag = 'output window, operand 0, single buffered']
    %10 = vsyncpa [#allocation3], 0
    %11 = vsyncpa [#allocation6], 0
    %12 = vsyncpa [#allocation9], 0
    %13 = vsyncpa [#allocation4], 0
    // Predicated region
    $region2: #{mlp_forward.1} parent=1 // pred_check
      _
    $region3: #{mlp_forward.1} parent=1 // pred_check_branch
      %15 = sbr.rel (0) target = $region5
    $region4: #{mlp_forward.1} parent=1 // pred_region
      %s17 = ssub.s32 896, 896
      %18 = vsyncadd [#allocation3], %s17
      %s20 = sshll.u32 [#allocation2], 4
      %s21 = int_to_ptr.vmem [resolvable:$true] %s20
      %23 = dma.hbm_to_vmem [thread:$0]  %s0, 896, %s21, [#allocation3]
    $region5: #{mlp_forward.1} parent=1 // pred_fallthru
      _
    // Predicated region
    $region6: #{mlp_forward.1} parent=1 // pred_check
      _
    $region7: #{mlp_forward.1} parent=1 // pred_check_branch
      %25 = sbr.rel (0) target = $region9
    $region8: #{mlp_forward.1} parent=1 // pred_region
      %s27 = ssub.s32 50176, 50176
      %28 = vsyncadd [#allocation6], %s27
      %s29 = sshll.u32 [#allocation5], 4
      %s30 = int_to_ptr.vmem [resolvable:$true] %s29
      %35 = dma.hbm_to_vmem [thread:$0]  %s1, 50176, %s30, [#allocation6], 512, 512, 32
    $region9: #{mlp_forward.1} parent=1 // pred_fallthru
      _
    // Predicated region
    $region10: #{mlp_forward.1} parent=1 // pred_check
      _
    $region11: #{mlp_forward.1} parent=1 // pred_check_branch
      %37 = sbr.rel (0) target = $region13
    $region12: #{mlp_forward.1} parent=1 // pred_region
      %s39 = ssub.s32 128, 128
      %40 = vsyncadd [#allocation6], %s39
      %s42 = sshll.u32 [#allocation7], 4
      %s43 = int_to_ptr.vmem [resolvable:$true] %s42
      %45 = dma.hbm_to_vmem [thread:$0]  %s2, 128, %s43, [#allocation6]
    $region13: #{mlp_forward.1} parent=1 // pred_fallthru
      _
    // Predicated region
    $region14: #{mlp_forward.1} parent=1 // pred_check
      _
    $region15: #{mlp_forward.1} parent=1 // pred_check_branch
      %47 = sbr.rel (0) target = $region17
    $region16: #{mlp_forward.1} parent=1 // pred_region
      %s49 = ssub.s32 8192, 8192
      %50 = vsyncadd [#allocation9], %s49
      %s51 = sshll.u32 [#allocation8], 4
      %s52 = int_to_ptr.vmem [resolvable:$true] %s51
      %57 = dma.hbm_to_vmem [thread:$0]  %s3, 8192, %s52, [#allocation9], 64, 64, 4
    $region17: #{mlp_forward.1} parent=1 // pred_fallthru
      _
    // Predicated region
    $region18: #{mlp_forward.1} parent=1 // pred_check
      _
    $region19: #{mlp_forward.1} parent=1 // pred_check_branch
      %59 = sbr.rel (0) target = $region21
    $region20: #{mlp_forward.1} parent=1 // pred_region
      %s61 = ssub.s32 16, 16
      %62 = vsyncadd [#allocation9], %s61
      %s64 = sshll.u32 [#allocation10], 4
      %s65 = int_to_ptr.vmem [resolvable:$true] %s64
      %67 = dma.hbm_to_vmem [thread:$0]  %s4, 16, %s65, [#allocation9]
    $region21: #{mlp_forward.1} parent=1 // pred_fallthru
      _
    // Predicated region
    $region22: #{mlp_forward.1} parent=1 // pred_check
      _
    $region23: #{mlp_forward.1} parent=1 // pred_check_branch
      %69 = sbr.rel (0) target = $region25
    $region24: #{mlp_forward.1} parent=1 // pred_region
      %70 = dma.done [#allocation3], 896
    $region25: #{mlp_forward.1} parent=1 // pred_fallthru
      _
    // Predicated region
    $region26: #{mlp_forward.1} parent=1 // pred_check
      _
    $region27: #{mlp_forward.1} parent=1 // pred_check_branch
      %72 = sbr.rel (0) target = $region29
    $region28: #{mlp_forward.1} parent=1 // pred_region
      %73 = dma.done [#allocation6], 50176
    $region29: #{mlp_forward.1} parent=1 // pred_fallthru
      _
    // Predicated region
    $region30: #{mlp_forward.1} parent=1 // pred_check
      _
    $region31: #{mlp_forward.1} parent=1 // pred_check_branch
      %75 = sbr.rel (0) target = $region33
    $region32: #{mlp_forward.1} parent=1 // pred_region
      %76 = dma.done [#allocation6], 128
    $region33: #{mlp_forward.1} parent=1 // pred_fallthru
      _
    // Predicated region
    $region34: #{mlp_forward.1} parent=1 // pred_check
      _
    $region35: #{mlp_forward.1} parent=1 // pred_check_branch
      %78 = sbr.rel (0) target = $region37
    $region36: #{mlp_forward.1} parent=1 // pred_region
      %79 = dma.done [#allocation9], 8192
    $region37: #{mlp_forward.1} parent=1 // pred_fallthru
      _
    // Predicated region
    $region38: #{mlp_forward.1} parent=1 // pred_check
      _
    $region39: #{mlp_forward.1} parent=1 // pred_check_branch
      %81 = sbr.rel (0) target = $region41
    $region40: #{mlp_forward.1} parent=1 // pred_region
      %82 = dma.done [#allocation9], 16
    $region41: #{mlp_forward.1} parent=1 // pred_fallthru
      _
    %v84 = vld [vmem:[#allocation2] sm:$0xff]
    %v85 = vld [vmem:[#allocation2 + $0x8] sm:$0xff]
    %v86 = vld [vmem:[#allocation2 + $0x10] sm:$0xff]
    %v87 = vld [vmem:[#allocation2 + $0x18] sm:$0xff]
    %v88 = vld [vmem:[#allocation2 + $0x20] sm:$0xff]
    %v89 = vld [vmem:[#allocation2 + $0x28] sm:$0xff]
    %v90 = vld [vmem:[#allocation2 + $0x30] sm:$0xff]
    %v91 = vpack.c.bf16 %v84, %v84
    %v92 = vpack.c.bf16 %v85, %v85
    %v93 = vpack.c.bf16 %v86, %v86
    %v94 = vpack.c.bf16 %v87, %v87
    %v95 = vpack.c.bf16 %v88, %v88
    %v96 = vpack.c.bf16 %v89, %v89
    %v97 = vpack.c.bf16 %v90, %v90
    %v98 = vld [vmem:[#allocation5] sm:$0xff]
    %v99 = vld [vmem:[#allocation5 + $0x8] sm:$0xff]
    %v100 = vld [vmem:[#allocation5 + $0x10] sm:$0xff]
    %v101 = vld [vmem:[#allocation5 + $0x18] sm:$0xff]
    %v102 = vld [vmem:[#allocation5 + $0x20] sm:$0xff]
    %v103 = vld [vmem:[#allocation5 + $0x28] sm:$0xff]
    %v104 = vld [vmem:[#allocation5 + $0x30] sm:$0xff]
    %v105 = vld [vmem:[#allocation5 + $0x38] sm:$0xff]
    %v106 = vld [vmem:[#allocation5 + $0x40] sm:$0xff]
    %v107 = vld [vmem:[#allocation5 + $0x48] sm:$0xff]
    %v108 = vld [vmem:[#allocation5 + $0x50] sm:$0xff]
    %v109 = vld [vmem:[#allocation5 + $0x58] sm:$0xff]
    %v110 = vld [vmem:[#allocation5 + $0x60] sm:$0xff]
    %v111 = vld [vmem:[#allocation5 + $0x68] sm:$0xff]
    %v112 = vld [vmem:[#allocation5 + $0x70] sm:$0xff]
    %v113 = vld [vmem:[#allocation5 + $0x78] sm:$0xff]
    %v114 = vld [vmem:[#allocation5 + $0x80] sm:$0xff]
    %v115 = vld [vmem:[#allocation5 + $0x88] sm:$0xff]
    %v116 = vld [vmem:[#allocation5 + $0x90] sm:$0xff]
    %v117 = vld [vmem:[#allocation5 + $0x98] sm:$0xff]
    %v118 = vld [vmem:[#allocation5 + $0xa0] sm:$0xff]
    %v119 = vld [vmem:[#allocation5 + $0xa8] sm:$0xff]
    %v120 = vld [vmem:[#allocation5 + $0xb0] sm:$0xff]
    %v121 = vld [vmem:[#allocation5 + $0xb8] sm:$0xff]
    %v122 = vld [vmem:[#allocation5 + $0xc0] sm:$0xff]
    %v123 = vld [vmem:[#allocation5 + $0xc8] sm:$0xff]
    %v124 = vld [vmem:[#allocation5 + $0xd0] sm:$0xff]
    %v125 = vld [vmem:[#allocation5 + $0xd8] sm:$0xff]
    %v126 = vld [vmem:[#allocation5 + $0xe0] sm:$0xff]
    %v127 = vld [vmem:[#allocation5 + $0xe8] sm:$0xff]
    %v128 = vld [vmem:[#allocation5 + $0xf0] sm:$0xff]
    %v129 = vld [vmem:[#allocation5 + $0xf8] sm:$0xff]
    %v130 = vld [vmem:[#allocation5 + $0x100] sm:$0xff]
    %v131 = vld [vmem:[#allocation5 + $0x108] sm:$0xff]
    %v132 = vld [vmem:[#allocation5 + $0x110] sm:$0xff]
    %v133 = vld [vmem:[#allocation5 + $0x118] sm:$0xff]
    %v134 = vld [vmem:[#allocation5 + $0x120] sm:$0xff]
    %v135 = vld [vmem:[#allocation5 + $0x128] sm:$0xff]
    %v136 = vld [vmem:[#allocation5 + $0x130] sm:$0xff]
    %v137 = vld [vmem:[#allocation5 + $0x138] sm:$0xff]
    %v138 = vld [vmem:[#allocation5 + $0x140] sm:$0xff]
    %v139 = vld [vmem:[#allocation5 + $0x148] sm:$0xff]
    %v140 = vld [vmem:[#allocation5 + $0x150] sm:$0xff]
    %v141 = vld [vmem:[#allocation5 + $0x158] sm:$0xff]
    %v142 = vld [vmem:[#allocation5 + $0x160] sm:$0xff]
    %v143 = vld [vmem:[#allocation5 + $0x168] sm:$0xff]
    %v144 = vld [vmem:[#allocation5 + $0x170] sm:$0xff]
    %v145 = vld [vmem:[#allocation5 + $0x178] sm:$0xff]
    %v146 = vld [vmem:[#allocation5 + $0x180] sm:$0xff]
    %v147 = vld [vmem:[#allocation5 + $0x188] sm:$0xff]
    %v148 = vld [vmem:[#allocation5 + $0x190] sm:$0xff]
    %v149 = vld [vmem:[#allocation5 + $0x198] sm:$0xff]
    %v150 = vld [vmem:[#allocation5 + $0x1a0] sm:$0xff]
    %v151 = vld [vmem:[#allocation5 + $0x1a8] sm:$0xff]
    %v152 = vld [vmem:[#allocation5 + $0x1b0] sm:$0xff]
    %v153 = vld [vmem:[#allocation5 + $0x1b8] sm:$0xff]
    %v154 = vld [vmem:[#allocation5 + $0x1c0] sm:$0xff]
    %v155 = vld [vmem:[#allocation5 + $0x1c8] sm:$0xff]
    %v156 = vld [vmem:[#allocation5 + $0x1d0] sm:$0xff]
    %v157 = vld [vmem:[#allocation5 + $0x1d8] sm:$0xff]
    %v158 = vld [vmem:[#allocation5 + $0x1e0] sm:$0xff]
    %v159 = vld [vmem:[#allocation5 + $0x1e8] sm:$0xff]
    %v160 = vld [vmem:[#allocation5 + $0x1f0] sm:$0xff]
    %v161 = vld [vmem:[#allocation5 + $0x1f8] sm:$0xff]
    %v162 = vld [vmem:[#allocation5 + $0x200] sm:$0xff]
    %v163 = vld [vmem:[#allocation5 + $0x208] sm:$0xff]
    %v164 = vld [vmem:[#allocation5 + $0x210] sm:$0xff]
    %v165 = vld [vmem:[#allocation5 + $0x218] sm:$0xff]
    %v166 = vld [vmem:[#allocation5 + $0x220] sm:$0xff]
    %v167 = vld [vmem:[#allocation5 + $0x228] sm:$0xff]
    %v168 = vld [vmem:[#allocation5 + $0x230] sm:$0xff]
    %v169 = vld [vmem:[#allocation5 + $0x238] sm:$0xff]
    %v170 = vld [vmem:[#allocation5 + $0x240] sm:$0xff]
    %v171 = vld [vmem:[#allocation5 + $0x248] sm:$0xff]
    %v172 = vld [vmem:[#allocation5 + $0x250] sm:$0xff]
    %v173 = vld [vmem:[#allocation5 + $0x258] sm:$0xff]
    %v174 = vld [vmem:[#allocation5 + $0x260] sm:$0xff]
    %v175 = vld [vmem:[#allocation5 + $0x268] sm:$0xff]
    %v176 = vld [vmem:[#allocation5 + $0x270] sm:$0xff]
    %v177 = vld [vmem:[#allocation5 + $0x278] sm:$0xff]
    %v178 = vld [vmem:[#allocation5 + $0x280] sm:$0xff]
    %v179 = vld [vmem:[#allocation5 + $0x288] sm:$0xff]
    %v180 = vld [vmem:[#allocation5 + $0x290] sm:$0xff]
    %v181 = vld [vmem:[#allocation5 + $0x298] sm:$0xff]
    %v182 = vld [vmem:[#allocation5 + $0x2a0] sm:$0xff]
    %v183 = vld [vmem:[#allocation5 + $0x2a8] sm:$0xff]
    %v184 = vld [vmem:[#allocation5 + $0x2b0] sm:$0xff]
    %v185 = vld [vmem:[#allocation5 + $0x2b8] sm:$0xff]
    %v186 = vld [vmem:[#allocation5 + $0x2c0] sm:$0xff]
    %v187 = vld [vmem:[#allocation5 + $0x2c8] sm:$0xff]
    %v188 = vld [vmem:[#allocation5 + $0x2d0] sm:$0xff]
    %v189 = vld [vmem:[#allocation5 + $0x2d8] sm:$0xff]
    %v190 = vld [vmem:[#allocation5 + $0x2e0] sm:$0xff]
    %v191 = vld [vmem:[#allocation5 + $0x2e8] sm:$0xff]
    %v192 = vld [vmem:[#allocation5 + $0x2f0] sm:$0xff]
    %v193 = vld [vmem:[#allocation5 + $0x2f8] sm:$0xff]
    %v194 = vld [vmem:[#allocation5 + $0x300] sm:$0xff]
    %v195 = vld [vmem:[#allocation5 + $0x308] sm:$0xff]
    %v196 = vld [vmem:[#allocation5 + $0x310] sm:$0xff]
    %v197 = vld [vmem:[#allocation5 + $0x318] sm:$0xff]
    %v198 = vld [vmem:[#allocation5 + $0x320] sm:$0xff]
    %v199 = vld [vmem:[#allocation5 + $0x328] sm:$0xff]
    %v200 = vld [vmem:[#allocation5 + $0x330] sm:$0xff]
    %v201 = vld [vmem:[#allocation5 + $0x338] sm:$0xff]
    %v202 = vld [vmem:[#allocation5 + $0x340] sm:$0xff]
    %v203 = vld [vmem:[#allocation5 + $0x348] sm:$0xff]
    %v204 = vld [vmem:[#allocation5 + $0x350] sm:$0xff]
    %v205 = vld [vmem:[#allocation5 + $0x358] sm:$0xff]
    %v206 = vld [vmem:[#allocation5 + $0x360] sm:$0xff]
    %v207 = vld [vmem:[#allocation5 + $0x368] sm:$0xff]
    %v208 = vld [vmem:[#allocation5 + $0x370] sm:$0xff]
    %v209 = vld [vmem:[#allocation5 + $0x378] sm:$0xff]
    %v210 = vld [vmem:[#allocation5 + $0x380] sm:$0xff]
    %v211 = vld [vmem:[#allocation5 + $0x388] sm:$0xff]
    %v212 = vld [vmem:[#allocation5 + $0x390] sm:$0xff]
    %v213 = vld [vmem:[#allocation5 + $0x398] sm:$0xff]
    %v214 = vld [vmem:[#allocation5 + $0x3a0] sm:$0xff]
    %v215 = vld [vmem:[#allocation5 + $0x3a8] sm:$0xff]
    %v216 = vld [vmem:[#allocation5 + $0x3b0] sm:$0xff]
    %v217 = vld [vmem:[#allocation5 + $0x3b8] sm:$0xff]
    %v218 = vld [vmem:[#allocation5 + $0x3c0] sm:$0xff]
    %v219 = vld [vmem:[#allocation5 + $0x3c8] sm:$0xff]
    %v220 = vld [vmem:[#allocation5 + $0x3d0] sm:$0xff]
    %v221 = vld [vmem:[#allocation5 + $0x3d8] sm:$0xff]
    %v222 = vld [vmem:[#allocation5 + $0x3e0] sm:$0xff]
    %v223 = vld [vmem:[#allocation5 + $0x3e8] sm:$0xff]
    %v224 = vld [vmem:[#allocation5 + $0x3f0] sm:$0xff]
    %v225 = vld [vmem:[#allocation5 + $0x3f8] sm:$0xff]
    %v226 = vld [vmem:[#allocation5 + $0x400] sm:$0xff]
    %v227 = vld [vmem:[#allocation5 + $0x408] sm:$0xff]
    %v228 = vld [vmem:[#allocation5 + $0x410] sm:$0xff]
    %v229 = vld [vmem:[#allocation5 + $0x418] sm:$0xff]
    %v230 = vld [vmem:[#allocation5 + $0x420] sm:$0xff]
    %v231 = vld [vmem:[#allocation5 + $0x428] sm:$0xff]
    %v232 = vld [vmem:[#allocation5 + $0x430] sm:$0xff]
    %v233 = vld [vmem:[#allocation5 + $0x438] sm:$0xff]
    %v234 = vld [vmem:[#allocation5 + $0x440] sm:$0xff]
    %v235 = vld [vmem:[#allocation5 + $0x448] sm:$0xff]
    %v236 = vld [vmem:[#allocation5 + $0x450] sm:$0xff]
    %v237 = vld [vmem:[#allocation5 + $0x458] sm:$0xff]
    %v238 = vld [vmem:[#allocation5 + $0x460] sm:$0xff]
    %v239 = vld [vmem:[#allocation5 + $0x468] sm:$0xff]
    %v240 = vld [vmem:[#allocation5 + $0x470] sm:$0xff]
    %v241 = vld [vmem:[#allocation5 + $0x478] sm:$0xff]
    %v242 = vld [vmem:[#allocation5 + $0x480] sm:$0xff]
    %v243 = vld [vmem:[#allocation5 + $0x488] sm:$0xff]
    %v244 = vld [vmem:[#allocation5 + $0x490] sm:$0xff]
    %v245 = vld [vmem:[#allocation5 + $0x498] sm:$0xff]
    %v246 = vld [vmem:[#allocation5 + $0x4a0] sm:$0xff]
    %v247 = vld [vmem:[#allocation5 + $0x4a8] sm:$0xff]
    %v248 = vld [vmem:[#allocation5 + $0x4b0] sm:$0xff]
    %v249 = vld [vmem:[#allocation5 + $0x4b8] sm:$0xff]
    %v250 = vld [vmem:[#allocation5 + $0x4c0] sm:$0xff]
    %v251 = vld [vmem:[#allocation5 + $0x4c8] sm:$0xff]
    %v252 = vld [vmem:[#allocation5 + $0x4d0] sm:$0xff]
    %v253 = vld [vmem:[#allocation5 + $0x4d8] sm:$0xff]
    %v254 = vld [vmem:[#allocation5 + $0x4e0] sm:$0xff]
    %v255 = vld [vmem:[#allocation5 + $0x4e8] sm:$0xff]
    %v256 = vld [vmem:[#allocation5 + $0x4f0] sm:$0xff]
    %v257 = vld [vmem:[#allocation5 + $0x4f8] sm:$0xff]
    %v258 = vld [vmem:[#allocation5 + $0x500] sm:$0xff]
    %v259 = vld [vmem:[#allocation5 + $0x508] sm:$0xff]
    %v260 = vld [vmem:[#allocation5 + $0x510] sm:$0xff]
    %v261 = vld [vmem:[#allocation5 + $0x518] sm:$0xff]
    %v262 = vld [vmem:[#allocation5 + $0x520] sm:$0xff]
    %v263 = vld [vmem:[#allocation5 + $0x528] sm:$0xff]
    %v264 = vld [vmem:[#allocation5 + $0x530] sm:$0xff]
    %v265 = vld [vmem:[#allocation5 + $0x538] sm:$0xff]
    %v266 = vld [vmem:[#allocation5 + $0x540] sm:$0xff]
    %v267 = vld [vmem:[#allocation5 + $0x548] sm:$0xff]
    %v268 = vld [vmem:[#allocation5 + $0x550] sm:$0xff]
    %v269 = vld [vmem:[#allocation5 + $0x558] sm:$0xff]
    %v270 = vld [vmem:[#allocation5 + $0x560] sm:$0xff]
    %v271 = vld [vmem:[#allocation5 + $0x568] sm:$0xff]
    %v272 = vld [vmem:[#allocation5 + $0x570] sm:$0xff]
    %v273 = vld [vmem:[#allocation5 + $0x578] sm:$0xff]
    %v274 = vld [vmem:[#allocation5 + $0x580] sm:$0xff]
    %v275 = vld [vmem:[#allocation5 + $0x588] sm:$0xff]
    %v276 = vld [vmem:[#allocation5 + $0x590] sm:$0xff]
    %v277 = vld [vmem:[#allocation5 + $0x598] sm:$0xff]
    %v278 = vld [vmem:[#allocation5 + $0x5a0] sm:$0xff]
    %v279 = vld [vmem:[#allocation5 + $0x5a8] sm:$0xff]
    %v280 = vld [vmem:[#allocation5 + $0x5b0] sm:$0xff]
    %v281 = vld [vmem:[#allocation5 + $0x5b8] sm:$0xff]
    %v282 = vld [vmem:[#allocation5 + $0x5c0] sm:$0xff]
    %v283 = vld [vmem:[#allocation5 + $0x5c8] sm:$0xff]
    %v284 = vld [vmem:[#allocation5 + $0x5d0] sm:$0xff]
    %v285 = vld [vmem:[#allocation5 + $0x5d8] sm:$0xff]
    %v286 = vld [vmem:[#allocation5 + $0x5e0] sm:$0xff]
    %v287 = vld [vmem:[#allocation5 + $0x5e8] sm:$0xff]
    %v288 = vld [vmem:[#allocation5 + $0x5f0] sm:$0xff]
    %v289 = vld [vmem:[#allocation5 + $0x5f8] sm:$0xff]
    %v290 = vld [vmem:[#allocation5 + $0x600] sm:$0xff]
    %v291 = vld [vmem:[#allocation5 + $0x608] sm:$0xff]
    %v292 = vld [vmem:[#allocation5 + $0x610] sm:$0xff]
    %v293 = vld [vmem:[#allocation5 + $0x618] sm:$0xff]
    %v294 = vld [vmem:[#allocation5 + $0x620] sm:$0xff]
    %v295 = vld [vmem:[#allocation5 + $0x628] sm:$0xff]
    %v296 = vld [vmem:[#allocation5 + $0x630] sm:$0xff]
    %v297 = vld [vmem:[#allocation5 + $0x638] sm:$0xff]
    %v298 = vld [vmem:[#allocation5 + $0x640] sm:$0xff]
    %v299 = vld [vmem:[#allocation5 + $0x648] sm:$0xff]
    %v300 = vld [vmem:[#allocation5 + $0x650] sm:$0xff]
    %v301 = vld [vmem:[#allocation5 + $0x658] sm:$0xff]
    %v302 = vld [vmem:[#allocation5 + $0x660] sm:$0xff]
    %v303 = vld [vmem:[#allocation5 + $0x668] sm:$0xff]
    %v304 = vld [vmem:[#allocation5 + $0x670] sm:$0xff]
    %v305 = vld [vmem:[#allocation5 + $0x678] sm:$0xff]
    %v306 = vld [vmem:[#allocation5 + $0x680] sm:$0xff]
    %v307 = vld [vmem:[#allocation5 + $0x688] sm:$0xff]
    %v308 = vld [vmem:[#allocation5 + $0x690] sm:$0xff]
    %v309 = vld [vmem:[#allocation5 + $0x698] sm:$0xff]
    %v310 = vld [vmem:[#allocation5 + $0x6a0] sm:$0xff]
    %v311 = vld [vmem:[#allocation5 + $0x6a8] sm:$0xff]
    %v312 = vld [vmem:[#allocation5 + $0x6b0] sm:$0xff]
    %v313 = vld [vmem:[#allocation5 + $0x6b8] sm:$0xff]
    %v314 = vld [vmem:[#allocation5 + $0x6c0] sm:$0xff]
    %v315 = vld [vmem:[#allocation5 + $0x6c8] sm:$0xff]
    %v316 = vld [vmem:[#allocation5 + $0x6d0] sm:$0xff]
    %v317 = vld [vmem:[#allocation5 + $0x6d8] sm:$0xff]
    %v318 = vld [vmem:[#allocation5 + $0x6e0] sm:$0xff]
    %v319 = vld [vmem:[#allocation5 + $0x6e8] sm:$0xff]
    %v320 = vld [vmem:[#allocation5 + $0x6f0] sm:$0xff]
    %v321 = vld [vmem:[#allocation5 + $0x6f8] sm:$0xff]
    %v322 = vld [vmem:[#allocation5 + $0x700] sm:$0xff]
    %v323 = vld [vmem:[#allocation5 + $0x708] sm:$0xff]
    %v324 = vld [vmem:[#allocation5 + $0x710] sm:$0xff]
    %v325 = vld [vmem:[#allocation5 + $0x718] sm:$0xff]
    %v326 = vld [vmem:[#allocation5 + $0x720] sm:$0xff]
    %v327 = vld [vmem:[#allocation5 + $0x728] sm:$0xff]
    %v328 = vld [vmem:[#allocation5 + $0x730] sm:$0xff]
    %v329 = vld [vmem:[#allocation5 + $0x738] sm:$0xff]
    %v330 = vld [vmem:[#allocation5 + $0x740] sm:$0xff]
    %v331 = vld [vmem:[#allocation5 + $0x748] sm:$0xff]
    %v332 = vld [vmem:[#allocation5 + $0x750] sm:$0xff]
    %v333 = vld [vmem:[#allocation5 + $0x758] sm:$0xff]
    %v334 = vld [vmem:[#allocation5 + $0x760] sm:$0xff]
    %v335 = vld [vmem:[#allocation5 + $0x768] sm:$0xff]
    %v336 = vld [vmem:[#allocation5 + $0x770] sm:$0xff]
    %v337 = vld [vmem:[#allocation5 + $0x778] sm:$0xff]
    %v338 = vld [vmem:[#allocation5 + $0x780] sm:$0xff]
    %v339 = vld [vmem:[#allocation5 + $0x788] sm:$0xff]
    %v340 = vld [vmem:[#allocation5 + $0x790] sm:$0xff]
    %v341 = vld [vmem:[#allocation5 + $0x798] sm:$0xff]
    %v342 = vld [vmem:[#allocation5 + $0x7a0] sm:$0xff]
    %v343 = vld [vmem:[#allocation5 + $0x7a8] sm:$0xff]
    %v344 = vld [vmem:[#allocation5 + $0x7b0] sm:$0xff]
    %v345 = vld [vmem:[#allocation5 + $0x7b8] sm:$0xff]
    %v346 = vld [vmem:[#allocation5 + $0x7c0] sm:$0xff]
    %v347 = vld [vmem:[#allocation5 + $0x7c8] sm:$0xff]
    %v348 = vld [vmem:[#allocation5 + $0x7d0] sm:$0xff]
    %v349 = vld [vmem:[#allocation5 + $0x7d8] sm:$0xff]
    %v350 = vld [vmem:[#allocation5 + $0x7e0] sm:$0xff]
    %v351 = vld [vmem:[#allocation5 + $0x7e8] sm:$0xff]
    %v352 = vld [vmem:[#allocation5 + $0x7f0] sm:$0xff]
    %v353 = vld [vmem:[#allocation5 + $0x7f8] sm:$0xff]
    %v354 = vld [vmem:[#allocation5 + $0x800] sm:$0xff]
    %v355 = vld [vmem:[#allocation5 + $0x808] sm:$0xff]
    %v356 = vld [vmem:[#allocation5 + $0x810] sm:$0xff]
    %v357 = vld [vmem:[#allocation5 + $0x818] sm:$0xff]
    %v358 = vld [vmem:[#allocation5 + $0x820] sm:$0xff]
    %v359 = vld [vmem:[#allocation5 + $0x828] sm:$0xff]
    %v360 = vld [vmem:[#allocation5 + $0x830] sm:$0xff]
    %v361 = vld [vmem:[#allocation5 + $0x838] sm:$0xff]
    %v362 = vld [vmem:[#allocation5 + $0x840] sm:$0xff]
    %v363 = vld [vmem:[#allocation5 + $0x848] sm:$0xff]
    %v364 = vld [vmem:[#allocation5 + $0x850] sm:$0xff]
    %v365 = vld [vmem:[#allocation5 + $0x858] sm:$0xff]
    %v366 = vld [vmem:[#allocation5 + $0x860] sm:$0xff]
    %v367 = vld [vmem:[#allocation5 + $0x868] sm:$0xff]
    %v368 = vld [vmem:[#allocation5 + $0x870] sm:$0xff]
    %v369 = vld [vmem:[#allocation5 + $0x878] sm:$0xff]
    %v370 = vld [vmem:[#allocation5 + $0x880] sm:$0xff]
    %v371 = vld [vmem:[#allocation5 + $0x888] sm:$0xff]
    %v372 = vld [vmem:[#allocation5 + $0x890] sm:$0xff]
    %v373 = vld [vmem:[#allocation5 + $0x898] sm:$0xff]
    %v374 = vld [vmem:[#allocation5 + $0x8a0] sm:$0xff]
    %v375 = vld [vmem:[#allocation5 + $0x8a8] sm:$0xff]
    %v376 = vld [vmem:[#allocation5 + $0x8b0] sm:$0xff]
    %v377 = vld [vmem:[#allocation5 + $0x8b8] sm:$0xff]
    %v378 = vld [vmem:[#allocation5 + $0x8c0] sm:$0xff]
    %v379 = vld [vmem:[#allocation5 + $0x8c8] sm:$0xff]
    %v380 = vld [vmem:[#allocation5 + $0x8d0] sm:$0xff]
    %v381 = vld [vmem:[#allocation5 + $0x8d8] sm:$0xff]
    %v382 = vld [vmem:[#allocation5 + $0x8e0] sm:$0xff]
    %v383 = vld [vmem:[#allocation5 + $0x8e8] sm:$0xff]
    %v384 = vld [vmem:[#allocation5 + $0x8f0] sm:$0xff]
    %v385 = vld [vmem:[#allocation5 + $0x8f8] sm:$0xff]
    %v386 = vld [vmem:[#allocation5 + $0x900] sm:$0xff]
    %v387 = vld [vmem:[#allocation5 + $0x908] sm:$0xff]
    %v388 = vld [vmem:[#allocation5 + $0x910] sm:$0xff]
    %v389 = vld [vmem:[#allocation5 + $0x918] sm:$0xff]
    %v390 = vld [vmem:[#allocation5 + $0x920] sm:$0xff]
    %v391 = vld [vmem:[#allocation5 + $0x928] sm:$0xff]
    %v392 = vld [vmem:[#allocation5 + $0x930] sm:$0xff]
    %v393 = vld [vmem:[#allocation5 + $0x938] sm:$0xff]
    %v394 = vld [vmem:[#allocation5 + $0x940] sm:$0xff]
    %v395 = vld [vmem:[#allocation5 + $0x948] sm:$0xff]
    %v396 = vld [vmem:[#allocation5 + $0x950] sm:$0xff]
    %v397 = vld [vmem:[#allocation5 + $0x958] sm:$0xff]
    %v398 = vld [vmem:[#allocation5 + $0x960] sm:$0xff]
    %v399 = vld [vmem:[#allocation5 + $0x968] sm:$0xff]
    %v400 = vld [vmem:[#allocation5 + $0x970] sm:$0xff]
    %v401 = vld [vmem:[#allocation5 + $0x978] sm:$0xff]
    %v402 = vld [vmem:[#allocation5 + $0x980] sm:$0xff]
    %v403 = vld [vmem:[#allocation5 + $0x988] sm:$0xff]
    %v404 = vld [vmem:[#allocation5 + $0x990] sm:$0xff]
    %v405 = vld [vmem:[#allocation5 + $0x998] sm:$0xff]
    %v406 = vld [vmem:[#allocation5 + $0x9a0] sm:$0xff]
    %v407 = vld [vmem:[#allocation5 + $0x9a8] sm:$0xff]
    %v408 = vld [vmem:[#allocation5 + $0x9b0] sm:$0xff]
    %v409 = vld [vmem:[#allocation5 + $0x9b8] sm:$0xff]
    %v410 = vld [vmem:[#allocation5 + $0x9c0] sm:$0xff]
    %v411 = vld [vmem:[#allocation5 + $0x9c8] sm:$0xff]
    %v412 = vld [vmem:[#allocation5 + $0x9d0] sm:$0xff]
    %v413 = vld [vmem:[#allocation5 + $0x9d8] sm:$0xff]
    %v414 = vld [vmem:[#allocation5 + $0x9e0] sm:$0xff]
    %v415 = vld [vmem:[#allocation5 + $0x9e8] sm:$0xff]
    %v416 = vld [vmem:[#allocation5 + $0x9f0] sm:$0xff]
    %v417 = vld [vmem:[#allocation5 + $0x9f8] sm:$0xff]
    %v418 = vld [vmem:[#allocation5 + $0xa00] sm:$0xff]
    %v419 = vld [vmem:[#allocation5 + $0xa08] sm:$0xff]
    %v420 = vld [vmem:[#allocation5 + $0xa10] sm:$0xff]
    %v421 = vld [vmem:[#allocation5 + $0xa18] sm:$0xff]
    %v422 = vld [vmem:[#allocation5 + $0xa20] sm:$0xff]
    %v423 = vld [vmem:[#allocation5 + $0xa28] sm:$0xff]
    %v424 = vld [vmem:[#allocation5 + $0xa30] sm:$0xff]
    %v425 = vld [vmem:[#allocation5 + $0xa38] sm:$0xff]
    %v426 = vld [vmem:[#allocation5 + $0xa40] sm:$0xff]
    %v427 = vld [vmem:[#allocation5 + $0xa48] sm:$0xff]
    %v428 = vld [vmem:[#allocation5 + $0xa50] sm:$0xff]
    %v429 = vld [vmem:[#allocation5 + $0xa58] sm:$0xff]
    %v430 = vld [vmem:[#allocation5 + $0xa60] sm:$0xff]
    %v431 = vld [vmem:[#allocation5 + $0xa68] sm:$0xff]
    %v432 = vld [vmem:[#allocation5 + $0xa70] sm:$0xff]
    %v433 = vld [vmem:[#allocation5 + $0xa78] sm:$0xff]
    %v434 = vld [vmem:[#allocation5 + $0xa80] sm:$0xff]
    %v435 = vld [vmem:[#allocation5 + $0xa88] sm:$0xff]
    %v436 = vld [vmem:[#allocation5 + $0xa90] sm:$0xff]
    %v437 = vld [vmem:[#allocation5 + $0xa98] sm:$0xff]
    %v438 = vld [vmem:[#allocation5 + $0xaa0] sm:$0xff]
    %v439 = vld [vmem:[#allocation5 + $0xaa8] sm:$0xff]
    %v440 = vld [vmem:[#allocation5 + $0xab0] sm:$0xff]
    %v441 = vld [vmem:[#allocation5 + $0xab8] sm:$0xff]
    %v442 = vld [vmem:[#allocation5 + $0xac0] sm:$0xff]
    %v443 = vld [vmem:[#allocation5 + $0xac8] sm:$0xff]
    %v444 = vld [vmem:[#allocation5 + $0xad0] sm:$0xff]
    %v445 = vld [vmem:[#allocation5 + $0xad8] sm:$0xff]
    %v446 = vld [vmem:[#allocation5 + $0xae0] sm:$0xff]
    %v447 = vld [vmem:[#allocation5 + $0xae8] sm:$0xff]
    %v448 = vld [vmem:[#allocation5 + $0xaf0] sm:$0xff]
    %v449 = vld [vmem:[#allocation5 + $0xaf8] sm:$0xff]
    %v450 = vld [vmem:[#allocation5 + $0xb00] sm:$0xff]
    %v451 = vld [vmem:[#allocation5 + $0xb08] sm:$0xff]
    %v452 = vld [vmem:[#allocation5 + $0xb10] sm:$0xff]
    %v453 = vld [vmem:[#allocation5 + $0xb18] sm:$0xff]
    %v454 = vld [vmem:[#allocation5 + $0xb20] sm:$0xff]
    %v455 = vld [vmem:[#allocation5 + $0xb28] sm:$0xff]
    %v456 = vld [vmem:[#allocation5 + $0xb30] sm:$0xff]
    %v457 = vld [vmem:[#allocation5 + $0xb38] sm:$0xff]
    %v458 = vld [vmem:[#allocation5 + $0xb40] sm:$0xff]
    %v459 = vld [vmem:[#allocation5 + $0xb48] sm:$0xff]
    %v460 = vld [vmem:[#allocation5 + $0xb50] sm:$0xff]
    %v461 = vld [vmem:[#allocation5 + $0xb58] sm:$0xff]
    %v462 = vld [vmem:[#allocation5 + $0xb60] sm:$0xff]
    %v463 = vld [vmem:[#allocation5 + $0xb68] sm:$0xff]
    %v464 = vld [vmem:[#allocation5 + $0xb70] sm:$0xff]
    %v465 = vld [vmem:[#allocation5 + $0xb78] sm:$0xff]
    %v466 = vld [vmem:[#allocation5 + $0xb80] sm:$0xff]
    %v467 = vld [vmem:[#allocation5 + $0xb88] sm:$0xff]
    %v468 = vld [vmem:[#allocation5 + $0xb90] sm:$0xff]
    %v469 = vld [vmem:[#allocation5 + $0xb98] sm:$0xff]
    %v470 = vld [vmem:[#allocation5 + $0xba0] sm:$0xff]
    %v471 = vld [vmem:[#allocation5 + $0xba8] sm:$0xff]
    %v472 = vld [vmem:[#allocation5 + $0xbb0] sm:$0xff]
    %v473 = vld [vmem:[#allocation5 + $0xbb8] sm:$0xff]
    %v474 = vld [vmem:[#allocation5 + $0xbc0] sm:$0xff]
    %v475 = vld [vmem:[#allocation5 + $0xbc8] sm:$0xff]
    %v476 = vld [vmem:[#allocation5 + $0xbd0] sm:$0xff]
    %v477 = vld [vmem:[#allocation5 + $0xbd8] sm:$0xff]
    %v478 = vld [vmem:[#allocation5 + $0xbe0] sm:$0xff]
    %v479 = vld [vmem:[#allocation5 + $0xbe8] sm:$0xff]
    %v480 = vld [vmem:[#allocation5 + $0xbf0] sm:$0xff]
    %v481 = vld [vmem:[#allocation5 + $0xbf8] sm:$0xff]
    %v482 = vld [vmem:[#allocation5 + $0xc00] sm:$0xff]
    %v483 = vld [vmem:[#allocation5 + $0xc08] sm:$0xff]
    %v484 = vld [vmem:[#allocation5 + $0xc10] sm:$0xff]
    %v485 = vld [vmem:[#allocation5 + $0xc18] sm:$0xff]
    %v486 = vld [vmem:[#allocation5 + $0xc20] sm:$0xff]
    %v487 = vld [vmem:[#allocation5 + $0xc28] sm:$0xff]
    %v488 = vld [vmem:[#allocation5 + $0xc30] sm:$0xff]
    %v489 = vld [vmem:[#allocation5 + $0xc38] sm:$0xff]
    %v490 = vld [vmem:[#allocation7] sm:$0xff]
    %v492 = vlaneseq
    %v493 = vshrl.u32 %v492, 7
    %v494 = vsub.s32 0, %v493
    %v495 = vrot.slane %v490, %v494
    %v496 = vlaneseq
    %v497 = vshrl.u32 %v496, 7
    %v498 = vsub.s32 1, %v497
    %v499 = vrot.slane %v490, %v498
    %v500 = vlaneseq
    %v501 = vshrl.u32 %v500, 7
    %v502 = vsub.s32 2, %v501
    %v503 = vrot.slane %v490, %v502
    %v504 = vlaneseq
    %v505 = vshrl.u32 %v504, 7
    %v506 = vsub.s32 3, %v505
    %v507 = vrot.slane %v490, %v506
    %v508 = vlaneseq
    %v509 = vshrl.u32 %v508, 7
    %v510 = vsub.s32 4, %v509
    %v511 = vrot.slane %v490, %v510
    %v512 = vlaneseq
    %v513 = vshrl.u32 %v512, 7
    %v514 = vsub.s32 5, %v513
    %v515 = vrot.slane %v490, %v514
    %v516 = vlaneseq
    %v517 = vshrl.u32 %v516, 7
    %v518 = vsub.s32 6, %v517
    %v519 = vrot.slane %v490, %v518
    %v520 = vlaneseq
    %v521 = vshrl.u32 %v520, 7
    %v522 = vsub.s32 7, %v521
    %v523 = vrot.slane %v490, %v522
    %v924 = vunpack.c.l.b16 %v98
    %v925 = vunpack.c.h.b16 %v98
    %v926 = vunpack.c.l.b16 %v99
    %v927 = vunpack.c.h.b16 %v99
    %v928 = vunpack.c.l.b16 %v100
    %v929 = vunpack.c.h.b16 %v100
    %v930 = vunpack.c.l.b16 %v101
    %v931 = vunpack.c.h.b16 %v101
    %v932 = vunpack.c.l.b16 %v102
    %v933 = vunpack.c.h.b16 %v102
    %v934 = vunpack.c.l.b16 %v103
    %v935 = vunpack.c.h.b16 %v103
    %v936 = vunpack.c.l.b16 %v104
    %v937 = vunpack.c.h.b16 %v104
    %v938 = vunpack.c.l.b16 %v105
    %v939 = vunpack.c.h.b16 %v105
    %v940 = vunpack.c.l.b16 %v106
    %v941 = vunpack.c.h.b16 %v106
    %v942 = vunpack.c.l.b16 %v107
    %v943 = vunpack.c.h.b16 %v107
    %v944 = vunpack.c.l.b16 %v108
    %v945 = vunpack.c.h.b16 %v108
    %v946 = vunpack.c.l.b16 %v109
    %v947 = vunpack.c.h.b16 %v109
    %v948 = vunpack.c.l.b16 %v110
    %v949 = vunpack.c.h.b16 %v110
    %v950 = vunpack.c.l.b16 %v111
    %v951 = vunpack.c.h.b16 %v111
    %v952 = vunpack.c.l.b16 %v112
    %v953 = vunpack.c.h.b16 %v112
    %v954 = vunpack.c.l.b16 %v113
    %v955 = vunpack.c.h.b16 %v113
    %v956 = vunpack.c.l.b16 %v114
    %v957 = vunpack.c.h.b16 %v114
    %v958 = vunpack.c.l.b16 %v115
    %v959 = vunpack.c.h.b16 %v115
    %v960 = vunpack.c.l.b16 %v116
    %v961 = vunpack.c.h.b16 %v116
    %v962 = vunpack.c.l.b16 %v117
    %v963 = vunpack.c.h.b16 %v117
    %v964 = vunpack.c.l.b16 %v118
    %v965 = vunpack.c.h.b16 %v118
    %v966 = vunpack.c.l.b16 %v119
    %v967 = vunpack.c.h.b16 %v119
    %v968 = vunpack.c.l.b16 %v120
    %v969 = vunpack.c.h.b16 %v120
    %v970 = vunpack.c.l.b16 %v121
    %v971 = vunpack.c.h.b16 %v121
    %v972 = vunpack.c.l.b16 %v122
    %v973 = vunpack.c.h.b16 %v122
    %v974 = vunpack.c.l.b16 %v123
    %v975 = vunpack.c.h.b16 %v123
    %v976 = vunpack.c.l.b16 %v124
    %v977 = vunpack.c.h.b16 %v124
    %v978 = vunpack.c.l.b16 %v125
    %v979 = vunpack.c.h.b16 %v125
    %v980 = vunpack.c.l.b16 %v126
    %v981 = vunpack.c.h.b16 %v126
    %v982 = vunpack.c.l.b16 %v127
    %v983 = vunpack.c.h.b16 %v127
    %v984 = vunpack.c.l.b16 %v128
    %v985 = vunpack.c.h.b16 %v128
    %v986 = vunpack.c.l.b16 %v129
    %v987 = vunpack.c.h.b16 %v129
    %v988 = vunpack.c.l.b16 %v130
    %v989 = vunpack.c.h.b16 %v130
    %v990 = vunpack.c.l.b16 %v131
    %v991 = vunpack.c.h.b16 %v131
    %v992 = vunpack.c.l.b16 %v132
    %v993 = vunpack.c.h.b16 %v132
    %v994 = vunpack.c.l.b16 %v133
    %v995 = vunpack.c.h.b16 %v133
    %v996 = vunpack.c.l.b16 %v134
    %v997 = vunpack.c.h.b16 %v134
    %v998 = vunpack.c.l.b16 %v135
    %v999 = vunpack.c.h.b16 %v135
    %v1000 = vunpack.c.l.b16 %v136
    %v1001 = vunpack.c.h.b16 %v136
    %v1002 = vunpack.c.l.b16 %v137
    %v1003 = vunpack.c.h.b16 %v137
    %v1004 = vunpack.c.l.b16 %v138
    %v1005 = vunpack.c.h.b16 %v138
    %v1006 = vunpack.c.l.b16 %v139
    %v1007 = vunpack.c.h.b16 %v139
    %v1008 = vunpack.c.l.b16 %v140
    %v1009 = vunpack.c.h.b16 %v140
    %v1010 = vunpack.c.l.b16 %v141
    %v1011 = vunpack.c.h.b16 %v141
    %v1012 = vunpack.c.l.b16 %v142
    %v1013 = vunpack.c.h.b16 %v142
    %v1014 = vunpack.c.l.b16 %v143
    %v1015 = vunpack.c.h.b16 %v143
    %v1016 = vunpack.c.l.b16 %v144
    %v1017 = vunpack.c.h.b16 %v144
    %v1018 = vunpack.c.l.b16 %v145
    %v1019 = vunpack.c.h.b16 %v145
    %v1020 = vunpack.c.l.b16 %v146
    %v1021 = vunpack.c.h.b16 %v146
    %v1022 = vunpack.c.l.b16 %v147
    %v1023 = vunpack.c.h.b16 %v147
    %v1024 = vunpack.c.l.b16 %v148
    %v1025 = vunpack.c.h.b16 %v148
    %v1026 = vunpack.c.l.b16 %v149
    %v1027 = vunpack.c.h.b16 %v149
    %v1028 = vunpack.c.l.b16 %v150
    %v1029 = vunpack.c.h.b16 %v150
    %v1030 = vunpack.c.l.b16 %v151
    %v1031 = vunpack.c.h.b16 %v151
    %v1032 = vunpack.c.l.b16 %v152
    %v1033 = vunpack.c.h.b16 %v152
    %v1034 = vunpack.c.l.b16 %v153
    %v1035 = vunpack.c.h.b16 %v153
    %v1036 = vunpack.c.l.b16 %v154
    %v1037 = vunpack.c.h.b16 %v154
    %v1038 = vunpack.c.l.b16 %v155
    %v1039 = vunpack.c.h.b16 %v155
    %v1040 = vunpack.c.l.b16 %v156
    %v1041 = vunpack.c.h.b16 %v156
    %v1042 = vunpack.c.l.b16 %v157
    %v1043 = vunpack.c.h.b16 %v157
    %v1044 = vunpack.c.l.b16 %v158
    %v1045 = vunpack.c.h.b16 %v158
    %v1046 = vunpack.c.l.b16 %v159
    %v1047 = vunpack.c.h.b16 %v159
    %v1048 = vunpack.c.l.b16 %v160
    %v1049 = vunpack.c.h.b16 %v160
    %v1050 = vunpack.c.l.b16 %v161
    %v1051 = vunpack.c.h.b16 %v161
    %v1052 = vunpack.c.l.b16 %v162
    %v1053 = vunpack.c.h.b16 %v162
    %v1054 = vunpack.c.l.b16 %v163
    %v1055 = vunpack.c.h.b16 %v163
    %v1056 = vunpack.c.l.b16 %v164
    %v1057 = vunpack.c.h.b16 %v164
    %v1058 = vunpack.c.l.b16 %v165
    %v1059 = vunpack.c.h.b16 %v165
    %v1060 = vunpack.c.l.b16 %v166
    %v1061 = vunpack.c.h.b16 %v166
    %v1062 = vunpack.c.l.b16 %v167
    %v1063 = vunpack.c.h.b16 %v167
    %v1064 = vunpack.c.l.b16 %v168
    %v1065 = vunpack.c.h.b16 %v168
    %v1066 = vunpack.c.l.b16 %v169
    %v1067 = vunpack.c.h.b16 %v169
    %v1068 = vunpack.c.l.b16 %v170
    %v1069 = vunpack.c.h.b16 %v170
    %v1070 = vunpack.c.l.b16 %v171
    %v1071 = vunpack.c.h.b16 %v171
    %v1072 = vunpack.c.l.b16 %v172
    %v1073 = vunpack.c.h.b16 %v172
    %v1074 = vunpack.c.l.b16 %v173
    %v1075 = vunpack.c.h.b16 %v173
    %v1076 = vunpack.c.l.b16 %v174
    %v1077 = vunpack.c.h.b16 %v174
    %v1078 = vunpack.c.l.b16 %v175
    %v1079 = vunpack.c.h.b16 %v175
    %v1080 = vunpack.c.l.b16 %v176
    %v1081 = vunpack.c.h.b16 %v176
    %v1082 = vunpack.c.l.b16 %v177
    %v1083 = vunpack.c.h.b16 %v177
    %v1084 = vunpack.c.l.b16 %v178
    %v1085 = vunpack.c.h.b16 %v178
    %v1086 = vunpack.c.l.b16 %v179
    %v1087 = vunpack.c.h.b16 %v179
    %v1088 = vunpack.c.l.b16 %v180
    %v1089 = vunpack.c.h.b16 %v180
    %v1090 = vunpack.c.l.b16 %v181
    %v1091 = vunpack.c.h.b16 %v181
    %v1092 = vunpack.c.l.b16 %v182
    %v1093 = vunpack.c.h.b16 %v182
    %v1094 = vunpack.c.l.b16 %v183
    %v1095 = vunpack.c.h.b16 %v183
    %v1096 = vunpack.c.l.b16 %v184
    %v1097 = vunpack.c.h.b16 %v184
    %v1098 = vunpack.c.l.b16 %v185
    %v1099 = vunpack.c.h.b16 %v185
    %v1100 = vunpack.c.l.b16 %v186
    %v1101 = vunpack.c.h.b16 %v186
    %v1102 = vunpack.c.l.b16 %v187
    %v1103 = vunpack.c.h.b16 %v187
    %v1104 = vunpack.c.l.b16 %v188
    %v1105 = vunpack.c.h.b16 %v188
    %v1106 = vunpack.c.l.b16 %v189
    %v1107 = vunpack.c.h.b16 %v189
    %v1108 = vunpack.c.l.b16 %v190
    %v1109 = vunpack.c.h.b16 %v190
    %v1110 = vunpack.c.l.b16 %v191
    %v1111 = vunpack.c.h.b16 %v191
    %v1112 = vunpack.c.l.b16 %v192
    %v1113 = vunpack.c.h.b16 %v192
    %v1114 = vunpack.c.l.b16 %v193
    %v1115 = vunpack.c.h.b16 %v193
    %v1116 = vunpack.c.l.b16 %v194
    %v1117 = vunpack.c.h.b16 %v194
    %v1118 = vunpack.c.l.b16 %v195
    %v1119 = vunpack.c.h.b16 %v195
    %v1120 = vunpack.c.l.b16 %v196
    %v1121 = vunpack.c.h.b16 %v196
    %v1122 = vunpack.c.l.b16 %v197
    %v1123 = vunpack.c.h.b16 %v197
    %v1124 = vunpack.c.l.b16 %v198
    %v1125 = vunpack.c.h.b16 %v198
    %v1126 = vunpack.c.l.b16 %v199
    %v1127 = vunpack.c.h.b16 %v199
    %v1128 = vunpack.c.l.b16 %v200
    %v1129 = vunpack.c.h.b16 %v200
    %v1130 = vunpack.c.l.b16 %v201
    %v1131 = vunpack.c.h.b16 %v201
    %v1132 = vunpack.c.l.b16 %v202
    %v1133 = vunpack.c.h.b16 %v202
    %v1134 = vunpack.c.l.b16 %v203
    %v1135 = vunpack.c.h.b16 %v203
    %v1136 = vunpack.c.l.b16 %v204
    %v1137 = vunpack.c.h.b16 %v204
    %v1138 = vunpack.c.l.b16 %v205
    %v1139 = vunpack.c.h.b16 %v205
    %v1140 = vunpack.c.l.b16 %v206
    %v1141 = vunpack.c.h.b16 %v206
    %v1142 = vunpack.c.l.b16 %v207
    %v1143 = vunpack.c.h.b16 %v207
    %v1144 = vunpack.c.l.b16 %v208
    %v1145 = vunpack.c.h.b16 %v208
    %v1146 = vunpack.c.l.b16 %v209
    %v1147 = vunpack.c.h.b16 %v209
    %v1148 = vunpack.c.l.b16 %v210
    %v1149 = vunpack.c.h.b16 %v210
    %v1150 = vunpack.c.l.b16 %v211
    %v1151 = vunpack.c.h.b16 %v211
    %v1152 = vunpack.c.l.b16 %v212
    %v1153 = vunpack.c.h.b16 %v212
    %v1154 = vunpack.c.l.b16 %v213
    %v1155 = vunpack.c.h.b16 %v213
    %v1156 = vunpack.c.l.b16 %v214
    %v1157 = vunpack.c.h.b16 %v214
    %v1158 = vunpack.c.l.b16 %v215
    %v1159 = vunpack.c.h.b16 %v215
    %v1160 = vunpack.c.l.b16 %v216
    %v1161 = vunpack.c.h.b16 %v216
    %v1162 = vunpack.c.l.b16 %v217
    %v1163 = vunpack.c.h.b16 %v217
    %v1164 = vunpack.c.l.b16 %v218
    %v1165 = vunpack.c.h.b16 %v218
    %v1166 = vunpack.c.l.b16 %v219
    %v1167 = vunpack.c.h.b16 %v219
    %v1168 = vunpack.c.l.b16 %v220
    %v1169 = vunpack.c.h.b16 %v220
    %v1170 = vunpack.c.l.b16 %v221
    %v1171 = vunpack.c.h.b16 %v221
    %v1172 = vunpack.c.l.b16 %v222
    %v1173 = vunpack.c.h.b16 %v222
    %v1174 = vunpack.c.l.b16 %v223
    %v1175 = vunpack.c.h.b16 %v223
    %v1176 = vunpack.c.l.b16 %v224
    %v1177 = vunpack.c.h.b16 %v224
    %v1178 = vunpack.c.l.b16 %v225
    %v1179 = vunpack.c.h.b16 %v225
    %v1180 = vunpack.c.l.b16 %v226
    %v1181 = vunpack.c.h.b16 %v226
    %v1182 = vunpack.c.l.b16 %v227
    %v1183 = vunpack.c.h.b16 %v227
    %v1184 = vunpack.c.l.b16 %v228
    %v1185 = vunpack.c.h.b16 %v228
    %v1186 = vunpack.c.l.b16 %v229
    %v1187 = vunpack.c.h.b16 %v229
    %v1188 = vunpack.c.l.b16 %v230
    %v1189 = vunpack.c.h.b16 %v230
    %v1190 = vunpack.c.l.b16 %v231
    %v1191 = vunpack.c.h.b16 %v231
    %v1192 = vunpack.c.l.b16 %v232
    %v1193 = vunpack.c.h.b16 %v232
    %v1194 = vunpack.c.l.b16 %v233
    %v1195 = vunpack.c.h.b16 %v233
    %v1196 = vunpack.c.l.b16 %v234
    %v1197 = vunpack.c.h.b16 %v234
    %v1198 = vunpack.c.l.b16 %v235
    %v1199 = vunpack.c.h.b16 %v235
    %v1200 = vunpack.c.l.b16 %v236
    %v1201 = vunpack.c.h.b16 %v236
    %v1202 = vunpack.c.l.b16 %v237
    %v1203 = vunpack.c.h.b16 %v237
    %v1204 = vunpack.c.l.b16 %v238
    %v1205 = vunpack.c.h.b16 %v238
    %v1206 = vunpack.c.l.b16 %v239
    %v1207 = vunpack.c.h.b16 %v239
    %v1208 = vunpack.c.l.b16 %v240
    %v1209 = vunpack.c.h.b16 %v240
    %v1210 = vunpack.c.l.b16 %v241
    %v1211 = vunpack.c.h.b16 %v241
    %v1212 = vunpack.c.l.b16 %v242
    %v1213 = vunpack.c.h.b16 %v242
    %v1214 = vunpack.c.l.b16 %v243
    %v1215 = vunpack.c.h.b16 %v243
    %v1216 = vunpack.c.l.b16 %v244
    %v1217 = vunpack.c.h.b16 %v244
    %v1218 = vunpack.c.l.b16 %v245
    %v1219 = vunpack.c.h.b16 %v245
    %v1220 = vunpack.c.l.b16 %v246
    %v1221 = vunpack.c.h.b16 %v246
    %v1222 = vunpack.c.l.b16 %v247
    %v1223 = vunpack.c.h.b16 %v247
    %v1224 = vunpack.c.l.b16 %v248
    %v1225 = vunpack.c.h.b16 %v248
    %v1226 = vunpack.c.l.b16 %v249
    %v1227 = vunpack.c.h.b16 %v249
    %v1228 = vunpack.c.l.b16 %v250
    %v1229 = vunpack.c.h.b16 %v250
    %v1230 = vunpack.c.l.b16 %v251
    %v1231 = vunpack.c.h.b16 %v251
    %v1232 = vunpack.c.l.b16 %v252
    %v1233 = vunpack.c.h.b16 %v252
    %v1234 = vunpack.c.l.b16 %v253
    %v1235 = vunpack.c.h.b16 %v253
    %v1236 = vunpack.c.l.b16 %v254
    %v1237 = vunpack.c.h.b16 %v254
    %v1238 = vunpack.c.l.b16 %v255
    %v1239 = vunpack.c.h.b16 %v255
    %v1240 = vunpack.c.l.b16 %v256
    %v1241 = vunpack.c.h.b16 %v256
    %v1242 = vunpack.c.l.b16 %v257
    %v1243 = vunpack.c.h.b16 %v257
    %v1244 = vunpack.c.l.b16 %v258
    %v1245 = vunpack.c.h.b16 %v258
    %v1246 = vunpack.c.l.b16 %v259
    %v1247 = vunpack.c.h.b16 %v259
    %v1248 = vunpack.c.l.b16 %v260
    %v1249 = vunpack.c.h.b16 %v260
    %v1250 = vunpack.c.l.b16 %v261
    %v1251 = vunpack.c.h.b16 %v261
    %v1252 = vunpack.c.l.b16 %v262
    %v1253 = vunpack.c.h.b16 %v262
    %v1254 = vunpack.c.l.b16 %v263
    %v1255 = vunpack.c.h.b16 %v263
    %v1256 = vunpack.c.l.b16 %v264
    %v1257 = vunpack.c.h.b16 %v264
    %v1258 = vunpack.c.l.b16 %v265
    %v1259 = vunpack.c.h.b16 %v265
    %v1260 = vunpack.c.l.b16 %v266
    %v1261 = vunpack.c.h.b16 %v266
    %v1262 = vunpack.c.l.b16 %v267
    %v1263 = vunpack.c.h.b16 %v267
    %v1264 = vunpack.c.l.b16 %v268
    %v1265 = vunpack.c.h.b16 %v268
    %v1266 = vunpack.c.l.b16 %v269
    %v1267 = vunpack.c.h.b16 %v269
    %v1268 = vunpack.c.l.b16 %v270
    %v1269 = vunpack.c.h.b16 %v270
    %v1270 = vunpack.c.l.b16 %v271
    %v1271 = vunpack.c.h.b16 %v271
    %v1272 = vunpack.c.l.b16 %v272
    %v1273 = vunpack.c.h.b16 %v272
    %v1274 = vunpack.c.l.b16 %v273
    %v1275 = vunpack.c.h.b16 %v273
    %v1276 = vunpack.c.l.b16 %v274
    %v1277 = vunpack.c.h.b16 %v274
    %v1278 = vunpack.c.l.b16 %v275
    %v1279 = vunpack.c.h.b16 %v275
    %v1280 = vunpack.c.l.b16 %v276
    %v1281 = vunpack.c.h.b16 %v276
    %v1282 = vunpack.c.l.b16 %v277
    %v1283 = vunpack.c.h.b16 %v277
    %v1284 = vunpack.c.l.b16 %v278
    %v1285 = vunpack.c.h.b16 %v278
    %v1286 = vunpack.c.l.b16 %v279
    %v1287 = vunpack.c.h.b16 %v279
    %v1288 = vunpack.c.l.b16 %v280
    %v1289 = vunpack.c.h.b16 %v280
    %v1290 = vunpack.c.l.b16 %v281
    %v1291 = vunpack.c.h.b16 %v281
    %v1292 = vunpack.c.l.b16 %v282
    %v1293 = vunpack.c.h.b16 %v282
    %v1294 = vunpack.c.l.b16 %v283
    %v1295 = vunpack.c.h.b16 %v283
    %v1296 = vunpack.c.l.b16 %v284
    %v1297 = vunpack.c.h.b16 %v284
    %v1298 = vunpack.c.l.b16 %v285
    %v1299 = vunpack.c.h.b16 %v285
    %v1300 = vunpack.c.l.b16 %v286
    %v1301 = vunpack.c.h.b16 %v286
    %v1302 = vunpack.c.l.b16 %v287
    %v1303 = vunpack.c.h.b16 %v287
    %v1304 = vunpack.c.l.b16 %v288
    %v1305 = vunpack.c.h.b16 %v288
    %v1306 = vunpack.c.l.b16 %v289
    %v1307 = vunpack.c.h.b16 %v289
    %v1308 = vunpack.c.l.b16 %v290
    %v1309 = vunpack.c.h.b16 %v290
    %v1310 = vunpack.c.l.b16 %v291
    %v1311 = vunpack.c.h.b16 %v291
    %v1312 = vunpack.c.l.b16 %v292
    %v1313 = vunpack.c.h.b16 %v292
    %v1314 = vunpack.c.l.b16 %v293
    %v1315 = vunpack.c.h.b16 %v293
    %v1316 = vunpack.c.l.b16 %v294
    %v1317 = vunpack.c.h.b16 %v294
    %v1318 = vunpack.c.l.b16 %v295
    %v1319 = vunpack.c.h.b16 %v295
    %v1320 = vunpack.c.l.b16 %v296
    %v1321 = vunpack.c.h.b16 %v296
    %v1322 = vunpack.c.l.b16 %v297
    %v1323 = vunpack.c.h.b16 %v297
    %v1324 = vunpack.c.l.b16 %v298
    %v1325 = vunpack.c.h.b16 %v298
    %v1326 = vunpack.c.l.b16 %v299
    %v1327 = vunpack.c.h.b16 %v299
    %v1328 = vunpack.c.l.b16 %v300
    %v1329 = vunpack.c.h.b16 %v300
    %v1330 = vunpack.c.l.b16 %v301
    %v1331 = vunpack.c.h.b16 %v301
    %v1332 = vunpack.c.l.b16 %v302
    %v1333 = vunpack.c.h.b16 %v302
    %v1334 = vunpack.c.l.b16 %v303
    %v1335 = vunpack.c.h.b16 %v303
    %v1336 = vunpack.c.l.b16 %v304
    %v1337 = vunpack.c.h.b16 %v304
    %v1338 = vunpack.c.l.b16 %v305
    %v1339 = vunpack.c.h.b16 %v305
    %v1340 = vunpack.c.l.b16 %v306
    %v1341 = vunpack.c.h.b16 %v306
    %v1342 = vunpack.c.l.b16 %v307
    %v1343 = vunpack.c.h.b16 %v307
    %v1344 = vunpack.c.l.b16 %v308
    %v1345 = vunpack.c.h.b16 %v308
    %v1346 = vunpack.c.l.b16 %v309
    %v1347 = vunpack.c.h.b16 %v309
    %v1348 = vunpack.c.l.b16 %v310
    %v1349 = vunpack.c.h.b16 %v310
    %v1350 = vunpack.c.l.b16 %v311
    %v1351 = vunpack.c.h.b16 %v311
    %v1352 = vunpack.c.l.b16 %v312
    %v1353 = vunpack.c.h.b16 %v312
    %v1354 = vunpack.c.l.b16 %v313
    %v1355 = vunpack.c.h.b16 %v313
    %v1356 = vunpack.c.l.b16 %v314
    %v1357 = vunpack.c.h.b16 %v314
    %v1358 = vunpack.c.l.b16 %v315
    %v1359 = vunpack.c.h.b16 %v315
    %v1360 = vunpack.c.l.b16 %v316
    %v1361 = vunpack.c.h.b16 %v316
    %v1362 = vunpack.c.l.b16 %v317
    %v1363 = vunpack.c.h.b16 %v317
    %v1364 = vunpack.c.l.b16 %v318
    %v1365 = vunpack.c.h.b16 %v318
    %v1366 = vunpack.c.l.b16 %v319
    %v1367 = vunpack.c.h.b16 %v319
    %v1368 = vunpack.c.l.b16 %v320
    %v1369 = vunpack.c.h.b16 %v320
    %v1370 = vunpack.c.l.b16 %v321
    %v1371 = vunpack.c.h.b16 %v321
    %v1372 = vunpack.c.l.b16 %v322
    %v1373 = vunpack.c.h.b16 %v322
    %v1374 = vunpack.c.l.b16 %v323
    %v1375 = vunpack.c.h.b16 %v323
    %v1376 = vunpack.c.l.b16 %v324
    %v1377 = vunpack.c.h.b16 %v324
    %v1378 = vunpack.c.l.b16 %v325
    %v1379 = vunpack.c.h.b16 %v325
    %v1380 = vunpack.c.l.b16 %v326
    %v1381 = vunpack.c.h.b16 %v326
    %v1382 = vunpack.c.l.b16 %v327
    %v1383 = vunpack.c.h.b16 %v327
    %v1384 = vunpack.c.l.b16 %v328
    %v1385 = vunpack.c.h.b16 %v328
    %v1386 = vunpack.c.l.b16 %v329
    %v1387 = vunpack.c.h.b16 %v329
    %v1388 = vunpack.c.l.b16 %v330
    %v1389 = vunpack.c.h.b16 %v330
    %v1390 = vunpack.c.l.b16 %v331
    %v1391 = vunpack.c.h.b16 %v331
    %v1392 = vunpack.c.l.b16 %v332
    %v1393 = vunpack.c.h.b16 %v332
    %v1394 = vunpack.c.l.b16 %v333
    %v1395 = vunpack.c.h.b16 %v333
    %v1396 = vunpack.c.l.b16 %v334
    %v1397 = vunpack.c.h.b16 %v334
    %v1398 = vunpack.c.l.b16 %v335
    %v1399 = vunpack.c.h.b16 %v335
    %v1400 = vunpack.c.l.b16 %v336
    %v1401 = vunpack.c.h.b16 %v336
    %v1402 = vunpack.c.l.b16 %v337
    %v1403 = vunpack.c.h.b16 %v337
    %v1404 = vunpack.c.l.b16 %v338
    %v1405 = vunpack.c.h.b16 %v338
    %v1406 = vunpack.c.l.b16 %v339
    %v1407 = vunpack.c.h.b16 %v339
    %v1408 = vunpack.c.l.b16 %v340
    %v1409 = vunpack.c.h.b16 %v340
    %v1410 = vunpack.c.l.b16 %v341
    %v1411 = vunpack.c.h.b16 %v341
    %v1412 = vunpack.c.l.b16 %v342
    %v1413 = vunpack.c.h.b16 %v342
    %v1414 = vunpack.c.l.b16 %v343
    %v1415 = vunpack.c.h.b16 %v343
    %v1416 = vunpack.c.l.b16 %v344
    %v1417 = vunpack.c.h.b16 %v344
    %v1418 = vunpack.c.l.b16 %v345
    %v1419 = vunpack.c.h.b16 %v345
    %v1420 = vunpack.c.l.b16 %v346
    %v1421 = vunpack.c.h.b16 %v346
    %v1422 = vunpack.c.l.b16 %v347
    %v1423 = vunpack.c.h.b16 %v347
    %v1424 = vunpack.c.l.b16 %v348
    %v1425 = vunpack.c.h.b16 %v348
    %v1426 = vunpack.c.l.b16 %v349
    %v1427 = vunpack.c.h.b16 %v349
    %v1428 = vunpack.c.l.b16 %v350
    %v1429 = vunpack.c.h.b16 %v350
    %v1430 = vunpack.c.l.b16 %v351
    %v1431 = vunpack.c.h.b16 %v351
    %v1432 = vunpack.c.l.b16 %v352
    %v1433 = vunpack.c.h.b16 %v352
    %v1434 = vunpack.c.l.b16 %v353
    %v1435 = vunpack.c.h.b16 %v353
    %v1436 = vunpack.c.l.b16 %v354
    %v1437 = vunpack.c.h.b16 %v354
    %v1438 = vunpack.c.l.b16 %v355
    %v1439 = vunpack.c.h.b16 %v355
    %v1440 = vunpack.c.l.b16 %v356
    %v1441 = vunpack.c.h.b16 %v356
    %v1442 = vunpack.c.l.b16 %v357
    %v1443 = vunpack.c.h.b16 %v357
    %v1444 = vunpack.c.l.b16 %v358
    %v1445 = vunpack.c.h.b16 %v358
    %v1446 = vunpack.c.l.b16 %v359
    %v1447 = vunpack.c.h.b16 %v359
    %v1448 = vunpack.c.l.b16 %v360
    %v1449 = vunpack.c.h.b16 %v360
    %v1450 = vunpack.c.l.b16 %v361
    %v1451 = vunpack.c.h.b16 %v361
    %v1452 = vunpack.c.l.b16 %v362
    %v1453 = vunpack.c.h.b16 %v362
    %v1454 = vunpack.c.l.b16 %v363
    %v1455 = vunpack.c.h.b16 %v363
    %v1456 = vunpack.c.l.b16 %v364
    %v1457 = vunpack.c.h.b16 %v364
    %v1458 = vunpack.c.l.b16 %v365
    %v1459 = vunpack.c.h.b16 %v365
    %v1460 = vunpack.c.l.b16 %v366
    %v1461 = vunpack.c.h.b16 %v366
    %v1462 = vunpack.c.l.b16 %v367
    %v1463 = vunpack.c.h.b16 %v367
    %v1464 = vunpack.c.l.b16 %v368
    %v1465 = vunpack.c.h.b16 %v368
    %v1466 = vunpack.c.l.b16 %v369
    %v1467 = vunpack.c.h.b16 %v369
    %v1468 = vunpack.c.l.b16 %v370
    %v1469 = vunpack.c.h.b16 %v370
    %v1470 = vunpack.c.l.b16 %v371
    %v1471 = vunpack.c.h.b16 %v371
    %v1472 = vunpack.c.l.b16 %v372
    %v1473 = vunpack.c.h.b16 %v372
    %v1474 = vunpack.c.l.b16 %v373
    %v1475 = vunpack.c.h.b16 %v373
    %v1476 = vunpack.c.l.b16 %v374
    %v1477 = vunpack.c.h.b16 %v374
    %v1478 = vunpack.c.l.b16 %v375
    %v1479 = vunpack.c.h.b16 %v375
    %v1480 = vunpack.c.l.b16 %v376
    %v1481 = vunpack.c.h.b16 %v376
    %v1482 = vunpack.c.l.b16 %v377
    %v1483 = vunpack.c.h.b16 %v377
    %v1484 = vunpack.c.l.b16 %v378
    %v1485 = vunpack.c.h.b16 %v378
    %v1486 = vunpack.c.l.b16 %v379
    %v1487 = vunpack.c.h.b16 %v379
    %v1488 = vunpack.c.l.b16 %v380
    %v1489 = vunpack.c.h.b16 %v380
    %v1490 = vunpack.c.l.b16 %v381
    %v1491 = vunpack.c.h.b16 %v381
    %v1492 = vunpack.c.l.b16 %v382
    %v1493 = vunpack.c.h.b16 %v382
    %v1494 = vunpack.c.l.b16 %v383
    %v1495 = vunpack.c.h.b16 %v383
    %v1496 = vunpack.c.l.b16 %v384
    %v1497 = vunpack.c.h.b16 %v384
    %v1498 = vunpack.c.l.b16 %v385
    %v1499 = vunpack.c.h.b16 %v385
    %v1500 = vunpack.c.l.b16 %v386
    %v1501 = vunpack.c.h.b16 %v386
    %v1502 = vunpack.c.l.b16 %v387
    %v1503 = vunpack.c.h.b16 %v387
    %v1504 = vunpack.c.l.b16 %v388
    %v1505 = vunpack.c.h.b16 %v388
    %v1506 = vunpack.c.l.b16 %v389
    %v1507 = vunpack.c.h.b16 %v389
    %v1508 = vunpack.c.l.b16 %v390
    %v1509 = vunpack.c.h.b16 %v390
    %v1510 = vunpack.c.l.b16 %v391
    %v1511 = vunpack.c.h.b16 %v391
    %v1512 = vunpack.c.l.b16 %v392
    %v1513 = vunpack.c.h.b16 %v392
    %v1514 = vunpack.c.l.b16 %v393
    %v1515 = vunpack.c.h.b16 %v393
    %v1516 = vunpack.c.l.b16 %v394
    %v1517 = vunpack.c.h.b16 %v394
    %v1518 = vunpack.c.l.b16 %v395
    %v1519 = vunpack.c.h.b16 %v395
    %v1520 = vunpack.c.l.b16 %v396
    %v1521 = vunpack.c.h.b16 %v396
    %v1522 = vunpack.c.l.b16 %v397
    %v1523 = vunpack.c.h.b16 %v397
    %v1524 = vunpack.c.l.b16 %v398
    %v1525 = vunpack.c.h.b16 %v398
    %v1526 = vunpack.c.l.b16 %v399
    %v1527 = vunpack.c.h.b16 %v399
    %v1528 = vunpack.c.l.b16 %v400
    %v1529 = vunpack.c.h.b16 %v400
    %v1530 = vunpack.c.l.b16 %v401
    %v1531 = vunpack.c.h.b16 %v401
    %v1532 = vunpack.c.l.b16 %v402
    %v1533 = vunpack.c.h.b16 %v402
    %v1534 = vunpack.c.l.b16 %v403
    %v1535 = vunpack.c.h.b16 %v403
    %v1536 = vunpack.c.l.b16 %v404
    %v1537 = vunpack.c.h.b16 %v404
    %v1538 = vunpack.c.l.b16 %v405
    %v1539 = vunpack.c.h.b16 %v405
    %v1540 = vunpack.c.l.b16 %v406
    %v1541 = vunpack.c.h.b16 %v406
    %v1542 = vunpack.c.l.b16 %v407
    %v1543 = vunpack.c.h.b16 %v407
    %v1544 = vunpack.c.l.b16 %v408
    %v1545 = vunpack.c.h.b16 %v408
    %v1546 = vunpack.c.l.b16 %v409
    %v1547 = vunpack.c.h.b16 %v409
    %v1548 = vunpack.c.l.b16 %v410
    %v1549 = vunpack.c.h.b16 %v410
    %v1550 = vunpack.c.l.b16 %v411
    %v1551 = vunpack.c.h.b16 %v411
    %v1552 = vunpack.c.l.b16 %v412
    %v1553 = vunpack.c.h.b16 %v412
    %v1554 = vunpack.c.l.b16 %v413
    %v1555 = vunpack.c.h.b16 %v413
    %v1556 = vunpack.c.l.b16 %v414
    %v1557 = vunpack.c.h.b16 %v414
    %v1558 = vunpack.c.l.b16 %v415
    %v1559 = vunpack.c.h.b16 %v415
    %v1560 = vunpack.c.l.b16 %v416
    %v1561 = vunpack.c.h.b16 %v416
    %v1562 = vunpack.c.l.b16 %v417
    %v1563 = vunpack.c.h.b16 %v417
    %v1564 = vunpack.c.l.b16 %v418
    %v1565 = vunpack.c.h.b16 %v418
    %v1566 = vunpack.c.l.b16 %v419
    %v1567 = vunpack.c.h.b16 %v419
    %v1568 = vunpack.c.l.b16 %v420
    %v1569 = vunpack.c.h.b16 %v420
    %v1570 = vunpack.c.l.b16 %v421
    %v1571 = vunpack.c.h.b16 %v421
    %v1572 = vunpack.c.l.b16 %v422
    %v1573 = vunpack.c.h.b16 %v422
    %v1574 = vunpack.c.l.b16 %v423
    %v1575 = vunpack.c.h.b16 %v423
    %v1576 = vunpack.c.l.b16 %v424
    %v1577 = vunpack.c.h.b16 %v424
    %v1578 = vunpack.c.l.b16 %v425
    %v1579 = vunpack.c.h.b16 %v425
    %v1580 = vunpack.c.l.b16 %v426
    %v1581 = vunpack.c.h.b16 %v426
    %v1582 = vunpack.c.l.b16 %v427
    %v1583 = vunpack.c.h.b16 %v427
    %v1584 = vunpack.c.l.b16 %v428
    %v1585 = vunpack.c.h.b16 %v428
    %v1586 = vunpack.c.l.b16 %v429
    %v1587 = vunpack.c.h.b16 %v429
    %v1588 = vunpack.c.l.b16 %v430
    %v1589 = vunpack.c.h.b16 %v430
    %v1590 = vunpack.c.l.b16 %v431
    %v1591 = vunpack.c.h.b16 %v431
    %v1592 = vunpack.c.l.b16 %v432
    %v1593 = vunpack.c.h.b16 %v432
    %v1594 = vunpack.c.l.b16 %v433
    %v1595 = vunpack.c.h.b16 %v433
    %v1596 = vunpack.c.l.b16 %v434
    %v1597 = vunpack.c.h.b16 %v434
    %v1598 = vunpack.c.l.b16 %v435
    %v1599 = vunpack.c.h.b16 %v435
    %v1600 = vunpack.c.l.b16 %v436
    %v1601 = vunpack.c.h.b16 %v436
    %v1602 = vunpack.c.l.b16 %v437
    %v1603 = vunpack.c.h.b16 %v437
    %v1604 = vunpack.c.l.b16 %v438
    %v1605 = vunpack.c.h.b16 %v438
    %v1606 = vunpack.c.l.b16 %v439
    %v1607 = vunpack.c.h.b16 %v439
    %v1608 = vunpack.c.l.b16 %v440
    %v1609 = vunpack.c.h.b16 %v440
    %v1610 = vunpack.c.l.b16 %v441
    %v1611 = vunpack.c.h.b16 %v441
    %v1612 = vunpack.c.l.b16 %v442
    %v1613 = vunpack.c.h.b16 %v442
    %v1614 = vunpack.c.l.b16 %v443
    %v1615 = vunpack.c.h.b16 %v443
    %v1616 = vunpack.c.l.b16 %v444
    %v1617 = vunpack.c.h.b16 %v444
    %v1618 = vunpack.c.l.b16 %v445
    %v1619 = vunpack.c.h.b16 %v445
    %v1620 = vunpack.c.l.b16 %v446
    %v1621 = vunpack.c.h.b16 %v446
    %v1622 = vunpack.c.l.b16 %v447
    %v1623 = vunpack.c.h.b16 %v447
    %v1624 = vunpack.c.l.b16 %v448
    %v1625 = vunpack.c.h.b16 %v448
    %v1626 = vunpack.c.l.b16 %v449
    %v1627 = vunpack.c.h.b16 %v449
    %v1628 = vunpack.c.l.b16 %v450
    %v1629 = vunpack.c.h.b16 %v450
    %v1630 = vunpack.c.l.b16 %v451
    %v1631 = vunpack.c.h.b16 %v451
    %v1632 = vunpack.c.l.b16 %v452
    %v1633 = vunpack.c.h.b16 %v452
    %v1634 = vunpack.c.l.b16 %v453
    %v1635 = vunpack.c.h.b16 %v453
    %v1636 = vunpack.c.l.b16 %v454
    %v1637 = vunpack.c.h.b16 %v454
    %v1638 = vunpack.c.l.b16 %v455
    %v1639 = vunpack.c.h.b16 %v455
    %v1640 = vunpack.c.l.b16 %v456
    %v1641 = vunpack.c.h.b16 %v456
    %v1642 = vunpack.c.l.b16 %v457
    %v1643 = vunpack.c.h.b16 %v457
    %v1644 = vunpack.c.l.b16 %v458
    %v1645 = vunpack.c.h.b16 %v458
    %v1646 = vunpack.c.l.b16 %v459
    %v1647 = vunpack.c.h.b16 %v459
    %v1648 = vunpack.c.l.b16 %v460
    %v1649 = vunpack.c.h.b16 %v460
    %v1650 = vunpack.c.l.b16 %v461
    %v1651 = vunpack.c.h.b16 %v461
    %v1652 = vunpack.c.l.b16 %v462
    %v1653 = vunpack.c.h.b16 %v462
    %v1654 = vunpack.c.l.b16 %v463
    %v1655 = vunpack.c.h.b16 %v463
    %v1656 = vunpack.c.l.b16 %v464
    %v1657 = vunpack.c.h.b16 %v464
    %v1658 = vunpack.c.l.b16 %v465
    %v1659 = vunpack.c.h.b16 %v465
    %v1660 = vunpack.c.l.b16 %v466
    %v1661 = vunpack.c.h.b16 %v466
    %v1662 = vunpack.c.l.b16 %v467
    %v1663 = vunpack.c.h.b16 %v467
    %v1664 = vunpack.c.l.b16 %v468
    %v1665 = vunpack.c.h.b16 %v468
    %v1666 = vunpack.c.l.b16 %v469
    %v1667 = vunpack.c.h.b16 %v469
    %v1668 = vunpack.c.l.b16 %v470
    %v1669 = vunpack.c.h.b16 %v470
    %v1670 = vunpack.c.l.b16 %v471
    %v1671 = vunpack.c.h.b16 %v471
    %v1672 = vunpack.c.l.b16 %v472
    %v1673 = vunpack.c.h.b16 %v472
    %v1674 = vunpack.c.l.b16 %v473
    %v1675 = vunpack.c.h.b16 %v473
    %v1676 = vunpack.c.l.b16 %v474
    %v1677 = vunpack.c.h.b16 %v474
    %v1678 = vunpack.c.l.b16 %v475
    %v1679 = vunpack.c.h.b16 %v475
    %v1680 = vunpack.c.l.b16 %v476
    %v1681 = vunpack.c.h.b16 %v476
    %v1682 = vunpack.c.l.b16 %v477
    %v1683 = vunpack.c.h.b16 %v477
    %v1684 = vunpack.c.l.b16 %v478
    %v1685 = vunpack.c.h.b16 %v478
    %v1686 = vunpack.c.l.b16 %v479
    %v1687 = vunpack.c.h.b16 %v479
    %v1688 = vunpack.c.l.b16 %v480
    %v1689 = vunpack.c.h.b16 %v480
    %v1690 = vunpack.c.l.b16 %v481
    %v1691 = vunpack.c.h.b16 %v481
    %v1692 = vunpack.c.l.b16 %v482
    %v1693 = vunpack.c.h.b16 %v482
    %v1694 = vunpack.c.l.b16 %v483
    %v1695 = vunpack.c.h.b16 %v483
    %v1696 = vunpack.c.l.b16 %v484
    %v1697 = vunpack.c.h.b16 %v484
    %v1698 = vunpack.c.l.b16 %v485
    %v1699 = vunpack.c.h.b16 %v485
    %v1700 = vunpack.c.l.b16 %v486
    %v1701 = vunpack.c.h.b16 %v486
    %v1702 = vunpack.c.l.b16 %v487
    %v1703 = vunpack.c.h.b16 %v487
    %v1704 = vunpack.c.l.b16 %v488
    %v1705 = vunpack.c.h.b16 %v488
    %v1706 = vunpack.c.l.b16 %v489
    %v1707 = vunpack.c.h.b16 %v489
    %v1708 = vpack.c.b16 %v932, %v924
    %v1709 = vpack.c.b16 %v933, %v925
    %v1710 = vpack.c.b16 %v934, %v926
    %v1711 = vpack.c.b16 %v935, %v927
    %v1712 = vpack.c.b16 %v936, %v928
    %v1713 = vpack.c.b16 %v937, %v929
    %v1714 = vpack.c.b16 %v938, %v930
    %v1715 = vpack.c.b16 %v939, %v931
    %v1716 = vpack.c.b16 %v948, %v940
    %v1717 = vpack.c.b16 %v949, %v941
    %v1718 = vpack.c.b16 %v950, %v942
    %v1719 = vpack.c.b16 %v951, %v943
    %v1720 = vpack.c.b16 %v952, %v944
    %v1721 = vpack.c.b16 %v953, %v945
    %v1722 = vpack.c.b16 %v954, %v946
    %v1723 = vpack.c.b16 %v955, %v947
    %v1724 = vpack.c.b16 %v964, %v956
    %v1725 = vpack.c.b16 %v965, %v957
    %v1726 = vpack.c.b16 %v966, %v958
    %v1727 = vpack.c.b16 %v967, %v959
    %v1728 = vpack.c.b16 %v968, %v960
    %v1729 = vpack.c.b16 %v969, %v961
    %v1730 = vpack.c.b16 %v970, %v962
    %v1731 = vpack.c.b16 %v971, %v963
    %v1732 = vpack.c.b16 %v980, %v972
    %v1733 = vpack.c.b16 %v981, %v973
    %v1734 = vpack.c.b16 %v982, %v974
    %v1735 = vpack.c.b16 %v983, %v975
    %v1736 = vpack.c.b16 %v984, %v976
    %v1737 = vpack.c.b16 %v985, %v977
    %v1738 = vpack.c.b16 %v986, %v978
    %v1739 = vpack.c.b16 %v987, %v979
    %v1740 = vpack.c.b16 %v996, %v988
    %v1741 = vpack.c.b16 %v997, %v989
    %v1742 = vpack.c.b16 %v998, %v990
    %v1743 = vpack.c.b16 %v999, %v991
    %v1744 = vpack.c.b16 %v1000, %v992
    %v1745 = vpack.c.b16 %v1001, %v993
    %v1746 = vpack.c.b16 %v1002, %v994
    %v1747 = vpack.c.b16 %v1003, %v995
    %v1748 = vpack.c.b16 %v1012, %v1004
    %v1749 = vpack.c.b16 %v1013, %v1005
    %v1750 = vpack.c.b16 %v1014, %v1006
    %v1751 = vpack.c.b16 %v1015, %v1007
    %v1752 = vpack.c.b16 %v1016, %v1008
    %v1753 = vpack.c.b16 %v1017, %v1009
    %v1754 = vpack.c.b16 %v1018, %v1010
    %v1755 = vpack.c.b16 %v1019, %v1011
    %v1756 = vpack.c.b16 %v1028, %v1020
    %v1757 = vpack.c.b16 %v1029, %v1021
    %v1758 = vpack.c.b16 %v1030, %v1022
    %v1759 = vpack.c.b16 %v1031, %v1023
    %v1760 = vpack.c.b16 %v1032, %v1024
    %v1761 = vpack.c.b16 %v1033, %v1025
    %v1762 = vpack.c.b16 %v1034, %v1026
    %v1763 = vpack.c.b16 %v1035, %v1027
    %v1764 = vpack.c.b16 %v1044, %v1036
    %v1765 = vpack.c.b16 %v1045, %v1037
    %v1766 = vpack.c.b16 %v1046, %v1038
    %v1767 = vpack.c.b16 %v1047, %v1039
    %v1768 = vpack.c.b16 %v1048, %v1040
    %v1769 = vpack.c.b16 %v1049, %v1041
    %v1770 = vpack.c.b16 %v1050, %v1042
    %v1771 = vpack.c.b16 %v1051, %v1043
    %v1772 = vpack.c.b16 %v1060, %v1052
    %v1773 = vpack.c.b16 %v1061, %v1053
    %v1774 = vpack.c.b16 %v1062, %v1054
    %v1775 = vpack.c.b16 %v1063, %v1055
    %v1776 = vpack.c.b16 %v1064, %v1056
    %v1777 = vpack.c.b16 %v1065, %v1057
    %v1778 = vpack.c.b16 %v1066, %v1058
    %v1779 = vpack.c.b16 %v1067, %v1059
    %v1780 = vpack.c.b16 %v1076, %v1068
    %v1781 = vpack.c.b16 %v1077, %v1069
    %v1782 = vpack.c.b16 %v1078, %v1070
    %v1783 = vpack.c.b16 %v1079, %v1071
    %v1784 = vpack.c.b16 %v1080, %v1072
    %v1785 = vpack.c.b16 %v1081, %v1073
    %v1786 = vpack.c.b16 %v1082, %v1074
    %v1787 = vpack.c.b16 %v1083, %v1075
    %v1788 = vpack.c.b16 %v1092, %v1084
    %v1789 = vpack.c.b16 %v1093, %v1085
    %v1790 = vpack.c.b16 %v1094, %v1086
    %v1791 = vpack.c.b16 %v1095, %v1087
    %v1792 = vpack.c.b16 %v1096, %v1088
    %v1793 = vpack.c.b16 %v1097, %v1089
    %v1794 = vpack.c.b16 %v1098, %v1090
    %v1795 = vpack.c.b16 %v1099, %v1091
    %v1796 = vpack.c.b16 %v1108, %v1100
    %v1797 = vpack.c.b16 %v1109, %v1101
    %v1798 = vpack.c.b16 %v1110, %v1102
    %v1799 = vpack.c.b16 %v1111, %v1103
    %v1800 = vpack.c.b16 %v1112, %v1104
    %v1801 = vpack.c.b16 %v1113, %v1105
    %v1802 = vpack.c.b16 %v1114, %v1106
    %v1803 = vpack.c.b16 %v1115, %v1107
    %v1804 = vpack.c.b16 %v1124, %v1116
    %v1805 = vpack.c.b16 %v1125, %v1117
    %v1806 = vpack.c.b16 %v1126, %v1118
    %v1807 = vpack.c.b16 %v1127, %v1119
    %v1808 = vpack.c.b16 %v1128, %v1120
    %v1809 = vpack.c.b16 %v1129, %v1121
    %v1810 = vpack.c.b16 %v1130, %v1122
    %v1811 = vpack.c.b16 %v1131, %v1123
    %v1812 = vpack.c.b16 %v1140, %v1132
    %v1813 = vpack.c.b16 %v1141, %v1133
    %v1814 = vpack.c.b16 %v1142, %v1134
    %v1815 = vpack.c.b16 %v1143, %v1135
    %v1816 = vpack.c.b16 %v1144, %v1136
    %v1817 = vpack.c.b16 %v1145, %v1137
    %v1818 = vpack.c.b16 %v1146, %v1138
    %v1819 = vpack.c.b16 %v1147, %v1139
    %v1820 = vpack.c.b16 %v1156, %v1148
    %v1821 = vpack.c.b16 %v1157, %v1149
    %v1822 = vpack.c.b16 %v1158, %v1150
    %v1823 = vpack.c.b16 %v1159, %v1151
    %v1824 = vpack.c.b16 %v1160, %v1152
    %v1825 = vpack.c.b16 %v1161, %v1153
    %v1826 = vpack.c.b16 %v1162, %v1154
    %v1827 = vpack.c.b16 %v1163, %v1155
    %v1828 = vpack.c.b16 %v1172, %v1164
    %v1829 = vpack.c.b16 %v1173, %v1165
    %v1830 = vpack.c.b16 %v1174, %v1166
    %v1831 = vpack.c.b16 %v1175, %v1167
    %v1832 = vpack.c.b16 %v1176, %v1168
    %v1833 = vpack.c.b16 %v1177, %v1169
    %v1834 = vpack.c.b16 %v1178, %v1170
    %v1835 = vpack.c.b16 %v1179, %v1171
    %v1836 = vpack.c.b16 %v1188, %v1180
    %v1837 = vpack.c.b16 %v1189, %v1181
    %v1838 = vpack.c.b16 %v1190, %v1182
    %v1839 = vpack.c.b16 %v1191, %v1183
    %v1840 = vpack.c.b16 %v1192, %v1184
    %v1841 = vpack.c.b16 %v1193, %v1185
    %v1842 = vpack.c.b16 %v1194, %v1186
    %v1843 = vpack.c.b16 %v1195, %v1187
    %v1844 = vpack.c.b16 %v1204, %v1196
    %v1845 = vpack.c.b16 %v1205, %v1197
    %v1846 = vpack.c.b16 %v1206, %v1198
    %v1847 = vpack.c.b16 %v1207, %v1199
    %v1848 = vpack.c.b16 %v1208, %v1200
    %v1849 = vpack.c.b16 %v1209, %v1201
    %v1850 = vpack.c.b16 %v1210, %v1202
    %v1851 = vpack.c.b16 %v1211, %v1203
    %v1852 = vpack.c.b16 %v1220, %v1212
    %v1853 = vpack.c.b16 %v1221, %v1213
    %v1854 = vpack.c.b16 %v1222, %v1214
    %v1855 = vpack.c.b16 %v1223, %v1215
    %v1856 = vpack.c.b16 %v1224, %v1216
    %v1857 = vpack.c.b16 %v1225, %v1217
    %v1858 = vpack.c.b16 %v1226, %v1218
    %v1859 = vpack.c.b16 %v1227, %v1219
    %v1860 = vpack.c.b16 %v1236, %v1228
    %v1861 = vpack.c.b16 %v1237, %v1229
    %v1862 = vpack.c.b16 %v1238, %v1230
    %v1863 = vpack.c.b16 %v1239, %v1231
    %v1864 = vpack.c.b16 %v1240, %v1232
    %v1865 = vpack.c.b16 %v1241, %v1233
    %v1866 = vpack.c.b16 %v1242, %v1234
    %v1867 = vpack.c.b16 %v1243, %v1235
    %v1868 = vpack.c.b16 %v1252, %v1244
    %v1869 = vpack.c.b16 %v1253, %v1245
    %v1870 = vpack.c.b16 %v1254, %v1246
    %v1871 = vpack.c.b16 %v1255, %v1247
    %v1872 = vpack.c.b16 %v1256, %v1248
    %v1873 = vpack.c.b16 %v1257, %v1249
    %v1874 = vpack.c.b16 %v1258, %v1250
    %v1875 = vpack.c.b16 %v1259, %v1251
    %v1876 = vpack.c.b16 %v1268, %v1260
    %v1877 = vpack.c.b16 %v1269, %v1261
    %v1878 = vpack.c.b16 %v1270, %v1262
    %v1879 = vpack.c.b16 %v1271, %v1263
    %v1880 = vpack.c.b16 %v1272, %v1264
    %v1881 = vpack.c.b16 %v1273, %v1265
    %v1882 = vpack.c.b16 %v1274, %v1266
    %v1883 = vpack.c.b16 %v1275, %v1267
    %v1884 = vpack.c.b16 %v1284, %v1276
    %v1885 = vpack.c.b16 %v1285, %v1277
    %v1886 = vpack.c.b16 %v1286, %v1278
    %v1887 = vpack.c.b16 %v1287, %v1279
    %v1888 = vpack.c.b16 %v1288, %v1280
    %v1889 = vpack.c.b16 %v1289, %v1281
    %v1890 = vpack.c.b16 %v1290, %v1282
    %v1891 = vpack.c.b16 %v1291, %v1283
    %v1892 = vpack.c.b16 %v1300, %v1292
    %v1893 = vpack.c.b16 %v1301, %v1293
    %v1894 = vpack.c.b16 %v1302, %v1294
    %v1895 = vpack.c.b16 %v1303, %v1295
    %v1896 = vpack.c.b16 %v1304, %v1296
    %v1897 = vpack.c.b16 %v1305, %v1297
    %v1898 = vpack.c.b16 %v1306, %v1298
    %v1899 = vpack.c.b16 %v1307, %v1299
    %v1900 = vpack.c.b16 %v1316, %v1308
    %v1901 = vpack.c.b16 %v1317, %v1309
    %v1902 = vpack.c.b16 %v1318, %v1310
    %v1903 = vpack.c.b16 %v1319, %v1311
    %v1904 = vpack.c.b16 %v1320, %v1312
    %v1905 = vpack.c.b16 %v1321, %v1313
    %v1906 = vpack.c.b16 %v1322, %v1314
    %v1907 = vpack.c.b16 %v1323, %v1315
    %v1908 = vpack.c.b16 %v1332, %v1324
    %v1909 = vpack.c.b16 %v1333, %v1325
    %v1910 = vpack.c.b16 %v1334, %v1326
    %v1911 = vpack.c.b16 %v1335, %v1327
    %v1912 = vpack.c.b16 %v1336, %v1328
    %v1913 = vpack.c.b16 %v1337, %v1329
    %v1914 = vpack.c.b16 %v1338, %v1330
    %v1915 = vpack.c.b16 %v1339, %v1331
    %v1916 = vpack.c.b16 %v1348, %v1340
    %v1917 = vpack.c.b16 %v1349, %v1341
    %v1918 = vpack.c.b16 %v1350, %v1342
    %v1919 = vpack.c.b16 %v1351, %v1343
    %v1920 = vpack.c.b16 %v1352, %v1344
    %v1921 = vpack.c.b16 %v1353, %v1345
    %v1922 = vpack.c.b16 %v1354, %v1346
    %v1923 = vpack.c.b16 %v1355, %v1347
    %v1924 = vpack.c.b16 %v1364, %v1356
    %v1925 = vpack.c.b16 %v1365, %v1357
    %v1926 = vpack.c.b16 %v1366, %v1358
    %v1927 = vpack.c.b16 %v1367, %v1359
    %v1928 = vpack.c.b16 %v1368, %v1360
    %v1929 = vpack.c.b16 %v1369, %v1361
    %v1930 = vpack.c.b16 %v1370, %v1362
    %v1931 = vpack.c.b16 %v1371, %v1363
    %v1932 = vpack.c.b16 %v1380, %v1372
    %v1933 = vpack.c.b16 %v1381, %v1373
    %v1934 = vpack.c.b16 %v1382, %v1374
    %v1935 = vpack.c.b16 %v1383, %v1375
    %v1936 = vpack.c.b16 %v1384, %v1376
    %v1937 = vpack.c.b16 %v1385, %v1377
    %v1938 = vpack.c.b16 %v1386, %v1378
    %v1939 = vpack.c.b16 %v1387, %v1379
    %v1940 = vpack.c.b16 %v1396, %v1388
    %v1941 = vpack.c.b16 %v1397, %v1389
    %v1942 = vpack.c.b16 %v1398, %v1390
    %v1943 = vpack.c.b16 %v1399, %v1391
    %v1944 = vpack.c.b16 %v1400, %v1392
    %v1945 = vpack.c.b16 %v1401, %v1393
    %v1946 = vpack.c.b16 %v1402, %v1394
    %v1947 = vpack.c.b16 %v1403, %v1395
    %v1948 = vpack.c.b16 %v1412, %v1404
    %v1949 = vpack.c.b16 %v1413, %v1405
    %v1950 = vpack.c.b16 %v1414, %v1406
    %v1951 = vpack.c.b16 %v1415, %v1407
    %v1952 = vpack.c.b16 %v1416, %v1408
    %v1953 = vpack.c.b16 %v1417, %v1409
    %v1954 = vpack.c.b16 %v1418, %v1410
    %v1955 = vpack.c.b16 %v1419, %v1411
    %v1956 = vpack.c.b16 %v1428, %v1420
    %v1957 = vpack.c.b16 %v1429, %v1421
    %v1958 = vpack.c.b16 %v1430, %v1422
    %v1959 = vpack.c.b16 %v1431, %v1423
    %v1960 = vpack.c.b16 %v1432, %v1424
    %v1961 = vpack.c.b16 %v1433, %v1425
    %v1962 = vpack.c.b16 %v1434, %v1426
    %v1963 = vpack.c.b16 %v1435, %v1427
    %v1964 = vpack.c.b16 %v1444, %v1436
    %v1965 = vpack.c.b16 %v1445, %v1437
    %v1966 = vpack.c.b16 %v1446, %v1438
    %v1967 = vpack.c.b16 %v1447, %v1439
    %v1968 = vpack.c.b16 %v1448, %v1440
    %v1969 = vpack.c.b16 %v1449, %v1441
    %v1970 = vpack.c.b16 %v1450, %v1442
    %v1971 = vpack.c.b16 %v1451, %v1443
    %v1972 = vpack.c.b16 %v1460, %v1452
    %v1973 = vpack.c.b16 %v1461, %v1453
    %v1974 = vpack.c.b16 %v1462, %v1454
    %v1975 = vpack.c.b16 %v1463, %v1455
    %v1976 = vpack.c.b16 %v1464, %v1456
    %v1977 = vpack.c.b16 %v1465, %v1457
    %v1978 = vpack.c.b16 %v1466, %v1458
    %v1979 = vpack.c.b16 %v1467, %v1459
    %v1980 = vpack.c.b16 %v1476, %v1468
    %v1981 = vpack.c.b16 %v1477, %v1469
    %v1982 = vpack.c.b16 %v1478, %v1470
    %v1983 = vpack.c.b16 %v1479, %v1471
    %v1984 = vpack.c.b16 %v1480, %v1472
    %v1985 = vpack.c.b16 %v1481, %v1473
    %v1986 = vpack.c.b16 %v1482, %v1474
    %v1987 = vpack.c.b16 %v1483, %v1475
    %v1988 = vpack.c.b16 %v1492, %v1484
    %v1989 = vpack.c.b16 %v1493, %v1485
    %v1990 = vpack.c.b16 %v1494, %v1486
    %v1991 = vpack.c.b16 %v1495, %v1487
    %v1992 = vpack.c.b16 %v1496, %v1488
    %v1993 = vpack.c.b16 %v1497, %v1489
    %v1994 = vpack.c.b16 %v1498, %v1490
    %v1995 = vpack.c.b16 %v1499, %v1491
    %v1996 = vpack.c.b16 %v1508, %v1500
    %v1997 = vpack.c.b16 %v1509, %v1501
    %v1998 = vpack.c.b16 %v1510, %v1502
    %v1999 = vpack.c.b16 %v1511, %v1503
    %v2000 = vpack.c.b16 %v1512, %v1504
    %v2001 = vpack.c.b16 %v1513, %v1505
    %v2002 = vpack.c.b16 %v1514, %v1506
    %v2003 = vpack.c.b16 %v1515, %v1507
    %v2004 = vpack.c.b16 %v1524, %v1516
    %v2005 = vpack.c.b16 %v1525, %v1517
    %v2006 = vpack.c.b16 %v1526, %v1518
    %v2007 = vpack.c.b16 %v1527, %v1519
    %v2008 = vpack.c.b16 %v1528, %v1520
    %v2009 = vpack.c.b16 %v1529, %v1521
    %v2010 = vpack.c.b16 %v1530, %v1522
    %v2011 = vpack.c.b16 %v1531, %v1523
    %v2012 = vpack.c.b16 %v1540, %v1532
    %v2013 = vpack.c.b16 %v1541, %v1533
    %v2014 = vpack.c.b16 %v1542, %v1534
    %v2015 = vpack.c.b16 %v1543, %v1535
    %v2016 = vpack.c.b16 %v1544, %v1536
    %v2017 = vpack.c.b16 %v1545, %v1537
    %v2018 = vpack.c.b16 %v1546, %v1538
    %v2019 = vpack.c.b16 %v1547, %v1539
    %v2020 = vpack.c.b16 %v1556, %v1548
    %v2021 = vpack.c.b16 %v1557, %v1549
    %v2022 = vpack.c.b16 %v1558, %v1550
    %v2023 = vpack.c.b16 %v1559, %v1551
    %v2024 = vpack.c.b16 %v1560, %v1552
    %v2025 = vpack.c.b16 %v1561, %v1553
    %v2026 = vpack.c.b16 %v1562, %v1554
    %v2027 = vpack.c.b16 %v1563, %v1555
    %v2028 = vpack.c.b16 %v1572, %v1564
    %v2029 = vpack.c.b16 %v1573, %v1565
    %v2030 = vpack.c.b16 %v1574, %v1566
    %v2031 = vpack.c.b16 %v1575, %v1567
    %v2032 = vpack.c.b16 %v1576, %v1568
    %v2033 = vpack.c.b16 %v1577, %v1569
    %v2034 = vpack.c.b16 %v1578, %v1570
    %v2035 = vpack.c.b16 %v1579, %v1571
    %v2036 = vpack.c.b16 %v1588, %v1580
    %v2037 = vpack.c.b16 %v1589, %v1581
    %v2038 = vpack.c.b16 %v1590, %v1582
    %v2039 = vpack.c.b16 %v1591, %v1583
    %v2040 = vpack.c.b16 %v1592, %v1584
    %v2041 = vpack.c.b16 %v1593, %v1585
    %v2042 = vpack.c.b16 %v1594, %v1586
    %v2043 = vpack.c.b16 %v1595, %v1587
    %v2044 = vpack.c.b16 %v1604, %v1596
    %v2045 = vpack.c.b16 %v1605, %v1597
    %v2046 = vpack.c.b16 %v1606, %v1598
    %v2047 = vpack.c.b16 %v1607, %v1599
    %v2048 = vpack.c.b16 %v1608, %v1600
    %v2049 = vpack.c.b16 %v1609, %v1601
    %v2050 = vpack.c.b16 %v1610, %v1602
    %v2051 = vpack.c.b16 %v1611, %v1603
    %v2052 = vpack.c.b16 %v1620, %v1612
    %v2053 = vpack.c.b16 %v1621, %v1613
    %v2054 = vpack.c.b16 %v1622, %v1614
    %v2055 = vpack.c.b16 %v1623, %v1615
    %v2056 = vpack.c.b16 %v1624, %v1616
    %v2057 = vpack.c.b16 %v1625, %v1617
    %v2058 = vpack.c.b16 %v1626, %v1618
    %v2059 = vpack.c.b16 %v1627, %v1619
    %v2060 = vpack.c.b16 %v1636, %v1628
    %v2061 = vpack.c.b16 %v1637, %v1629
    %v2062 = vpack.c.b16 %v1638, %v1630
    %v2063 = vpack.c.b16 %v1639, %v1631
    %v2064 = vpack.c.b16 %v1640, %v1632
    %v2065 = vpack.c.b16 %v1641, %v1633
    %v2066 = vpack.c.b16 %v1642, %v1634
    %v2067 = vpack.c.b16 %v1643, %v1635
    %v2068 = vpack.c.b16 %v1652, %v1644
    %v2069 = vpack.c.b16 %v1653, %v1645
    %v2070 = vpack.c.b16 %v1654, %v1646
    %v2071 = vpack.c.b16 %v1655, %v1647
    %v2072 = vpack.c.b16 %v1656, %v1648
    %v2073 = vpack.c.b16 %v1657, %v1649
    %v2074 = vpack.c.b16 %v1658, %v1650
    %v2075 = vpack.c.b16 %v1659, %v1651
    %v2076 = vpack.c.b16 %v1668, %v1660
    %v2077 = vpack.c.b16 %v1669, %v1661
    %v2078 = vpack.c.b16 %v1670, %v1662
    %v2079 = vpack.c.b16 %v1671, %v1663
    %v2080 = vpack.c.b16 %v1672, %v1664
    %v2081 = vpack.c.b16 %v1673, %v1665
    %v2082 = vpack.c.b16 %v1674, %v1666
    %v2083 = vpack.c.b16 %v1675, %v1667
    %v2084 = vpack.c.b16 %v1684, %v1676
    %v2085 = vpack.c.b16 %v1685, %v1677
    %v2086 = vpack.c.b16 %v1686, %v1678
    %v2087 = vpack.c.b16 %v1687, %v1679
    %v2088 = vpack.c.b16 %v1688, %v1680
    %v2089 = vpack.c.b16 %v1689, %v1681
    %v2090 = vpack.c.b16 %v1690, %v1682
    %v2091 = vpack.c.b16 %v1691, %v1683
    %v2092 = vpack.c.b16 %v1700, %v1692
    %v2093 = vpack.c.b16 %v1701, %v1693
    %v2094 = vpack.c.b16 %v1702, %v1694
    %v2095 = vpack.c.b16 %v1703, %v1695
    %v2096 = vpack.c.b16 %v1704, %v1696
    %v2097 = vpack.c.b16 %v1705, %v1697
    %v2098 = vpack.c.b16 %v1706, %v1698
    %v2099 = vpack.c.b16 %v1707, %v1699
    %vm2492 = vcmask 130048
    %v2494 = vsel %vm2492, %v97, 0
    %2496 = vmatprep.subr.bf16.mxu0 %v1765
    %2497 = vmatpush1.bf16.msra.mxu0 %v1764
    %2498 = vmatprep.subr.bf16.mxu0 %v1757
    %2499 = vmatpush1.bf16.msra.mxu0 %v1756
    %2500 = vmatprep.subr.bf16.mxu0 %v1749
    %2501 = vmatpush1.bf16.msra.mxu0 %v1748
    %2502 = vmatprep.subr.bf16.mxu0 %v1741
    %2503 = vmatpush1.bf16.msra.mxu0 %v1740
    %2504 = vmatprep.subr.bf16.mxu0 %v1733
    %2505 = vmatpush1.bf16.msra.mxu0 %v1732
    %2506 = vmatprep.subr.bf16.mxu0 %v1725
    %2507 = vmatpush1.bf16.msra.mxu0 %v1724
    %2508 = vmatprep.subr.bf16.mxu0 %v1717
    %2509 = vmatpush1.bf16.msra.mxu0 %v1716
    %2510 = vmatprep.subr.bf16.mxu0 %v1709
    %2511 = vmatpush1.bf16.msra.mxu0 %v1708
    %2512 = vmatprep.subr.bf16.mxu0 %v1829
    %2513 = vmatpush2.bf16.msra.mxu0 %v1828
    %2514 = vmatprep.subr.bf16.mxu0 %v1821
    %2515 = vmatpush2.bf16.msra.mxu0 %v1820
    %2516 = vmatprep.subr.bf16.mxu0 %v1813
    %2517 = vmatpush2.bf16.msra.mxu0 %v1812
    %2518 = vmatprep.subr.bf16.mxu0 %v1805
    %2519 = vmatpush2.bf16.msra.mxu0 %v1804
    %2520 = vmatprep.subr.bf16.mxu0 %v1797
    %2521 = vmatpush2.bf16.msra.mxu0 %v1796
    %2522 = vmatprep.subr.bf16.mxu0 %v1789
    %2523 = vmatpush2.bf16.msra.mxu0 %v1788
    %2524 = vmatprep.subr.bf16.mxu0 %v1781
    %2525 = vmatpush2.bf16.msra.mxu0 %v1780
    %2526 = vmatprep.subr.bf16.mxu0 %v1773
    %2527 = vmatpush2.bf16.msra.mxu0 %v1772
    %2528 = vmatprep.mubr.bf16.mxu0 %v92
    %2529 = vmatmul.mubr.bf16.gmra.mxu0 %v91
    %v2530 = vpop.f32.mrf.mxu0
    %v2531 = vadd.f32 %v495, %v2530
    %v2532 = vpop.f32.mrf.mxu0
    %v2533 = vadd.f32 %v499, %v2532
    %v2534 = vpop.f32.mrf.mxu0
    %v2535 = vpop.f32.mrf.mxu0
    %2536 = vdwg.mxu0
    %2537 = vmatprep.subr.bf16.mxu0 %v1893
    %2538 = vmatpush1.bf16.msra.mxu0 %v1892
    %2539 = vmatprep.subr.bf16.mxu0 %v1885
    %2540 = vmatpush1.bf16.msra.mxu0 %v1884
    %2541 = vmatprep.subr.bf16.mxu0 %v1877
    %2542 = vmatpush1.bf16.msra.mxu0 %v1876
    %2543 = vmatprep.subr.bf16.mxu0 %v1869
    %2544 = vmatpush1.bf16.msra.mxu0 %v1868
    %2545 = vmatprep.subr.bf16.mxu0 %v1861
    %2546 = vmatpush1.bf16.msra.mxu0 %v1860
    %2547 = vmatprep.subr.bf16.mxu0 %v1853
    %2548 = vmatpush1.bf16.msra.mxu0 %v1852
    %2549 = vmatprep.subr.bf16.mxu0 %v1845
    %2550 = vmatpush1.bf16.msra.mxu0 %v1844
    %2551 = vmatprep.subr.bf16.mxu0 %v1837
    %2552 = vmatpush1.bf16.msra.mxu0 %v1836
    %2553 = vmatprep.subr.bf16.mxu0 %v1957
    %2554 = vmatpush2.bf16.msra.mxu0 %v1956
    %2555 = vmatprep.subr.bf16.mxu0 %v1949
    %2556 = vmatpush2.bf16.msra.mxu0 %v1948
    %2557 = vmatprep.subr.bf16.mxu0 %v1941
    %2558 = vmatpush2.bf16.msra.mxu0 %v1940
    %2559 = vmatprep.subr.bf16.mxu0 %v1933
    %2560 = vmatpush2.bf16.msra.mxu0 %v1932
    %2561 = vmatprep.subr.bf16.mxu0 %v1925
    %2562 = vmatpush2.bf16.msra.mxu0 %v1924
    %2563 = vmatprep.subr.bf16.mxu0 %v1917
    %2564 = vmatpush2.bf16.msra.mxu0 %v1916
    %2565 = vmatprep.subr.bf16.mxu0 %v1909
    %2566 = vmatpush2.bf16.msra.mxu0 %v1908
    %2567 = vmatprep.subr.bf16.mxu0 %v1901
    %2568 = vmatpush2.bf16.msra.mxu0 %v1900
    %2569 = vmatprep.mubr.bf16.mxu0 %v94
    %2570 = vmatmul.mubr.bf16.gmra.mxu0 %v93
    %v2571 = vpop.f32.mrf.mxu0
    %v2572 = vadd.f32 %v2531, %v2571
    %v2573 = vpop.f32.mrf.mxu0
    %v2574 = vadd.f32 %v2533, %v2573
    %v2575 = vpop.f32.mrf.mxu0
    %v2576 = vpop.f32.mrf.mxu0
    %2577 = vdwg.mxu0
    %2578 = vmatprep.subr.bf16.mxu0 %v2021
    %2579 = vmatpush1.bf16.msra.mxu0 %v2020
    %2580 = vmatprep.subr.bf16.mxu0 %v2013
    %2581 = vmatpush1.bf16.msra.mxu0 %v2012
    %2582 = vmatprep.subr.bf16.mxu0 %v2005
    %2583 = vmatpush1.bf16.msra.mxu0 %v2004
    %2584 = vmatprep.subr.bf16.mxu0 %v1997
    %2585 = vmatpush1.bf16.msra.mxu0 %v1996
    %2586 = vmatprep.subr.bf16.mxu0 %v1989
    %2587 = vmatpush1.bf16.msra.mxu0 %v1988
    %2588 = vmatprep.subr.bf16.mxu0 %v1981
    %2589 = vmatpush1.bf16.msra.mxu0 %v1980
    %2590 = vmatprep.subr.bf16.mxu0 %v1973
    %2591 = vmatpush1.bf16.msra.mxu0 %v1972
    %2592 = vmatprep.subr.bf16.mxu0 %v1965
    %2593 = vmatpush1.bf16.msra.mxu0 %v1964
    %2594 = vmatprep.subr.bf16.mxu0 %v2085
    %2595 = vmatpush2.bf16.msra.mxu0 %v2084
    %2596 = vmatprep.subr.bf16.mxu0 %v2077
    %2597 = vmatpush2.bf16.msra.mxu0 %v2076
    %2598 = vmatprep.subr.bf16.mxu0 %v2069
    %2599 = vmatpush2.bf16.msra.mxu0 %v2068
    %2600 = vmatprep.subr.bf16.mxu0 %v2061
    %2601 = vmatpush2.bf16.msra.mxu0 %v2060
    %2602 = vmatprep.subr.bf16.mxu0 %v2053
    %2603 = vmatpush2.bf16.msra.mxu0 %v2052
    %2604 = vmatprep.subr.bf16.mxu0 %v2045
    %2605 = vmatpush2.bf16.msra.mxu0 %v2044
    %2606 = vmatprep.subr.bf16.mxu0 %v2037
    %2607 = vmatpush2.bf16.msra.mxu0 %v2036
    %2608 = vmatprep.subr.bf16.mxu0 %v2029
    %2609 = vmatpush2.bf16.msra.mxu0 %v2028
    %2610 = vmatprep.mubr.bf16.mxu0 %v96
    %2611 = vmatmul.mubr.bf16.gmra.mxu0 %v95
    %v2612 = vpop.f32.mrf.mxu0
    %v2613 = vadd.f32 %v2572, %v2612
    %v2614 = vpop.f32.mrf.mxu0
    %v2615 = vadd.f32 %v2574, %v2614
    %v2616 = vpop.f32.mrf.mxu0
    %v2617 = vpop.f32.mrf.mxu0
    %2618 = vdwg.mxu0
    %2619 = vmatprep.subr.bf16.mxu0 0
    %2620 = vmatpush1.bf16.msra.mxu0 0
    %2621 = vmatprep.subr.bf16.mxu0 0
    %2622 = vmatpush1.bf16.msra.mxu0 0
    %2623 = vmatprep.subr.bf16.mxu0 0
    %2624 = vmatpush1.bf16.msra.mxu0 0
    %2625 = vmatprep.subr.bf16.mxu0 0
    %2626 = vmatpush1.bf16.msra.mxu0 0
    %2627 = vmatprep.subr.bf16.mxu0 0
    %2628 = vmatpush1.bf16.msra.mxu0 0
    %2629 = vmatprep.subr.bf16.mxu0 0
    %2630 = vmatpush1.bf16.msra.mxu0 0
    %2631 = vmatprep.subr.bf16.mxu0 0
    %2632 = vmatpush1.bf16.msra.mxu0 0
    %2633 = vmatprep.subr.bf16.mxu0 %v2093
    %2634 = vmatpush1.bf16.msra.mxu0 %v2092
    %2635 = vmatprep.subr.bf16.mxu0 0
    %2636 = vmatpush2.bf16.msra.mxu0 0
    %2637 = vmatprep.subr.bf16.mxu0 0
    %2638 = vmatpush2.bf16.msra.mxu0 0
    %2639 = vmatprep.subr.bf16.mxu0 0
    %2640 = vmatpush2.bf16.msra.mxu0 0
    %2641 = vmatprep.subr.bf16.mxu0 0
    %2642 = vmatpush2.bf16.msra.mxu0 0
    %2643 = vmatprep.subr.bf16.mxu0 0
    %2644 = vmatpush2.bf16.msra.mxu0 0
    %2645 = vmatprep.subr.bf16.mxu0 0
    %2646 = vmatpush2.bf16.msra.mxu0 0
    %2647 = vmatprep.subr.bf16.mxu0 0
    %2648 = vmatpush2.bf16.msra.mxu0 0
    %2649 = vmatprep.subr.bf16.mxu0 0
    %2650 = vmatpush2.bf16.msra.mxu0 0
    %2651 = vmatprep.mubr.bf16.mxu0 0
    %2652 = vmatmul.mubr.bf16.gmra.mxu0 %v2494
    %v2653 = vpop.f32.mrf.mxu0
    %v2654 = vadd.f32 %v2613, %v2653
    %v2655 = vpop.f32.mrf.mxu0
    %v2656 = vadd.f32 %v2615, %v2655
    %v2657 = vpop.f32.mrf.mxu0
    %v2658 = vpop.f32.mrf.mxu0
    %2659 = vdwg.mxu0
    %2660 = vmatprep.subr.bf16.mxu0 %v1767
    %2661 = vmatpush1.bf16.msra.mxu0 %v1766
    %2662 = vmatprep.subr.bf16.mxu0 %v1759
    %2663 = vmatpush1.bf16.msra.mxu0 %v1758
    %2664 = vmatprep.subr.bf16.mxu0 %v1751
    %2665 = vmatpush1.bf16.msra.mxu0 %v1750
    %2666 = vmatprep.subr.bf16.mxu0 %v1743
    %2667 = vmatpush1.bf16.msra.mxu0 %v1742
    %2668 = vmatprep.subr.bf16.mxu0 %v1735
    %2669 = vmatpush1.bf16.msra.mxu0 %v1734
    %2670 = vmatprep.subr.bf16.mxu0 %v1727
    %2671 = vmatpush1.bf16.msra.mxu0 %v1726
    %2672 = vmatprep.subr.bf16.mxu0 %v1719
    %2673 = vmatpush1.bf16.msra.mxu0 %v1718
    %2674 = vmatprep.subr.bf16.mxu0 %v1711
    %2675 = vmatpush1.bf16.msra.mxu0 %v1710
    %2676 = vmatprep.subr.bf16.mxu0 %v1831
    %2677 = vmatpush2.bf16.msra.mxu0 %v1830
    %2678 = vmatprep.subr.bf16.mxu0 %v1823
    %2679 = vmatpush2.bf16.msra.mxu0 %v1822
    %2680 = vmatprep.subr.bf16.mxu0 %v1815
    %2681 = vmatpush2.bf16.msra.mxu0 %v1814
    %2682 = vmatprep.subr.bf16.mxu0 %v1807
    %2683 = vmatpush2.bf16.msra.mxu0 %v1806
    %2684 = vmatprep.subr.bf16.mxu0 %v1799
    %2685 = vmatpush2.bf16.msra.mxu0 %v1798
    %2686 = vmatprep.subr.bf16.mxu0 %v1791
    %2687 = vmatpush2.bf16.msra.mxu0 %v1790
    %2688 = vmatprep.subr.bf16.mxu0 %v1783
    %2689 = vmatpush2.bf16.msra.mxu0 %v1782
    %2690 = vmatprep.subr.bf16.mxu0 %v1775
    %2691 = vmatpush2.bf16.msra.mxu0 %v1774
    %2692 = vmatprep.mubr.bf16.mxu0 %v92
    %2693 = vmatmul.mubr.bf16.gmra.mxu0 %v91
    %v2694 = vpop.f32.mrf.mxu0
    %v2695 = vadd.f32 %v503, %v2694
    %v2696 = vpop.f32.mrf.mxu0
    %v2697 = vadd.f32 %v507, %v2696
    %v2698 = vpop.f32.mrf.mxu0
    %v2699 = vpop.f32.mrf.mxu0
    %2700 = vdwg.mxu0
    %2701 = vmatprep.subr.bf16.mxu0 %v1895
    %2702 = vmatpush1.bf16.msra.mxu0 %v1894
    %2703 = vmatprep.subr.bf16.mxu0 %v1887
    %2704 = vmatpush1.bf16.msra.mxu0 %v1886
    %2705 = vmatprep.subr.bf16.mxu0 %v1879
    %2706 = vmatpush1.bf16.msra.mxu0 %v1878
    %2707 = vmatprep.subr.bf16.mxu0 %v1871
    %2708 = vmatpush1.bf16.msra.mxu0 %v1870
    %2709 = vmatprep.subr.bf16.mxu0 %v1863
    %2710 = vmatpush1.bf16.msra.mxu0 %v1862
    %2711 = vmatprep.subr.bf16.mxu0 %v1855
    %2712 = vmatpush1.bf16.msra.mxu0 %v1854
    %2713 = vmatprep.subr.bf16.mxu0 %v1847
    %2714 = vmatpush1.bf16.msra.mxu0 %v1846
    %2715 = vmatprep.subr.bf16.mxu0 %v1839
    %2716 = vmatpush1.bf16.msra.mxu0 %v1838
    %2717 = vmatprep.subr.bf16.mxu0 %v1959
    %2718 = vmatpush2.bf16.msra.mxu0 %v1958
    %2719 = vmatprep.subr.bf16.mxu0 %v1951
    %2720 = vmatpush2.bf16.msra.mxu0 %v1950
    %2721 = vmatprep.subr.bf16.mxu0 %v1943
    %2722 = vmatpush2.bf16.msra.mxu0 %v1942
    %2723 = vmatprep.subr.bf16.mxu0 %v1935
    %2724 = vmatpush2.bf16.msra.mxu0 %v1934
    %2725 = vmatprep.subr.bf16.mxu0 %v1927
    %2726 = vmatpush2.bf16.msra.mxu0 %v1926
    %2727 = vmatprep.subr.bf16.mxu0 %v1919
    %2728 = vmatpush2.bf16.msra.mxu0 %v1918
    %2729 = vmatprep.subr.bf16.mxu0 %v1911
    %2730 = vmatpush2.bf16.msra.mxu0 %v1910
    %2731 = vmatprep.subr.bf16.mxu0 %v1903
    %2732 = vmatpush2.bf16.msra.mxu0 %v1902
    %2733 = vmatprep.mubr.bf16.mxu0 %v94
    %2734 = vmatmul.mubr.bf16.gmra.mxu0 %v93
    %v2735 = vpop.f32.mrf.mxu0
    %v2736 = vadd.f32 %v2695, %v2735
    %v2737 = vpop.f32.mrf.mxu0
    %v2738 = vadd.f32 %v2697, %v2737
    %v2739 = vpop.f32.mrf.mxu0
    %v2740 = vpop.f32.mrf.mxu0
    %2741 = vdwg.mxu0
    %2742 = vmatprep.subr.bf16.mxu0 %v2023
    %2743 = vmatpush1.bf16.msra.mxu0 %v2022
    %2744 = vmatprep.subr.bf16.mxu0 %v2015
    %2745 = vmatpush1.bf16.msra.mxu0 %v2014
    %2746 = vmatprep.subr.bf16.mxu0 %v2007
    %2747 = vmatpush1.bf16.msra.mxu0 %v2006
    %2748 = vmatprep.subr.bf16.mxu0 %v1999
    %2749 = vmatpush1.bf16.msra.mxu0 %v1998
    %2750 = vmatprep.subr.bf16.mxu0 %v1991
    %2751 = vmatpush1.bf16.msra.mxu0 %v1990
    %2752 = vmatprep.subr.bf16.mxu0 %v1983
    %2753 = vmatpush1.bf16.msra.mxu0 %v1982
    %2754 = vmatprep.subr.bf16.mxu0 %v1975
    %2755 = vmatpush1.bf16.msra.mxu0 %v1974
    %2756 = vmatprep.subr.bf16.mxu0 %v1967
    %2757 = vmatpush1.bf16.msra.mxu0 %v1966
    %2758 = vmatprep.subr.bf16.mxu0 %v2087
    %2759 = vmatpush2.bf16.msra.mxu0 %v2086
    %2760 = vmatprep.subr.bf16.mxu0 %v2079
    %2761 = vmatpush2.bf16.msra.mxu0 %v2078
    %2762 = vmatprep.subr.bf16.mxu0 %v2071
    %2763 = vmatpush2.bf16.msra.mxu0 %v2070
    %2764 = vmatprep.subr.bf16.mxu0 %v2063
    %2765 = vmatpush2.bf16.msra.mxu0 %v2062
    %2766 = vmatprep.subr.bf16.mxu0 %v2055
    %2767 = vmatpush2.bf16.msra.mxu0 %v2054
    %2768 = vmatprep.subr.bf16.mxu0 %v2047
    %2769 = vmatpush2.bf16.msra.mxu0 %v2046
    %2770 = vmatprep.subr.bf16.mxu0 %v2039
    %2771 = vmatpush2.bf16.msra.mxu0 %v2038
    %2772 = vmatprep.subr.bf16.mxu0 %v2031
    %2773 = vmatpush2.bf16.msra.mxu0 %v2030
    %2774 = vmatprep.mubr.bf16.mxu0 %v96
    %2775 = vmatmul.mubr.bf16.gmra.mxu0 %v95
    %v2776 = vpop.f32.mrf.mxu0
    %v2777 = vadd.f32 %v2736, %v2776
    %v2778 = vpop.f32.mrf.mxu0
    %v2779 = vadd.f32 %v2738, %v2778
    %v2780 = vpop.f32.mrf.mxu0
    %v2781 = vpop.f32.mrf.mxu0
    %2782 = vdwg.mxu0
    %2783 = vmatprep.subr.bf16.mxu0 0
    %2784 = vmatpush1.bf16.msra.mxu0 0
    %2785 = vmatprep.subr.bf16.mxu0 0
    %2786 = vmatpush1.bf16.msra.mxu0 0
    %2787 = vmatprep.subr.bf16.mxu0 0
    %2788 = vmatpush1.bf16.msra.mxu0 0
    %2789 = vmatprep.subr.bf16.mxu0 0
    %2790 = vmatpush1.bf16.msra.mxu0 0
    %2791 = vmatprep.subr.bf16.mxu0 0
    %2792 = vmatpush1.bf16.msra.mxu0 0
    %2793 = vmatprep.subr.bf16.mxu0 0
    %2794 = vmatpush1.bf16.msra.mxu0 0
    %2795 = vmatprep.subr.bf16.mxu0 0
    %2796 = vmatpush1.bf16.msra.mxu0 0
    %2797 = vmatprep.subr.bf16.mxu0 %v2095
    %2798 = vmatpush1.bf16.msra.mxu0 %v2094
    %2799 = vmatprep.subr.bf16.mxu0 0
    %2800 = vmatpush2.bf16.msra.mxu0 0
    %2801 = vmatprep.subr.bf16.mxu0 0
    %2802 = vmatpush2.bf16.msra.mxu0 0
    %2803 = vmatprep.subr.bf16.mxu0 0
    %2804 = vmatpush2.bf16.msra.mxu0 0
    %2805 = vmatprep.subr.bf16.mxu0 0
    %2806 = vmatpush2.bf16.msra.mxu0 0
    %2807 = vmatprep.subr.bf16.mxu0 0
    %2808 = vmatpush2.bf16.msra.mxu0 0
    %2809 = vmatprep.subr.bf16.mxu0 0
    %2810 = vmatpush2.bf16.msra.mxu0 0
    %2811 = vmatprep.subr.bf16.mxu0 0
    %2812 = vmatpush2.bf16.msra.mxu0 0
    %2813 = vmatprep.subr.bf16.mxu0 0
    %2814 = vmatpush2.bf16.msra.mxu0 0
    %2815 = vmatprep.mubr.bf16.mxu0 0
    %2816 = vmatmul.mubr.bf16.gmra.mxu0 %v2494
    %v2817 = vpop.f32.mrf.mxu0
    %v2818 = vadd.f32 %v2777, %v2817
    %v2819 = vpop.f32.mrf.mxu0
    %v2820 = vadd.f32 %v2779, %v2819
    %v2821 = vpop.f32.mrf.mxu0
    %v2822 = vpop.f32.mrf.mxu0
    %2823 = vdwg.mxu0
    %2824 = vmatprep.subr.bf16.mxu0 %v1769
    %2825 = vmatpush1.bf16.msra.mxu0 %v1768
    %2826 = vmatprep.subr.bf16.mxu0 %v1761
    %2827 = vmatpush1.bf16.msra.mxu0 %v1760
    %2828 = vmatprep.subr.bf16.mxu0 %v1753
    %2829 = vmatpush1.bf16.msra.mxu0 %v1752
    %2830 = vmatprep.subr.bf16.mxu0 %v1745
    %2831 = vmatpush1.bf16.msra.mxu0 %v1744
    %2832 = vmatprep.subr.bf16.mxu0 %v1737
    %2833 = vmatpush1.bf16.msra.mxu0 %v1736
    %2834 = vmatprep.subr.bf16.mxu0 %v1729
    %2835 = vmatpush1.bf16.msra.mxu0 %v1728
    %2836 = vmatprep.subr.bf16.mxu0 %v1721
    %2837 = vmatpush1.bf16.msra.mxu0 %v1720
    %2838 = vmatprep.subr.bf16.mxu0 %v1713
    %2839 = vmatpush1.bf16.msra.mxu0 %v1712
    %2840 = vmatprep.subr.bf16.mxu0 %v1833
    %2841 = vmatpush2.bf16.msra.mxu0 %v1832
    %2842 = vmatprep.subr.bf16.mxu0 %v1825
    %2843 = vmatpush2.bf16.msra.mxu0 %v1824
    %2844 = vmatprep.subr.bf16.mxu0 %v1817
    %2845 = vmatpush2.bf16.msra.mxu0 %v1816
    %2846 = vmatprep.subr.bf16.mxu0 %v1809
    %2847 = vmatpush2.bf16.msra.mxu0 %v1808
    %2848 = vmatprep.subr.bf16.mxu0 %v1801
    %2849 = vmatpush2.bf16.msra.mxu0 %v1800
    %2850 = vmatprep.subr.bf16.mxu0 %v1793
    %2851 = vmatpush2.bf16.msra.mxu0 %v1792
    %2852 = vmatprep.subr.bf16.mxu0 %v1785
    %2853 = vmatpush2.bf16.msra.mxu0 %v1784
    %2854 = vmatprep.subr.bf16.mxu0 %v1777
    %2855 = vmatpush2.bf16.msra.mxu0 %v1776
    %2856 = vmatprep.mubr.bf16.mxu0 %v92
    %2857 = vmatmul.mubr.bf16.gmra.mxu0 %v91
    %v2858 = vpop.f32.mrf.mxu0
    %v2859 = vadd.f32 %v511, %v2858
    %v2860 = vpop.f32.mrf.mxu0
    %v2861 = vadd.f32 %v515, %v2860
    %v2862 = vpop.f32.mrf.mxu0
    %v2863 = vpop.f32.mrf.mxu0
    %2864 = vdwg.mxu0
    %2865 = vmatprep.subr.bf16.mxu0 %v1897
    %2866 = vmatpush1.bf16.msra.mxu0 %v1896
    %2867 = vmatprep.subr.bf16.mxu0 %v1889
    %2868 = vmatpush1.bf16.msra.mxu0 %v1888
    %2869 = vmatprep.subr.bf16.mxu0 %v1881
    %2870 = vmatpush1.bf16.msra.mxu0 %v1880
    %2871 = vmatprep.subr.bf16.mxu0 %v1873
    %2872 = vmatpush1.bf16.msra.mxu0 %v1872
    %2873 = vmatprep.subr.bf16.mxu0 %v1865
    %2874 = vmatpush1.bf16.msra.mxu0 %v1864
    %2875 = vmatprep.subr.bf16.mxu0 %v1857
    %2876 = vmatpush1.bf16.msra.mxu0 %v1856
    %2877 = vmatprep.subr.bf16.mxu0 %v1849
    %2878 = vmatpush1.bf16.msra.mxu0 %v1848
    %2879 = vmatprep.subr.bf16.mxu0 %v1841
    %2880 = vmatpush1.bf16.msra.mxu0 %v1840
    %2881 = vmatprep.subr.bf16.mxu0 %v1961
    %2882 = vmatpush2.bf16.msra.mxu0 %v1960
    %2883 = vmatprep.subr.bf16.mxu0 %v1953
    %2884 = vmatpush2.bf16.msra.mxu0 %v1952
    %2885 = vmatprep.subr.bf16.mxu0 %v1945
    %2886 = vmatpush2.bf16.msra.mxu0 %v1944
    %2887 = vmatprep.subr.bf16.mxu0 %v1937
    %2888 = vmatpush2.bf16.msra.mxu0 %v1936
    %2889 = vmatprep.subr.bf16.mxu0 %v1929
    %2890 = vmatpush2.bf16.msra.mxu0 %v1928
    %2891 = vmatprep.subr.bf16.mxu0 %v1921
    %2892 = vmatpush2.bf16.msra.mxu0 %v1920
    %2893 = vmatprep.subr.bf16.mxu0 %v1913
    %2894 = vmatpush2.bf16.msra.mxu0 %v1912
    %2895 = vmatprep.subr.bf16.mxu0 %v1905
    %2896 = vmatpush2.bf16.msra.mxu0 %v1904
    %2897 = vmatprep.mubr.bf16.mxu0 %v94
    %2898 = vmatmul.mubr.bf16.gmra.mxu0 %v93
    %v2899 = vpop.f32.mrf.mxu0
    %v2900 = vadd.f32 %v2859, %v2899
    %v2901 = vpop.f32.mrf.mxu0
    %v2902 = vadd.f32 %v2861, %v2901
    %v2903 = vpop.f32.mrf.mxu0
    %v2904 = vpop.f32.mrf.mxu0
    %2905 = vdwg.mxu0
    %2906 = vmatprep.subr.bf16.mxu0 %v2025
    %2907 = vmatpush1.bf16.msra.mxu0 %v2024
    %2908 = vmatprep.subr.bf16.mxu0 %v2017
    %2909 = vmatpush1.bf16.msra.mxu0 %v2016
    %2910 = vmatprep.subr.bf16.mxu0 %v2009
    %2911 = vmatpush1.bf16.msra.mxu0 %v2008
    %2912 = vmatprep.subr.bf16.mxu0 %v2001
    %2913 = vmatpush1.bf16.msra.mxu0 %v2000
    %2914 = vmatprep.subr.bf16.mxu0 %v1993
    %2915 = vmatpush1.bf16.msra.mxu0 %v1992
    %2916 = vmatprep.subr.bf16.mxu0 %v1985
    %2917 = vmatpush1.bf16.msra.mxu0 %v1984
    %2918 = vmatprep.subr.bf16.mxu0 %v1977
    %2919 = vmatpush1.bf16.msra.mxu0 %v1976
    %2920 = vmatprep.subr.bf16.mxu0 %v1969
    %2921 = vmatpush1.bf16.msra.mxu0 %v1968
    %2922 = vmatprep.subr.bf16.mxu0 %v2089
    %2923 = vmatpush2.bf16.msra.mxu0 %v2088
    %2924 = vmatprep.subr.bf16.mxu0 %v2081
    %2925 = vmatpush2.bf16.msra.mxu0 %v2080
    %2926 = vmatprep.subr.bf16.mxu0 %v2073
    %2927 = vmatpush2.bf16.msra.mxu0 %v2072
    %2928 = vmatprep.subr.bf16.mxu0 %v2065
    %2929 = vmatpush2.bf16.msra.mxu0 %v2064
    %2930 = vmatprep.subr.bf16.mxu0 %v2057
    %2931 = vmatpush2.bf16.msra.mxu0 %v2056
    %2932 = vmatprep.subr.bf16.mxu0 %v2049
    %2933 = vmatpush2.bf16.msra.mxu0 %v2048
    %2934 = vmatprep.subr.bf16.mxu0 %v2041
    %2935 = vmatpush2.bf16.msra.mxu0 %v2040
    %2936 = vmatprep.subr.bf16.mxu0 %v2033
    %2937 = vmatpush2.bf16.msra.mxu0 %v2032
    %2938 = vmatprep.mubr.bf16.mxu0 %v96
    %2939 = vmatmul.mubr.bf16.gmra.mxu0 %v95
    %v2940 = vpop.f32.mrf.mxu0
    %v2941 = vadd.f32 %v2900, %v2940
    %v2942 = vpop.f32.mrf.mxu0
    %v2943 = vadd.f32 %v2902, %v2942
    %v2944 = vpop.f32.mrf.mxu0
    %v2945 = vpop.f32.mrf.mxu0
    %2946 = vdwg.mxu0
    %2947 = vmatprep.subr.bf16.mxu0 0
    %2948 = vmatpush1.bf16.msra.mxu0 0
    %2949 = vmatprep.subr.bf16.mxu0 0
    %2950 = vmatpush1.bf16.msra.mxu0 0
    %2951 = vmatprep.subr.bf16.mxu0 0
    %2952 = vmatpush1.bf16.msra.mxu0 0
    %2953 = vmatprep.subr.bf16.mxu0 0
    %2954 = vmatpush1.bf16.msra.mxu0 0
    %2955 = vmatprep.subr.bf16.mxu0 0
    %2956 = vmatpush1.bf16.msra.mxu0 0
    %2957 = vmatprep.subr.bf16.mxu0 0
    %2958 = vmatpush1.bf16.msra.mxu0 0
    %2959 = vmatprep.subr.bf16.mxu0 0
    %2960 = vmatpush1.bf16.msra.mxu0 0
    %2961 = vmatprep.subr.bf16.mxu0 %v2097
    %2962 = vmatpush1.bf16.msra.mxu0 %v2096
    %2963 = vmatprep.subr.bf16.mxu0 0
    %2964 = vmatpush2.bf16.msra.mxu0 0
    %2965 = vmatprep.subr.bf16.mxu0 0
    %2966 = vmatpush2.bf16.msra.mxu0 0
    %2967 = vmatprep.subr.bf16.mxu0 0
    %2968 = vmatpush2.bf16.msra.mxu0 0
    %2969 = vmatprep.subr.bf16.mxu0 0
    %2970 = vmatpush2.bf16.msra.mxu0 0
    %2971 = vmatprep.subr.bf16.mxu0 0
    %2972 = vmatpush2.bf16.msra.mxu0 0
    %2973 = vmatprep.subr.bf16.mxu0 0
    %2974 = vmatpush2.bf16.msra.mxu0 0
    %2975 = vmatprep.subr.bf16.mxu0 0
    %2976 = vmatpush2.bf16.msra.mxu0 0
    %2977 = vmatprep.subr.bf16.mxu0 0
    %2978 = vmatpush2.bf16.msra.mxu0 0
    %2979 = vmatprep.mubr.bf16.mxu0 0
    %2980 = vmatmul.mubr.bf16.gmra.mxu0 %v2494
    %v2981 = vpop.f32.mrf.mxu0
    %v2982 = vadd.f32 %v2941, %v2981
    %v2983 = vpop.f32.mrf.mxu0
    %v2984 = vadd.f32 %v2943, %v2983
    %v2985 = vpop.f32.mrf.mxu0
    %v2986 = vpop.f32.mrf.mxu0
    %2987 = vdwg.mxu0
    %2988 = vmatprep.subr.bf16.mxu0 %v1771
    %2989 = vmatpush1.bf16.msra.mxu0 %v1770
    %2990 = vmatprep.subr.bf16.mxu0 %v1763
    %2991 = vmatpush1.bf16.msra.mxu0 %v1762
    %2992 = vmatprep.subr.bf16.mxu0 %v1755
    %2993 = vmatpush1.bf16.msra.mxu0 %v1754
    %2994 = vmatprep.subr.bf16.mxu0 %v1747
    %2995 = vmatpush1.bf16.msra.mxu0 %v1746
    %2996 = vmatprep.subr.bf16.mxu0 %v1739
    %2997 = vmatpush1.bf16.msra.mxu0 %v1738
    %2998 = vmatprep.subr.bf16.mxu0 %v1731
    %2999 = vmatpush1.bf16.msra.mxu0 %v1730
    %3000 = vmatprep.subr.bf16.mxu0 %v1723
    %3001 = vmatpush1.bf16.msra.mxu0 %v1722
    %3002 = vmatprep.subr.bf16.mxu0 %v1715
    %3003 = vmatpush1.bf16.msra.mxu0 %v1714
    %3004 = vmatprep.subr.bf16.mxu0 %v1835
    %3005 = vmatpush2.bf16.msra.mxu0 %v1834
    %3006 = vmatprep.subr.bf16.mxu0 %v1827
    %3007 = vmatpush2.bf16.msra.mxu0 %v1826
    %3008 = vmatprep.subr.bf16.mxu0 %v1819
    %3009 = vmatpush2.bf16.msra.mxu0 %v1818
    %3010 = vmatprep.subr.bf16.mxu0 %v1811
    %3011 = vmatpush2.bf16.msra.mxu0 %v1810
    %3012 = vmatprep.subr.bf16.mxu0 %v1803
    %3013 = vmatpush2.bf16.msra.mxu0 %v1802
    %3014 = vmatprep.subr.bf16.mxu0 %v1795
    %3015 = vmatpush2.bf16.msra.mxu0 %v1794
    %3016 = vmatprep.subr.bf16.mxu0 %v1787
    %3017 = vmatpush2.bf16.msra.mxu0 %v1786
    %3018 = vmatprep.subr.bf16.mxu0 %v1779
    %3019 = vmatpush2.bf16.msra.mxu0 %v1778
    %3020 = vmatprep.mubr.bf16.mxu0 %v92
    %3021 = vmatmul.mubr.bf16.gmra.mxu0 %v91
    %v3022 = vpop.f32.mrf.mxu0
    %v3023 = vadd.f32 %v519, %v3022
    %v3024 = vpop.f32.mrf.mxu0
    %v3025 = vadd.f32 %v523, %v3024
    %v3026 = vpop.f32.mrf.mxu0
    %v3027 = vpop.f32.mrf.mxu0
    %3028 = vdwg.mxu0
    %3029 = vmatprep.subr.bf16.mxu0 %v1899
    %3030 = vmatpush1.bf16.msra.mxu0 %v1898
    %3031 = vmatprep.subr.bf16.mxu0 %v1891
    %3032 = vmatpush1.bf16.msra.mxu0 %v1890
    %3033 = vmatprep.subr.bf16.mxu0 %v1883
    %3034 = vmatpush1.bf16.msra.mxu0 %v1882
    %3035 = vmatprep.subr.bf16.mxu0 %v1875
    %3036 = vmatpush1.bf16.msra.mxu0 %v1874
    %3037 = vmatprep.subr.bf16.mxu0 %v1867
    %3038 = vmatpush1.bf16.msra.mxu0 %v1866
    %3039 = vmatprep.subr.bf16.mxu0 %v1859
    %3040 = vmatpush1.bf16.msra.mxu0 %v1858
    %3041 = vmatprep.subr.bf16.mxu0 %v1851
    %3042 = vmatpush1.bf16.msra.mxu0 %v1850
    %3043 = vmatprep.subr.bf16.mxu0 %v1843
    %3044 = vmatpush1.bf16.msra.mxu0 %v1842
    %3045 = vmatprep.subr.bf16.mxu0 %v1963
    %3046 = vmatpush2.bf16.msra.mxu0 %v1962
    %3047 = vmatprep.subr.bf16.mxu0 %v1955
    %3048 = vmatpush2.bf16.msra.mxu0 %v1954
    %3049 = vmatprep.subr.bf16.mxu0 %v1947
    %3050 = vmatpush2.bf16.msra.mxu0 %v1946
    %3051 = vmatprep.subr.bf16.mxu0 %v1939
    %3052 = vmatpush2.bf16.msra.mxu0 %v1938
    %3053 = vmatprep.subr.bf16.mxu0 %v1931
    %3054 = vmatpush2.bf16.msra.mxu0 %v1930
    %3055 = vmatprep.subr.bf16.mxu0 %v1923
    %3056 = vmatpush2.bf16.msra.mxu0 %v1922
    %3057 = vmatprep.subr.bf16.mxu0 %v1915
    %3058 = vmatpush2.bf16.msra.mxu0 %v1914
    %3059 = vmatprep.subr.bf16.mxu0 %v1907
    %3060 = vmatpush2.bf16.msra.mxu0 %v1906
    %3061 = vmatprep.mubr.bf16.mxu0 %v94
    %3062 = vmatmul.mubr.bf16.gmra.mxu0 %v93
    %v3063 = vpop.f32.mrf.mxu0
    %v3064 = vadd.f32 %v3023, %v3063
    %v3065 = vpop.f32.mrf.mxu0
    %v3066 = vadd.f32 %v3025, %v3065
    %v3067 = vpop.f32.mrf.mxu0
    %v3068 = vpop.f32.mrf.mxu0
    %3069 = vdwg.mxu0
    %3070 = vmatprep.subr.bf16.mxu0 %v2027
    %3071 = vmatpush1.bf16.msra.mxu0 %v2026
    %3072 = vmatprep.subr.bf16.mxu0 %v2019
    %3073 = vmatpush1.bf16.msra.mxu0 %v2018
    %3074 = vmatprep.subr.bf16.mxu0 %v2011
    %3075 = vmatpush1.bf16.msra.mxu0 %v2010
    %3076 = vmatprep.subr.bf16.mxu0 %v2003
    %3077 = vmatpush1.bf16.msra.mxu0 %v2002
    %3078 = vmatprep.subr.bf16.mxu0 %v1995
    %3079 = vmatpush1.bf16.msra.mxu0 %v1994
    %3080 = vmatprep.subr.bf16.mxu0 %v1987
    %3081 = vmatpush1.bf16.msra.mxu0 %v1986
    %3082 = vmatprep.subr.bf16.mxu0 %v1979
    %3083 = vmatpush1.bf16.msra.mxu0 %v1978
    %3084 = vmatprep.subr.bf16.mxu0 %v1971
    %3085 = vmatpush1.bf16.msra.mxu0 %v1970
    %3086 = vmatprep.subr.bf16.mxu0 %v2091
    %3087 = vmatpush2.bf16.msra.mxu0 %v2090
    %3088 = vmatprep.subr.bf16.mxu0 %v2083
    %3089 = vmatpush2.bf16.msra.mxu0 %v2082
    %3090 = vmatprep.subr.bf16.mxu0 %v2075
    %3091 = vmatpush2.bf16.msra.mxu0 %v2074
    %3092 = vmatprep.subr.bf16.mxu0 %v2067
    %3093 = vmatpush2.bf16.msra.mxu0 %v2066
    %3094 = vmatprep.subr.bf16.mxu0 %v2059
    %3095 = vmatpush2.bf16.msra.mxu0 %v2058
    %3096 = vmatprep.subr.bf16.mxu0 %v2051
    %3097 = vmatpush2.bf16.msra.mxu0 %v2050
    %3098 = vmatprep.subr.bf16.mxu0 %v2043
    %3099 = vmatpush2.bf16.msra.mxu0 %v2042
    %3100 = vmatprep.subr.bf16.mxu0 %v2035
    %3101 = vmatpush2.bf16.msra.mxu0 %v2034
    %3102 = vmatprep.mubr.bf16.mxu0 %v96
    %3103 = vmatmul.mubr.bf16.gmra.mxu0 %v95
    %v3104 = vpop.f32.mrf.mxu0
    %v3105 = vadd.f32 %v3064, %v3104
    %v3106 = vpop.f32.mrf.mxu0
    %v3107 = vadd.f32 %v3066, %v3106
    %v3108 = vpop.f32.mrf.mxu0
    %v3109 = vpop.f32.mrf.mxu0
    %3110 = vdwg.mxu0
    %3111 = vmatprep.subr.bf16.mxu0 0
    %3112 = vmatpush1.bf16.msra.mxu0 0
    %3113 = vmatprep.subr.bf16.mxu0 0
    %3114 = vmatpush1.bf16.msra.mxu0 0
    %3115 = vmatprep.subr.bf16.mxu0 0
    %3116 = vmatpush1.bf16.msra.mxu0 0
    %3117 = vmatprep.subr.bf16.mxu0 0
    %3118 = vmatpush1.bf16.msra.mxu0 0
    %3119 = vmatprep.subr.bf16.mxu0 0
    %3120 = vmatpush1.bf16.msra.mxu0 0
    %3121 = vmatprep.subr.bf16.mxu0 0
    %3122 = vmatpush1.bf16.msra.mxu0 0
    %3123 = vmatprep.subr.bf16.mxu0 0
    %3124 = vmatpush1.bf16.msra.mxu0 0
    %3125 = vmatprep.subr.bf16.mxu0 %v2099
    %3126 = vmatpush1.bf16.msra.mxu0 %v2098
    %3127 = vmatprep.subr.bf16.mxu0 0
    %3128 = vmatpush2.bf16.msra.mxu0 0
    %3129 = vmatprep.subr.bf16.mxu0 0
    %3130 = vmatpush2.bf16.msra.mxu0 0
    %3131 = vmatprep.subr.bf16.mxu0 0
    %3132 = vmatpush2.bf16.msra.mxu0 0
    %3133 = vmatprep.subr.bf16.mxu0 0
    %3134 = vmatpush2.bf16.msra.mxu0 0
    %3135 = vmatprep.subr.bf16.mxu0 0
    %3136 = vmatpush2.bf16.msra.mxu0 0
    %3137 = vmatprep.subr.bf16.mxu0 0
    %3138 = vmatpush2.bf16.msra.mxu0 0
    %3139 = vmatprep.subr.bf16.mxu0 0
    %3140 = vmatpush2.bf16.msra.mxu0 0
    %3141 = vmatprep.subr.bf16.mxu0 0
    %3142 = vmatpush2.bf16.msra.mxu0 0
    %3143 = vmatprep.mubr.bf16.mxu0 0
    %3144 = vmatmul.mubr.bf16.gmra.mxu0 %v2494
    %v3145 = vpop.f32.mrf.mxu0
    %v3146 = vadd.f32 %v3105, %v3145
    %v3147 = vpop.f32.mrf.mxu0
    %v3148 = vadd.f32 %v3107, %v3147
    %v3149 = vpop.f32.mrf.mxu0
    %v3150 = vpop.f32.mrf.mxu0
    %3151 = vdwg.mxu0
    %v3152 = vmax.f32 %v2654, 0.0
    %v3153 = vmax.f32 %v2656, 0.0
    %v3154 = vmax.f32 %v2818, 0.0
    %v3155 = vmax.f32 %v2820, 0.0
    %v3156 = vmax.f32 %v2982, 0.0
    %v3157 = vmax.f32 %v2984, 0.0
    %v3158 = vmax.f32 %v3146, 0.0
    %v3159 = vmax.f32 %v3148, 0.0
    %v3160 = vpack.c.bf16 %v3152, %v3152
    %v3161 = vpack.c.bf16 %v3153, %v3153
    %v3162 = vpack.c.bf16 %v3154, %v3154
    %v3163 = vpack.c.bf16 %v3155, %v3155
    %v3164 = vpack.c.bf16 %v3156, %v3156
    %v3165 = vpack.c.bf16 %v3157, %v3157
    %v3166 = vpack.c.bf16 %v3158, %v3158
    %v3167 = vpack.c.bf16 %v3159, %v3159
    %v3168 = vld [vmem:[#allocation8] sm:$0xf]
    %v3169 = vld [vmem:[#allocation8 + $0x4] sm:$0xf]
    %v3170 = vld [vmem:[#allocation8 + $0x8] sm:$0xf]
    %v3171 = vld [vmem:[#allocation8 + $0xc] sm:$0xf]
    %v3172 = vld [vmem:[#allocation8 + $0x10] sm:$0xf]
    %v3173 = vld [vmem:[#allocation8 + $0x14] sm:$0xf]
    %v3174 = vld [vmem:[#allocation8 + $0x18] sm:$0xf]
    %v3175 = vld [vmem:[#allocation8 + $0x1c] sm:$0xf]
    %v3176 = vld [vmem:[#allocation8 + $0x20] sm:$0xf]
    %v3177 = vld [vmem:[#allocation8 + $0x24] sm:$0xf]
    %v3178 = vld [vmem:[#allocation8 + $0x28] sm:$0xf]
    %v3179 = vld [vmem:[#allocation8 + $0x2c] sm:$0xf]
    %v3180 = vld [vmem:[#allocation8 + $0x30] sm:$0xf]
    %v3181 = vld [vmem:[#allocation8 + $0x34] sm:$0xf]
    %v3182 = vld [vmem:[#allocation8 + $0x38] sm:$0xf]
    %v3183 = vld [vmem:[#allocation8 + $0x3c] sm:$0xf]
    %v3184 = vld [vmem:[#allocation8 + $0x40] sm:$0xf]
    %v3185 = vld [vmem:[#allocation8 + $0x44] sm:$0xf]
    %v3186 = vld [vmem:[#allocation8 + $0x48] sm:$0xf]
    %v3187 = vld [vmem:[#allocation8 + $0x4c] sm:$0xf]
    %v3188 = vld [vmem:[#allocation8 + $0x50] sm:$0xf]
    %v3189 = vld [vmem:[#allocation8 + $0x54] sm:$0xf]
    %v3190 = vld [vmem:[#allocation8 + $0x58] sm:$0xf]
    %v3191 = vld [vmem:[#allocation8 + $0x5c] sm:$0xf]
    %v3192 = vld [vmem:[#allocation8 + $0x60] sm:$0xf]
    %v3193 = vld [vmem:[#allocation8 + $0x64] sm:$0xf]
    %v3194 = vld [vmem:[#allocation8 + $0x68] sm:$0xf]
    %v3195 = vld [vmem:[#allocation8 + $0x6c] sm:$0xf]
    %v3196 = vld [vmem:[#allocation8 + $0x70] sm:$0xf]
    %v3197 = vld [vmem:[#allocation8 + $0x74] sm:$0xf]
    %v3198 = vld [vmem:[#allocation8 + $0x78] sm:$0xf]
    %v3199 = vld [vmem:[#allocation8 + $0x7c] sm:$0xf]
    %v3200 = vld [vmem:[#allocation8 + $0x80] sm:$0xf]
    %v3201 = vld [vmem:[#allocation8 + $0x84] sm:$0xf]
    %v3202 = vld [vmem:[#allocation8 + $0x88] sm:$0xf]
    %v3203 = vld [vmem:[#allocation8 + $0x8c] sm:$0xf]
    %v3204 = vld [vmem:[#allocation8 + $0x90] sm:$0xf]
    %v3205 = vld [vmem:[#allocation8 + $0x94] sm:$0xf]
    %v3206 = vld [vmem:[#allocation8 + $0x98] sm:$0xf]
    %v3207 = vld [vmem:[#allocation8 + $0x9c] sm:$0xf]
    %v3208 = vld [vmem:[#allocation8 + $0xa0] sm:$0xf]
    %v3209 = vld [vmem:[#allocation8 + $0xa4] sm:$0xf]
    %v3210 = vld [vmem:[#allocation8 + $0xa8] sm:$0xf]
    %v3211 = vld [vmem:[#allocation8 + $0xac] sm:$0xf]
    %v3212 = vld [vmem:[#allocation8 + $0xb0] sm:$0xf]
    %v3213 = vld [vmem:[#allocation8 + $0xb4] sm:$0xf]
    %v3214 = vld [vmem:[#allocation8 + $0xb8] sm:$0xf]
    %v3215 = vld [vmem:[#allocation8 + $0xbc] sm:$0xf]
    %v3216 = vld [vmem:[#allocation8 + $0xc0] sm:$0xf]
    %v3217 = vld [vmem:[#allocation8 + $0xc4] sm:$0xf]
    %v3218 = vld [vmem:[#allocation8 + $0xc8] sm:$0xf]
    %v3219 = vld [vmem:[#allocation8 + $0xcc] sm:$0xf]
    %v3220 = vld [vmem:[#allocation8 + $0xd0] sm:$0xf]
    %v3221 = vld [vmem:[#allocation8 + $0xd4] sm:$0xf]
    %v3222 = vld [vmem:[#allocation8 + $0xd8] sm:$0xf]
    %v3223 = vld [vmem:[#allocation8 + $0xdc] sm:$0xf]
    %v3224 = vld [vmem:[#allocation8 + $0xe0] sm:$0xf]
    %v3225 = vld [vmem:[#allocation8 + $0xe4] sm:$0xf]
    %v3226 = vld [vmem:[#allocation8 + $0xe8] sm:$0xf]
    %v3227 = vld [vmem:[#allocation8 + $0xec] sm:$0xf]
    %v3228 = vld [vmem:[#allocation8 + $0xf0] sm:$0xf]
    %v3229 = vld [vmem:[#allocation8 + $0xf4] sm:$0xf]
    %v3230 = vld [vmem:[#allocation8 + $0xf8] sm:$0xf]
    %v3231 = vld [vmem:[#allocation8 + $0xfc] sm:$0xf]
    %v3232 = vld [vmem:[#allocation8 + $0x100] sm:$0xf]
    %v3233 = vld [vmem:[#allocation8 + $0x104] sm:$0xf]
    %v3234 = vld [vmem:[#allocation8 + $0x108] sm:$0xf]
    %v3235 = vld [vmem:[#allocation8 + $0x10c] sm:$0xf]
    %v3236 = vld [vmem:[#allocation8 + $0x110] sm:$0xf]
    %v3237 = vld [vmem:[#allocation8 + $0x114] sm:$0xf]
    %v3238 = vld [vmem:[#allocation8 + $0x118] sm:$0xf]
    %v3239 = vld [vmem:[#allocation8 + $0x11c] sm:$0xf]
    %v3240 = vld [vmem:[#allocation8 + $0x120] sm:$0xf]
    %v3241 = vld [vmem:[#allocation8 + $0x124] sm:$0xf]
    %v3242 = vld [vmem:[#allocation8 + $0x128] sm:$0xf]
    %v3243 = vld [vmem:[#allocation8 + $0x12c] sm:$0xf]
    %v3244 = vld [vmem:[#allocation8 + $0x130] sm:$0xf]
    %v3245 = vld [vmem:[#allocation8 + $0x134] sm:$0xf]
    %v3246 = vld [vmem:[#allocation8 + $0x138] sm:$0xf]
    %v3247 = vld [vmem:[#allocation8 + $0x13c] sm:$0xf]
    %v3248 = vld [vmem:[#allocation8 + $0x140] sm:$0xf]
    %v3249 = vld [vmem:[#allocation8 + $0x144] sm:$0xf]
    %v3250 = vld [vmem:[#allocation8 + $0x148] sm:$0xf]
    %v3251 = vld [vmem:[#allocation8 + $0x14c] sm:$0xf]
    %v3252 = vld [vmem:[#allocation8 + $0x150] sm:$0xf]
    %v3253 = vld [vmem:[#allocation8 + $0x154] sm:$0xf]
    %v3254 = vld [vmem:[#allocation8 + $0x158] sm:$0xf]
    %v3255 = vld [vmem:[#allocation8 + $0x15c] sm:$0xf]
    %v3256 = vld [vmem:[#allocation8 + $0x160] sm:$0xf]
    %v3257 = vld [vmem:[#allocation8 + $0x164] sm:$0xf]
    %v3258 = vld [vmem:[#allocation8 + $0x168] sm:$0xf]
    %v3259 = vld [vmem:[#allocation8 + $0x16c] sm:$0xf]
    %v3260 = vld [vmem:[#allocation8 + $0x170] sm:$0xf]
    %v3261 = vld [vmem:[#allocation8 + $0x174] sm:$0xf]
    %v3262 = vld [vmem:[#allocation8 + $0x178] sm:$0xf]
    %v3263 = vld [vmem:[#allocation8 + $0x17c] sm:$0xf]
    %v3264 = vld [vmem:[#allocation8 + $0x180] sm:$0xf]
    %v3265 = vld [vmem:[#allocation8 + $0x184] sm:$0xf]
    %v3266 = vld [vmem:[#allocation8 + $0x188] sm:$0xf]
    %v3267 = vld [vmem:[#allocation8 + $0x18c] sm:$0xf]
    %v3268 = vld [vmem:[#allocation8 + $0x190] sm:$0xf]
    %v3269 = vld [vmem:[#allocation8 + $0x194] sm:$0xf]
    %v3270 = vld [vmem:[#allocation8 + $0x198] sm:$0xf]
    %v3271 = vld [vmem:[#allocation8 + $0x19c] sm:$0xf]
    %v3272 = vld [vmem:[#allocation8 + $0x1a0] sm:$0xf]
    %v3273 = vld [vmem:[#allocation8 + $0x1a4] sm:$0xf]
    %v3274 = vld [vmem:[#allocation8 + $0x1a8] sm:$0xf]
    %v3275 = vld [vmem:[#allocation8 + $0x1ac] sm:$0xf]
    %v3276 = vld [vmem:[#allocation8 + $0x1b0] sm:$0xf]
    %v3277 = vld [vmem:[#allocation8 + $0x1b4] sm:$0xf]
    %v3278 = vld [vmem:[#allocation8 + $0x1b8] sm:$0xf]
    %v3279 = vld [vmem:[#allocation8 + $0x1bc] sm:$0xf]
    %v3280 = vld [vmem:[#allocation8 + $0x1c0] sm:$0xf]
    %v3281 = vld [vmem:[#allocation8 + $0x1c4] sm:$0xf]
    %v3282 = vld [vmem:[#allocation8 + $0x1c8] sm:$0xf]
    %v3283 = vld [vmem:[#allocation8 + $0x1cc] sm:$0xf]
    %v3284 = vld [vmem:[#allocation8 + $0x1d0] sm:$0xf]
    %v3285 = vld [vmem:[#allocation8 + $0x1d4] sm:$0xf]
    %v3286 = vld [vmem:[#allocation8 + $0x1d8] sm:$0xf]
    %v3287 = vld [vmem:[#allocation8 + $0x1dc] sm:$0xf]
    %v3288 = vld [vmem:[#allocation8 + $0x1e0] sm:$0xf]
    %v3289 = vld [vmem:[#allocation8 + $0x1e4] sm:$0xf]
    %v3290 = vld [vmem:[#allocation8 + $0x1e8] sm:$0xf]
    %v3291 = vld [vmem:[#allocation8 + $0x1ec] sm:$0xf]
    %v3292 = vld [vmem:[#allocation8 + $0x1f0] sm:$0xf]
    %v3293 = vld [vmem:[#allocation8 + $0x1f4] sm:$0xf]
    %v3294 = vld [vmem:[#allocation8 + $0x1f8] sm:$0xf]
    %v3295 = vld [vmem:[#allocation8 + $0x1fc] sm:$0xf]
    %v3296 = vld [vmem:[#allocation10] sm:$0x1]
    %v3298 = vlaneseq
    %v3299 = vshrl.u32 %v3298, 7
    %v3300 = vsub.s32 0, %v3299
    %v3301 = vrot.slane %v3296, %v3300
    %v3431 = vunpack.c.l.b16 %v3168
    %v3432 = vunpack.c.l.b16 %v3169
    %v3433 = vunpack.c.l.b16 %v3170
    %v3434 = vunpack.c.l.b16 %v3171
    %v3435 = vunpack.c.l.b16 %v3172
    %v3436 = vunpack.c.l.b16 %v3173
    %v3437 = vunpack.c.l.b16 %v3174
    %v3438 = vunpack.c.l.b16 %v3175
    %v3439 = vunpack.c.l.b16 %v3176
    %v3440 = vunpack.c.l.b16 %v3177
    %v3441 = vunpack.c.l.b16 %v3178
    %v3442 = vunpack.c.l.b16 %v3179
    %v3443 = vunpack.c.l.b16 %v3180
    %v3444 = vunpack.c.l.b16 %v3181
    %v3445 = vunpack.c.l.b16 %v3182
    %v3446 = vunpack.c.l.b16 %v3183
    %v3447 = vunpack.c.l.b16 %v3184
    %v3448 = vunpack.c.l.b16 %v3185
    %v3449 = vunpack.c.l.b16 %v3186
    %v3450 = vunpack.c.l.b16 %v3187
    %v3451 = vunpack.c.l.b16 %v3188
    %v3452 = vunpack.c.l.b16 %v3189
    %v3453 = vunpack.c.l.b16 %v3190
    %v3454 = vunpack.c.l.b16 %v3191
    %v3455 = vunpack.c.l.b16 %v3192
    %v3456 = vunpack.c.l.b16 %v3193
    %v3457 = vunpack.c.l.b16 %v3194
    %v3458 = vunpack.c.l.b16 %v3195
    %v3459 = vunpack.c.l.b16 %v3196
    %v3460 = vunpack.c.l.b16 %v3197
    %v3461 = vunpack.c.l.b16 %v3198
    %v3462 = vunpack.c.l.b16 %v3199
    %v3463 = vunpack.c.l.b16 %v3200
    %v3464 = vunpack.c.l.b16 %v3201
    %v3465 = vunpack.c.l.b16 %v3202
    %v3466 = vunpack.c.l.b16 %v3203
    %v3467 = vunpack.c.l.b16 %v3204
    %v3468 = vunpack.c.l.b16 %v3205
    %v3469 = vunpack.c.l.b16 %v3206
    %v3470 = vunpack.c.l.b16 %v3207
    %v3471 = vunpack.c.l.b16 %v3208
    %v3472 = vunpack.c.l.b16 %v3209
    %v3473 = vunpack.c.l.b16 %v3210
    %v3474 = vunpack.c.l.b16 %v3211
    %v3475 = vunpack.c.l.b16 %v3212
    %v3476 = vunpack.c.l.b16 %v3213
    %v3477 = vunpack.c.l.b16 %v3214
    %v3478 = vunpack.c.l.b16 %v3215
    %v3479 = vunpack.c.l.b16 %v3216
    %v3480 = vunpack.c.l.b16 %v3217
    %v3481 = vunpack.c.l.b16 %v3218
    %v3482 = vunpack.c.l.b16 %v3219
    %v3483 = vunpack.c.l.b16 %v3220
    %v3484 = vunpack.c.l.b16 %v3221
    %v3485 = vunpack.c.l.b16 %v3222
    %v3486 = vunpack.c.l.b16 %v3223
    %v3487 = vunpack.c.l.b16 %v3224
    %v3488 = vunpack.c.l.b16 %v3225
    %v3489 = vunpack.c.l.b16 %v3226
    %v3490 = vunpack.c.l.b16 %v3227
    %v3491 = vunpack.c.l.b16 %v3228
    %v3492 = vunpack.c.l.b16 %v3229
    %v3493 = vunpack.c.l.b16 %v3230
    %v3494 = vunpack.c.l.b16 %v3231
    %v3495 = vunpack.c.l.b16 %v3232
    %v3496 = vunpack.c.l.b16 %v3233
    %v3497 = vunpack.c.l.b16 %v3234
    %v3498 = vunpack.c.l.b16 %v3235
    %v3499 = vunpack.c.l.b16 %v3236
    %v3500 = vunpack.c.l.b16 %v3237
    %v3501 = vunpack.c.l.b16 %v3238
    %v3502 = vunpack.c.l.b16 %v3239
    %v3503 = vunpack.c.l.b16 %v3240
    %v3504 = vunpack.c.l.b16 %v3241
    %v3505 = vunpack.c.l.b16 %v3242
    %v3506 = vunpack.c.l.b16 %v3243
    %v3507 = vunpack.c.l.b16 %v3244
    %v3508 = vunpack.c.l.b16 %v3245
    %v3509 = vunpack.c.l.b16 %v3246
    %v3510 = vunpack.c.l.b16 %v3247
    %v3511 = vunpack.c.l.b16 %v3248
    %v3512 = vunpack.c.l.b16 %v3249
    %v3513 = vunpack.c.l.b16 %v3250
    %v3514 = vunpack.c.l.b16 %v3251
    %v3515 = vunpack.c.l.b16 %v3252
    %v3516 = vunpack.c.l.b16 %v3253
    %v3517 = vunpack.c.l.b16 %v3254
    %v3518 = vunpack.c.l.b16 %v3255
    %v3519 = vunpack.c.l.b16 %v3256
    %v3520 = vunpack.c.l.b16 %v3257
    %v3521 = vunpack.c.l.b16 %v3258
    %v3522 = vunpack.c.l.b16 %v3259
    %v3523 = vunpack.c.l.b16 %v3260
    %v3524 = vunpack.c.l.b16 %v3261
    %v3525 = vunpack.c.l.b16 %v3262
    %v3526 = vunpack.c.l.b16 %v3263
    %v3527 = vunpack.c.l.b16 %v3264
    %v3528 = vunpack.c.l.b16 %v3265
    %v3529 = vunpack.c.l.b16 %v3266
    %v3530 = vunpack.c.l.b16 %v3267
    %v3531 = vunpack.c.l.b16 %v3268
    %v3532 = vunpack.c.l.b16 %v3269
    %v3533 = vunpack.c.l.b16 %v3270
    %v3534 = vunpack.c.l.b16 %v3271
    %v3535 = vunpack.c.l.b16 %v3272
    %v3536 = vunpack.c.l.b16 %v3273
    %v3537 = vunpack.c.l.b16 %v3274
    %v3538 = vunpack.c.l.b16 %v3275
    %v3539 = vunpack.c.l.b16 %v3276
    %v3540 = vunpack.c.l.b16 %v3277
    %v3541 = vunpack.c.l.b16 %v3278
    %v3542 = vunpack.c.l.b16 %v3279
    %v3543 = vunpack.c.l.b16 %v3280
    %v3544 = vunpack.c.l.b16 %v3281
    %v3545 = vunpack.c.l.b16 %v3282
    %v3546 = vunpack.c.l.b16 %v3283
    %v3547 = vunpack.c.l.b16 %v3284
    %v3548 = vunpack.c.l.b16 %v3285
    %v3549 = vunpack.c.l.b16 %v3286
    %v3550 = vunpack.c.l.b16 %v3287
    %v3551 = vunpack.c.l.b16 %v3288
    %v3552 = vunpack.c.l.b16 %v3289
    %v3553 = vunpack.c.l.b16 %v3290
    %v3554 = vunpack.c.l.b16 %v3291
    %v3555 = vunpack.c.l.b16 %v3292
    %v3556 = vunpack.c.l.b16 %v3293
    %v3557 = vunpack.c.l.b16 %v3294
    %v3558 = vunpack.c.l.b16 %v3295
    %v3559 = vpack.c.b16 %v3432, %v3431
    %v3560 = vpack.c.b16 %v3434, %v3433
    %v3561 = vpack.c.b16 %v3436, %v3435
    %v3562 = vpack.c.b16 %v3438, %v3437
    %v3563 = vpack.c.b16 %v3440, %v3439
    %v3564 = vpack.c.b16 %v3442, %v3441
    %v3565 = vpack.c.b16 %v3444, %v3443
    %v3566 = vpack.c.b16 %v3446, %v3445
    %v3567 = vpack.c.b16 %v3448, %v3447
    %v3568 = vpack.c.b16 %v3450, %v3449
    %v3569 = vpack.c.b16 %v3452, %v3451
    %v3570 = vpack.c.b16 %v3454, %v3453
    %v3571 = vpack.c.b16 %v3456, %v3455
    %v3572 = vpack.c.b16 %v3458, %v3457
    %v3573 = vpack.c.b16 %v3460, %v3459
    %v3574 = vpack.c.b16 %v3462, %v3461
    %v3575 = vpack.c.b16 %v3464, %v3463
    %v3576 = vpack.c.b16 %v3466, %v3465
    %v3577 = vpack.c.b16 %v3468, %v3467
    %v3578 = vpack.c.b16 %v3470, %v3469
    %v3579 = vpack.c.b16 %v3472, %v3471
    %v3580 = vpack.c.b16 %v3474, %v3473
    %v3581 = vpack.c.b16 %v3476, %v3475
    %v3582 = vpack.c.b16 %v3478, %v3477
    %v3583 = vpack.c.b16 %v3480, %v3479
    %v3584 = vpack.c.b16 %v3482, %v3481
    %v3585 = vpack.c.b16 %v3484, %v3483
    %v3586 = vpack.c.b16 %v3486, %v3485
    %v3587 = vpack.c.b16 %v3488, %v3487
    %v3588 = vpack.c.b16 %v3490, %v3489
    %v3589 = vpack.c.b16 %v3492, %v3491
    %v3590 = vpack.c.b16 %v3494, %v3493
    %v3591 = vpack.c.b16 %v3496, %v3495
    %v3592 = vpack.c.b16 %v3498, %v3497
    %v3593 = vpack.c.b16 %v3500, %v3499
    %v3594 = vpack.c.b16 %v3502, %v3501
    %v3595 = vpack.c.b16 %v3504, %v3503
    %v3596 = vpack.c.b16 %v3506, %v3505
    %v3597 = vpack.c.b16 %v3508, %v3507
    %v3598 = vpack.c.b16 %v3510, %v3509
    %v3599 = vpack.c.b16 %v3512, %v3511
    %v3600 = vpack.c.b16 %v3514, %v3513
    %v3601 = vpack.c.b16 %v3516, %v3515
    %v3602 = vpack.c.b16 %v3518, %v3517
    %v3603 = vpack.c.b16 %v3520, %v3519
    %v3604 = vpack.c.b16 %v3522, %v3521
    %v3605 = vpack.c.b16 %v3524, %v3523
    %v3606 = vpack.c.b16 %v3526, %v3525
    %v3607 = vpack.c.b16 %v3528, %v3527
    %v3608 = vpack.c.b16 %v3530, %v3529
    %v3609 = vpack.c.b16 %v3532, %v3531
    %v3610 = vpack.c.b16 %v3534, %v3533
    %v3611 = vpack.c.b16 %v3536, %v3535
    %v3612 = vpack.c.b16 %v3538, %v3537
    %v3613 = vpack.c.b16 %v3540, %v3539
    %v3614 = vpack.c.b16 %v3542, %v3541
    %v3615 = vpack.c.b16 %v3544, %v3543
    %v3616 = vpack.c.b16 %v3546, %v3545
    %v3617 = vpack.c.b16 %v3548, %v3547
    %v3618 = vpack.c.b16 %v3550, %v3549
    %v3619 = vpack.c.b16 %v3552, %v3551
    %v3620 = vpack.c.b16 %v3554, %v3553
    %v3621 = vpack.c.b16 %v3556, %v3555
    %v3622 = vpack.c.b16 %v3558, %v3557
    %3687 = vmatprep.subr.bf16.mxu0 0
    %3688 = vmatpush1.bf16.msra.mxu0 %v3566
    %3689 = vmatprep.subr.bf16.mxu0 0
    %3690 = vmatpush1.bf16.msra.mxu0 %v3565
    %3691 = vmatprep.subr.bf16.mxu0 0
    %3692 = vmatpush1.bf16.msra.mxu0 %v3564
    %3693 = vmatprep.subr.bf16.mxu0 0
    %3694 = vmatpush1.bf16.msra.mxu0 %v3563
    %3695 = vmatprep.subr.bf16.mxu0 0
    %3696 = vmatpush1.bf16.msra.mxu0 %v3562
    %3697 = vmatprep.subr.bf16.mxu0 0
    %3698 = vmatpush1.bf16.msra.mxu0 %v3561
    %3699 = vmatprep.subr.bf16.mxu0 0
    %3700 = vmatpush1.bf16.msra.mxu0 %v3560
    %3701 = vmatprep.subr.bf16.mxu0 0
    %3702 = vmatpush1.bf16.msra.mxu0 %v3559
    %3703 = vmatprep.subr.bf16.mxu0 0
    %3704 = vmatpush2.bf16.msra.mxu0 %v3574
    %3705 = vmatprep.subr.bf16.mxu0 0
    %3706 = vmatpush2.bf16.msra.mxu0 %v3573
    %3707 = vmatprep.subr.bf16.mxu0 0
    %3708 = vmatpush2.bf16.msra.mxu0 %v3572
    %3709 = vmatprep.subr.bf16.mxu0 0
    %3710 = vmatpush2.bf16.msra.mxu0 %v3571
    %3711 = vmatprep.subr.bf16.mxu0 0
    %3712 = vmatpush2.bf16.msra.mxu0 %v3570
    %3713 = vmatprep.subr.bf16.mxu0 0
    %3714 = vmatpush2.bf16.msra.mxu0 %v3569
    %3715 = vmatprep.subr.bf16.mxu0 0
    %3716 = vmatpush2.bf16.msra.mxu0 %v3568
    %3717 = vmatprep.subr.bf16.mxu0 0
    %3718 = vmatpush2.bf16.msra.mxu0 %v3567
    %3719 = vmatprep.mubr.bf16.mxu0 %v3161
    %3720 = vmatmul.mubr.bf16.gmra.mxu0 %v3160
    %v3721 = vpop.f32.mrf.mxu0
    %v3722 = vadd.f32 %v3301, %v3721
    %v3723 = vpop.f32.mrf.mxu0
    %v3724 = vpop.f32.mrf.mxu0
    %v3725 = vpop.f32.mrf.mxu0
    %3726 = vdwg.mxu0
    %3727 = vmatprep.subr.bf16.mxu0 0
    %3728 = vmatpush1.bf16.msra.mxu0 %v3582
    %3729 = vmatprep.subr.bf16.mxu0 0
    %3730 = vmatpush1.bf16.msra.mxu0 %v3581
    %3731 = vmatprep.subr.bf16.mxu0 0
    %3732 = vmatpush1.bf16.msra.mxu0 %v3580
    %3733 = vmatprep.subr.bf16.mxu0 0
    %3734 = vmatpush1.bf16.msra.mxu0 %v3579
    %3735 = vmatprep.subr.bf16.mxu0 0
    %3736 = vmatpush1.bf16.msra.mxu0 %v3578
    %3737 = vmatprep.subr.bf16.mxu0 0
    %3738 = vmatpush1.bf16.msra.mxu0 %v3577
    %3739 = vmatprep.subr.bf16.mxu0 0
    %3740 = vmatpush1.bf16.msra.mxu0 %v3576
    %3741 = vmatprep.subr.bf16.mxu0 0
    %3742 = vmatpush1.bf16.msra.mxu0 %v3575
    %3743 = vmatprep.subr.bf16.mxu0 0
    %3744 = vmatpush2.bf16.msra.mxu0 %v3590
    %3745 = vmatprep.subr.bf16.mxu0 0
    %3746 = vmatpush2.bf16.msra.mxu0 %v3589
    %3747 = vmatprep.subr.bf16.mxu0 0
    %3748 = vmatpush2.bf16.msra.mxu0 %v3588
    %3749 = vmatprep.subr.bf16.mxu0 0
    %3750 = vmatpush2.bf16.msra.mxu0 %v3587
    %3751 = vmatprep.subr.bf16.mxu0 0
    %3752 = vmatpush2.bf16.msra.mxu0 %v3586
    %3753 = vmatprep.subr.bf16.mxu0 0
    %3754 = vmatpush2.bf16.msra.mxu0 %v3585
    %3755 = vmatprep.subr.bf16.mxu0 0
    %3756 = vmatpush2.bf16.msra.mxu0 %v3584
    %3757 = vmatprep.subr.bf16.mxu0 0
    %3758 = vmatpush2.bf16.msra.mxu0 %v3583
    %3759 = vmatprep.mubr.bf16.mxu0 %v3163
    %3760 = vmatmul.mubr.bf16.gmra.mxu0 %v3162
    %v3761 = vpop.f32.mrf.mxu0
    %v3762 = vadd.f32 %v3722, %v3761
    %v3763 = vpop.f32.mrf.mxu0
    %v3764 = vpop.f32.mrf.mxu0
    %v3765 = vpop.f32.mrf.mxu0
    %3766 = vdwg.mxu0
    %3767 = vmatprep.subr.bf16.mxu0 0
    %3768 = vmatpush1.bf16.msra.mxu0 %v3598
    %3769 = vmatprep.subr.bf16.mxu0 0
    %3770 = vmatpush1.bf16.msra.mxu0 %v3597
    %3771 = vmatprep.subr.bf16.mxu0 0
    %3772 = vmatpush1.bf16.msra.mxu0 %v3596
    %3773 = vmatprep.subr.bf16.mxu0 0
    %3774 = vmatpush1.bf16.msra.mxu0 %v3595
    %3775 = vmatprep.subr.bf16.mxu0 0
    %3776 = vmatpush1.bf16.msra.mxu0 %v3594
    %3777 = vmatprep.subr.bf16.mxu0 0
    %3778 = vmatpush1.bf16.msra.mxu0 %v3593
    %3779 = vmatprep.subr.bf16.mxu0 0
    %3780 = vmatpush1.bf16.msra.mxu0 %v3592
    %3781 = vmatprep.subr.bf16.mxu0 0
    %3782 = vmatpush1.bf16.msra.mxu0 %v3591
    %3783 = vmatprep.subr.bf16.mxu0 0
    %3784 = vmatpush2.bf16.msra.mxu0 %v3606
    %3785 = vmatprep.subr.bf16.mxu0 0
    %3786 = vmatpush2.bf16.msra.mxu0 %v3605
    %3787 = vmatprep.subr.bf16.mxu0 0
    %3788 = vmatpush2.bf16.msra.mxu0 %v3604
    %3789 = vmatprep.subr.bf16.mxu0 0
    %3790 = vmatpush2.bf16.msra.mxu0 %v3603
    %3791 = vmatprep.subr.bf16.mxu0 0
    %3792 = vmatpush2.bf16.msra.mxu0 %v3602
    %3793 = vmatprep.subr.bf16.mxu0 0
    %3794 = vmatpush2.bf16.msra.mxu0 %v3601
    %3795 = vmatprep.subr.bf16.mxu0 0
    %3796 = vmatpush2.bf16.msra.mxu0 %v3600
    %3797 = vmatprep.subr.bf16.mxu0 0
    %3798 = vmatpush2.bf16.msra.mxu0 %v3599
    %3799 = vmatprep.mubr.bf16.mxu0 %v3165
    %3800 = vmatmul.mubr.bf16.gmra.mxu0 %v3164
    %v3801 = vpop.f32.mrf.mxu0
    %v3802 = vadd.f32 %v3762, %v3801
    %v3803 = vpop.f32.mrf.mxu0
    %v3804 = vpop.f32.mrf.mxu0
    %v3805 = vpop.f32.mrf.mxu0
    %3806 = vdwg.mxu0
    %3807 = vmatprep.subr.bf16.mxu0 0
    %3808 = vmatpush1.bf16.msra.mxu0 %v3614
    %3809 = vmatprep.subr.bf16.mxu0 0
    %3810 = vmatpush1.bf16.msra.mxu0 %v3613
    %3811 = vmatprep.subr.bf16.mxu0 0
    %3812 = vmatpush1.bf16.msra.mxu0 %v3612
    %3813 = vmatprep.subr.bf16.mxu0 0
    %3814 = vmatpush1.bf16.msra.mxu0 %v3611
    %3815 = vmatprep.subr.bf16.mxu0 0
    %3816 = vmatpush1.bf16.msra.mxu0 %v3610
    %3817 = vmatprep.subr.bf16.mxu0 0
    %3818 = vmatpush1.bf16.msra.mxu0 %v3609
    %3819 = vmatprep.subr.bf16.mxu0 0
    %3820 = vmatpush1.bf16.msra.mxu0 %v3608
    %3821 = vmatprep.subr.bf16.mxu0 0
    %3822 = vmatpush1.bf16.msra.mxu0 %v3607
    %3823 = vmatprep.subr.bf16.mxu0 0
    %3824 = vmatpush2.bf16.msra.mxu0 %v3622
    %3825 = vmatprep.subr.bf16.mxu0 0
    %3826 = vmatpush2.bf16.msra.mxu0 %v3621
    %3827 = vmatprep.subr.bf16.mxu0 0
    %3828 = vmatpush2.bf16.msra.mxu0 %v3620
    %3829 = vmatprep.subr.bf16.mxu0 0
    %3830 = vmatpush2.bf16.msra.mxu0 %v3619
    %3831 = vmatprep.subr.bf16.mxu0 0
    %3832 = vmatpush2.bf16.msra.mxu0 %v3618
    %3833 = vmatprep.subr.bf16.mxu0 0
    %3834 = vmatpush2.bf16.msra.mxu0 %v3617
    %3835 = vmatprep.subr.bf16.mxu0 0
    %3836 = vmatpush2.bf16.msra.mxu0 %v3616
    %3837 = vmatprep.subr.bf16.mxu0 0
    %3838 = vmatpush2.bf16.msra.mxu0 %v3615
    %3839 = vmatprep.mubr.bf16.mxu0 %v3167
    %3840 = vmatmul.mubr.bf16.gmra.mxu0 %v3166
    %v3841 = vpop.f32.mrf.mxu0
    %v3842 = vadd.f32 %v3802, %v3841
    %v3843 = vpop.f32.mrf.mxu0
    %v3844 = vpop.f32.mrf.mxu0
    %v3845 = vpop.f32.mrf.mxu0
    %3846 = vdwg.mxu0
    %3847 = vst [vmem:[#allocation11] sm:$0xff] %v3842
    // Predicated region
    $region42: #{mlp_forward.1} parent=1 // pred_check
      _
    $region43: #{mlp_forward.1} parent=1 // pred_check_branch
      %3849 = sbr.rel (0) target = $region45
    $region44: #{mlp_forward.1} parent=1 // pred_region
      %s3851 = ssub.s32 128, 128
      %3852 = vsyncadd [#allocation4], %s3851
      %s3854 = sshll.u32 [#allocation11], 4
      %s3855 = int_to_ptr.vmem [resolvable:$true] %s3854
      %3857 = dma.vmem_to_hbm [thread:$0]  %s3855, 128, %s5, [#allocation4]
    $region45: #{mlp_forward.1} parent=1 // pred_fallthru
      _
    // Predicated region
    $region46: #{mlp_forward.1} parent=1 // pred_check
      _
    $region47: #{mlp_forward.1} parent=1 // pred_check_branch
      %3859 = sbr.rel (0) target = $region49
    $region48: #{mlp_forward.1} parent=1 // pred_region
      %3860 = dma.done [#allocation4], 128
    $region49: #{mlp_forward.1} parent=1 // pred_fallthru
      _
    %3861 = vsyncpa [#allocation3], 1
    %3862 = vsyncpa [#allocation6], 1
    %3863 = vsyncpa [#allocation9], 1
    %3864 = vsyncpa [#allocation4], 1

</llo_original>
